<compile_context>
chip_gen: v5e
topology: v5e:2x2
jax: 0.10.0
libtpu: 0.0.40
codegen_flags: <defaults>
</compile_context>

<pallas_src>
import functools
import math

import jax
import jax.numpy as jnp
from jax import lax
from jax.experimental import pallas as pl
from jax.experimental.pallas import tpu as pltpu


def _round_up(n, m):
    return ((n + m - 1) // m) * m


def _mhla_kernel(x_cur_ref, x_prev_ref, x_next_ref, w_ref, b_ref, o_ref, *,
                 ctx_sizes, hidden, tq, halo, seq_len, approx_recip):
    H = hidden
    qi = pl.program_id(1)

    # Haloed context: [halo rows before the tile | current tile | halo rows after].
    x_cur = x_cur_ref[0]                                   # (tq, H)   compute dtype
    x_prev = x_prev_ref[0]                                 # (halo, H)
    x_next = x_next_ref[0]                                 # (halo, H)
    x_ext = jnp.concatenate([x_prev, x_cur, x_next], axis=0)   # (tq + 2*halo, H)

    # One fused projection for all heads: (tq+2h, H) @ (H, 3*nh*H), f32 accumulate.
    qkv = jnp.dot(x_ext, w_ref[...], preferred_element_type=jnp.float32)
    qkv = qkv + b_ref[...]                                 # (tq + 2*halo, 3*nh*H) f32

    # Global row index of every query in this tile (for band edge masking).
    row = lax.broadcasted_iota(jnp.int32, (tq, 1), 0) + qi * tq   # (tq, 1)

    acc = jnp.zeros((tq, H), jnp.float32)
    neg_big = jnp.float32(-1e30)

    for h, c in enumerate(ctx_sizes):                      # static loop over heads
        base = 3 * h * H
        q = qkv[halo:halo + tq, base:base + H]             # (tq, H), scale pre-folded
        k = qkv[:, base + H:base + 2 * H]                  # (tq + 2*halo, H)
        v = qkv[:, base + 2 * H:base + 3 * H]              # (tq + 2*halo, H)

        # Per-diagonal scores of the band |i-j| <= c via shifted views (no S x S).
        scores, masks = [], []
        for d in range(-c, c + 1):                         # static loop, 2c+1 diagonals
            k_d = k[halo + d:halo + d + tq, :]             # rows i+d of K
            s_d = jnp.sum(q * k_d, axis=-1, keepdims=True)  # (tq, 1) f32
            j = row + d
            m_d = (j >= 0) & (j < seq_len)
            scores.append(jnp.where(m_d, s_d, neg_big))
            masks.append(m_d)

        m_max = scores[0]
        for s_d in scores[1:]:
            m_max = jnp.maximum(m_max, s_d)

        probs = [jnp.where(m_d, jnp.exp(s_d - m_max), 0.0)
                 for s_d, m_d in zip(scores, masks)]
        denom = probs[0]
        for p_d in probs[1:]:
            denom = denom + p_d
        denom = denom + jnp.float32(1e-30)   # guard fully-masked (padded) rows
        inv = pl.reciprocal(denom, approx=approx_recip)    # (tq, 1)

        for d, p_d in zip(range(-c, c + 1), probs):
            v_d = v[halo + d:halo + d + tq, :]
            acc = acc + (p_d * inv) * v_d    # normalize on the narrow column first

    # 1/num_heads averaging is pre-folded into the V weights.
    o_ref[0] = acc.astype(o_ref.dtype)


def _pack_params(params, hidden):
    """Pack per-head q/k/v weights into one (H, 3*nh*H) matrix.

    Folds 1/sqrt(H) into Q and 1/num_heads (head averaging) into V.
    """
    nh = params["wq"].shape[0]
    q_scale = 1.0 / math.sqrt(hidden)
    v_scale = 1.0 / nh
    w_cols, b_cols = [], []
    for h in range(nh):
        w_cols += [params["wq"][h] * q_scale,
                   params["wk"][h],
                   params["wv"][h] * v_scale]
        b_cols += [params["bq"][h].reshape(1, hidden) * q_scale,
                   params["bk"][h].reshape(1, hidden),
                   params["bv"][h].reshape(1, hidden) * v_scale]
    w_packed = jnp.concatenate(w_cols, axis=1).astype(jnp.float32)   # (H, 3*nh*H)
    b_packed = jnp.concatenate(b_cols, axis=1).astype(jnp.float32)   # (1, 3*nh*H)
    return w_packed, b_packed


def _vmem_limit_bytes(tq, halo, hidden, npack, in_bytes):
    ext = tq + 2 * halo
    blocks = 2 * (tq * hidden * in_bytes          # cur tile (double-buffered)
                  + 2 * halo * hidden * in_bytes  # prev + next halos
                  + tq * hidden * 4)              # output block
    weights = 2 * (hidden * npack * in_bytes + npack * 4)
    work = (ext * hidden * in_bytes + ext * npack * 4   # x_ext + qkv (f32)
            + 16 * tq * hidden * 4)                     # shifted K/V views + acc
    est = blocks + weights + 2 * work
    # generous headroom, but stay well under v7x's 64 MiB physical VMEM
    return int(min(max(est, 32 * 1024 * 1024), 48 * 1024 * 1024))


def multi_head_local_attention(x, params, ctx_sizes, *, tq=None,
                               compute_dtype=jnp.bfloat16):
    """x: (B, S, H).  params: stacked per-head weights (wq/bq/wk/bk/wv/bv)."""
    B, S, H = x.shape
    nh = params["wq"].shape[0]
    assert len(ctx_sizes) == nh

    in_bytes = jnp.dtype(compute_dtype).itemsize
    sub = 8 if in_bytes >= 4 else 16           # sublane multiple (16 for 16-bit dtypes)
    halo = sub                                 # halo rows = one sublane tile
    assert max(ctx_sizes) <= halo

    if tq is None:
        tq = min(512, _round_up(S, sub))
    assert tq % sub == 0

    s_pad = _round_up(S, tq)
    x_in = x if s_pad == S else jnp.pad(x, ((0, 0), (0, s_pad - S), (0, 0)))
    nq = s_pad // tq
    ratio = tq // sub                          # sublane-blocks per query tile
    nblk = s_pad // sub                        # sublane-blocks in the whole sequence

    w_packed, b_packed = _pack_params(params, H)
    npack = w_packed.shape[1]                  # 3 * nh * H
    x_c = x_in.astype(compute_dtype)
    w_c = w_packed.astype(compute_dtype)

    kernel = functools.partial(
        _mhla_kernel, ctx_sizes=tuple(ctx_sizes), hidden=H, tq=tq, halo=halo,
        seq_len=S,
        approx_recip=(jnp.dtype(compute_dtype) != jnp.dtype(jnp.float32)))

    cur_spec = pl.BlockSpec((1, tq, H), lambda b, q: (b, q, 0))
    # Neighbour halos: only `halo` rows each (clamped at sequence edges; the
    # band-edge mask inside the kernel discards the clamped garbage rows).
    prev_spec = pl.BlockSpec(
        (1, halo, H), lambda b, q: (b, jnp.maximum(q * ratio - 1, 0), 0))
    next_spec = pl.BlockSpec(
        (1, halo, H), lambda b, q: (b, jnp.minimum((q + 1) * ratio, nblk - 1), 0))
    out_spec = pl.BlockSpec((1, tq, H), lambda b, q: (b, q, 0))

    def build(single_buffer_weights):
        if single_buffer_weights:
            # grid-invariant weights/bias: single-buffer (never re-DMA'd anyway)
            w_spec = pl.BlockSpec((H, npack), lambda b, q: (0, 0),
                                  pipeline_mode=pl.Buffered(1))
            b_spec = pl.BlockSpec((1, npack), lambda b, q: (0, 0),
                                  pipeline_mode=pl.Buffered(1))
        else:
            w_spec = pl.BlockSpec((H, npack), lambda b, q: (0, 0))
            b_spec = pl.BlockSpec((1, npack), lambda b, q: (0, 0))
        return pl.pallas_call(
            kernel,
            out_shape=jax.ShapeDtypeStruct((B, s_pad, H), x.dtype),
            grid_spec=pltpu.PrefetchScalarGridSpec(
                num_scalar_prefetch=0,
                grid=(B, nq),
                in_specs=[cur_spec, prev_spec, next_spec, w_spec, b_spec],
                out_specs=out_spec,
            ),
            compiler_params=pltpu.CompilerParams(
                dimension_semantics=("parallel", "parallel"),
                vmem_limit_bytes=_vmem_limit_bytes(tq, halo, H, npack, in_bytes)),
        )

    try:
        out = build(True)(x_c, x_c, x_c, w_c, b_packed)
    except Exception:
        # Fallback for Pallas builds that reject pipeline_mode=pl.Buffered(1).
        out = build(False)(x_c, x_c, x_c, w_c, b_packed)

    if s_pad != S:
        out = out[:, :S, :]
    return out


def _reference(x, params, ctx_sizes):
    """Pure-JAX reference mirroring the PyTorch per-position loop."""
    B, S, H = x.shape
    outs = []
    for h, c in enumerate(ctx_sizes):
        wq, bq = params["wq"][h], params["bq"][h, 0]
        wk, bk = params["wk"][h], params["bk"][h, 0]
        wv, bv = params["wv"][h], params["bv"][h, 0]
        rows = []
        for i in range(S):
            s0, s1 = max(0, i - c), min(S, i + c + 1)
            region = x[:, s0:s1, :]
            Q = region @ wq + bq
            K = region @ wk + bk
            V = region @ wv + bv
            sc = (Q @ jnp.swapaxes(K, -1, -2)) / math.sqrt(H)
            p = jax.nn.softmax(sc, axis=-1)
            rows.append((p @ V)[:, i - s0, :])
        outs.append(jnp.stack(rows, axis=1))
    return sum(outs) / len(outs)


def init_params(key, hidden, num_heads):
    keys = jax.random.split(key, 6 * num_heads)
    def mk(idx, shape, scale):
        return (scale * jax.random.normal(keys[idx], shape)).astype(jnp.float32)
    s = 1.0 / math.sqrt(hidden)
    return {
        "wq": jnp.stack([mk(6 * h + 0, (hidden, hidden), s) for h in range(num_heads)]),
        "bq": jnp.stack([mk(6 * h + 1, (1, hidden), s) for h in range(num_heads)]),
        "wk": jnp.stack([mk(6 * h + 2, (hidden, hidden), s) for h in range(num_heads)]),
        "bk": jnp.stack([mk(6 * h + 3, (1, hidden), s) for h in range(num_heads)]),
        "wv": jnp.stack([mk(6 * h + 4, (hidden, hidden), s) for h in range(num_heads)]),
        "bv": jnp.stack([mk(6 * h + 5, (1, hidden), s) for h in range(num_heads)]),
    }


if __name__ == "__main__":
    # Small but layout-friendly shapes: H=128 (lane-dense output stores) and two
    # 16-row sequence tiles so the halo / tile-boundary path is exercised.
    B, S, H = 2, 32, 128
    num_heads = 2
    ctx_sizes = [1, 2]            # context_sizes[i % num_heads]

    key = jax.random.PRNGKey(0)
    kx, kp = jax.random.split(key)
    x = jax.random.normal(kx, (B, S, H), dtype=jnp.float32)
    params = init_params(kp, H, num_heads)

    ref = _reference(x, params, ctx_sizes)

    # 1) f32 compute path (tight correctness check).
    out_f32 = multi_head_local_attention(x, params, ctx_sizes, tq=16,
                                         compute_dtype=jnp.float32)
    out_f32 = jax.block_until_ready(out_f32)
    assert out_f32.shape == (B, S, H)
    assert jnp.allclose(out_f32, ref, atol=2e-4, rtol=2e-4), "f32 mismatch vs reference"

    # 2) Production path: bf16 MXU inputs, f32 softmax/accumulation (looser check).
    out_bf16 = multi_head_local_attention(x, params, ctx_sizes, tq=16,
                                          compute_dtype=jnp.bfloat16)
    out_bf16 = jax.block_until_ready(out_bf16)
    assert out_bf16.shape == (B, S, H)
    assert jnp.allclose(out_bf16, ref, atol=1e-1, rtol=1e-1), "bf16 mismatch vs reference"

    print("KERNEL_OK")
</pallas_src>

<mosaic_0001>
module attributes {stable_mosaic.version = 11 : i64} {
  func.func @_mhla_kernel(%arg0: i32, %arg1: i32, %arg2: memref<1x16x128xf32, #tpu.memory_space<vmem>>, %arg3: memref<1x8x128xf32, #tpu.memory_space<vmem>>, %arg4: memref<1x8x128xf32, #tpu.memory_space<vmem>>, %arg5: memref<128x768xf32, #tpu.memory_space<vmem>>, %arg6: memref<1x768xf32, #tpu.memory_space<vmem>>, %arg7: memref<1x16x128xf32, #tpu.memory_space<vmem>>) attributes {dimension_semantics = [#tpu.dimension_semantics<parallel>, #tpu.dimension_semantics<parallel>], iteration_bounds = array<i64: 2, 2>, scalar_prefetch = 0 : i64, scratch_operands = 0 : i64, tpu.core_type = #tpu.core_type<tc>, window_params = [{transform_indices = @transform_0, window_bounds = array<i64: 1, 16, 128>}, {transform_indices = @transform_1, window_bounds = array<i64: 1, 8, 128>}, {transform_indices = @transform_2, window_bounds = array<i64: 1, 8, 128>}, {pipeline_mode = #tpu.pipeline_mode<synchronous>, transform_indices = @transform_3, window_bounds = array<i64: 128, 768>}, {pipeline_mode = #tpu.pipeline_mode<synchronous>, transform_indices = @transform_4, window_bounds = array<i64: 1, 768>}, {transform_indices = @transform_5, window_bounds = array<i64: 1, 16, 128>}]} {
    %c0 = arith.constant 0 : index
    %c0_0 = arith.constant 0 : index
    %c0_1 = arith.constant 0 : index
    %0 = vector.load %arg2[%c0, %c0_0, %c0_1] : memref<1x16x128xf32, #tpu.memory_space<vmem>>, vector<1x16x128xf32>
    %1 = vector.shape_cast %0 : vector<1x16x128xf32> to vector<16x128xf32>
    %c0_2 = arith.constant 0 : index
    %c0_3 = arith.constant 0 : index
    %c0_4 = arith.constant 0 : index
    %2 = vector.load %arg3[%c0_2, %c0_3, %c0_4] : memref<1x8x128xf32, #tpu.memory_space<vmem>>, vector<1x8x128xf32>
    %3 = vector.shape_cast %2 : vector<1x8x128xf32> to vector<8x128xf32>
    %c0_5 = arith.constant 0 : index
    %c0_6 = arith.constant 0 : index
    %c0_7 = arith.constant 0 : index
    %4 = vector.load %arg4[%c0_5, %c0_6, %c0_7] : memref<1x8x128xf32, #tpu.memory_space<vmem>>, vector<1x8x128xf32>
    %5 = vector.shape_cast %4 : vector<1x8x128xf32> to vector<8x128xf32>
    %6 = tpu.concatenate %3, %1, %5 in 0 : vector<8x128xf32>, vector<16x128xf32>, vector<8x128xf32> -> vector<32x128xf32>
    %c0_8 = arith.constant 0 : index
    %c0_9 = arith.constant 0 : index
    %7 = vector.load %arg5[%c0_8, %c0_9] : memref<128x768xf32, #tpu.memory_space<vmem>>, vector<128x768xf32>
    %cst = arith.constant dense<0.000000e+00> : vector<32x768xf32>
    %8 = tpu.matmul %6, %7, %cst {dimension_numbers = #tpu.dot_dimension_numbers<[1], [0], [0], [1], [0, 0, 1, 1], [], []>} : vector<32x128xf32>, vector<128x768xf32>, vector<32x768xf32> -> vector<32x768xf32>
    %c0_10 = arith.constant 0 : index
    %c0_11 = arith.constant 0 : index
    %9 = vector.load %arg6[%c0_10, %c0_11] : memref<1x768xf32, #tpu.memory_space<vmem>>, vector<1x768xf32>
    %10 = vector.broadcast %9 : vector<1x768xf32> to vector<32x768xf32>
    %11 = arith.addf %8, %10 : vector<32x768xf32>
    %12 = tpu.iota {dimensions = array<i32: 0>} : vector<16x1xi32>
    %c16_i32 = arith.constant 16 : i32
    %13 = arith.muli %arg1, %c16_i32 : i32
    %14 = vector.broadcast %13 : i32 to vector<16x1xi32>
    %15 = arith.addi %12, %14 : vector<16x1xi32>
    %cst_12 = arith.constant 0.000000e+00 : f32
    %16 = vector.broadcast %cst_12 : f32 to vector<16x128xf32>
    %17 = vector.extract_strided_slice %11 {offsets = [8, 0], sizes = [16, 128], strides = [1, 1]} : vector<32x768xf32> to vector<16x128xf32>
    %18 = vector.extract_strided_slice %11 {offsets = [0, 128], sizes = [32, 128], strides = [1, 1]} : vector<32x768xf32> to vector<32x128xf32>
    %19 = vector.extract_strided_slice %11 {offsets = [0, 256], sizes = [32, 128], strides = [1, 1]} : vector<32x768xf32> to vector<32x128xf32>
    %20 = vector.extract_strided_slice %18 {offsets = [7, 0], sizes = [16, 128], strides = [1, 1]} : vector<32x128xf32> to vector<16x128xf32>
    %21 = arith.mulf %17, %20 : vector<16x128xf32>
    %cst_13 = arith.constant dense<0.000000e+00> : vector<16xf32>
    %22 = vector.multi_reduction <add>, %21, %cst_13 [1] : vector<16x128xf32> to vector<16xf32>
    %23 = vector.shape_cast %22 : vector<16xf32> to vector<16x1xf32>
    %c-1_i32 = arith.constant -1 : i32
    %24 = vector.broadcast %c-1_i32 : i32 to vector<16x1xi32>
    %25 = arith.addi %15, %24 : vector<16x1xi32>
    %c0_i32 = arith.constant 0 : i32
    %26 = vector.broadcast %c0_i32 : i32 to vector<16x1xi32>
    %27 = arith.cmpi sge, %25, %26 : vector<16x1xi32>
    %c32_i32 = arith.constant 32 : i32
    %28 = vector.broadcast %c32_i32 : i32 to vector<16x1xi32>
    %29 = arith.cmpi slt, %25, %28 : vector<16x1xi32>
    %30 = arith.andi %27, %29 : vector<16x1xi1>
    %cst_14 = arith.constant -1.000000e+30 : f32
    %31 = vector.broadcast %cst_14 : f32 to vector<16x1xf32>
    %32 = arith.select %30, %23, %31 : vector<16x1xi1>, vector<16x1xf32>
    %33 = vector.extract_strided_slice %18 {offsets = [8, 0], sizes = [16, 128], strides = [1, 1]} : vector<32x128xf32> to vector<16x128xf32>
    %34 = arith.mulf %17, %33 : vector<16x128xf32>
    %cst_15 = arith.constant dense<0.000000e+00> : vector<16xf32>
    %35 = vector.multi_reduction <add>, %34, %cst_15 [1] : vector<16x128xf32> to vector<16xf32>
    %36 = vector.shape_cast %35 : vector<16xf32> to vector<16x1xf32>
    %c0_i32_16 = arith.constant 0 : i32
    %37 = vector.broadcast %c0_i32_16 : i32 to vector<16x1xi32>
    %38 = arith.addi %15, %37 : vector<16x1xi32>
    %c0_i32_17 = arith.constant 0 : i32
    %39 = vector.broadcast %c0_i32_17 : i32 to vector<16x1xi32>
    %40 = arith.cmpi sge, %38, %39 : vector<16x1xi32>
    %c32_i32_18 = arith.constant 32 : i32
    %41 = vector.broadcast %c32_i32_18 : i32 to vector<16x1xi32>
    %42 = arith.cmpi slt, %38, %41 : vector<16x1xi32>
    %43 = arith.andi %40, %42 : vector<16x1xi1>
    %cst_19 = arith.constant -1.000000e+30 : f32
    %44 = vector.broadcast %cst_19 : f32 to vector<16x1xf32>
    %45 = arith.select %43, %36, %44 : vector<16x1xi1>, vector<16x1xf32>
    %46 = vector.extract_strided_slice %18 {offsets = [9, 0], sizes = [16, 128], strides = [1, 1]} : vector<32x128xf32> to vector<16x128xf32>
    %47 = arith.mulf %17, %46 : vector<16x128xf32>
    %cst_20 = arith.constant dense<0.000000e+00> : vector<16xf32>
    %48 = vector.multi_reduction <add>, %47, %cst_20 [1] : vector<16x128xf32> to vector<16xf32>
    %49 = vector.shape_cast %48 : vector<16xf32> to vector<16x1xf32>
    %c1_i32 = arith.constant 1 : i32
    %50 = vector.broadcast %c1_i32 : i32 to vector<16x1xi32>
    %51 = arith.addi %15, %50 : vector<16x1xi32>
    %c0_i32_21 = arith.constant 0 : i32
    %52 = vector.broadcast %c0_i32_21 : i32 to vector<16x1xi32>
    %53 = arith.cmpi sge, %51, %52 : vector<16x1xi32>
    %c32_i32_22 = arith.constant 32 : i32
    %54 = vector.broadcast %c32_i32_22 : i32 to vector<16x1xi32>
    %55 = arith.cmpi slt, %51, %54 : vector<16x1xi32>
    %56 = arith.andi %53, %55 : vector<16x1xi1>
    %cst_23 = arith.constant -1.000000e+30 : f32
    %57 = vector.broadcast %cst_23 : f32 to vector<16x1xf32>
    %58 = arith.select %56, %49, %57 : vector<16x1xi1>, vector<16x1xf32>
    %59 = arith.maximumf %32, %45 : vector<16x1xf32>
    %60 = arith.maximumf %59, %58 : vector<16x1xf32>
    %61 = arith.subf %32, %60 : vector<16x1xf32>
    %62 = math.exp %61 : vector<16x1xf32>
    %cst_24 = arith.constant 0.000000e+00 : f32
    %63 = vector.broadcast %cst_24 : f32 to vector<16x1xf32>
    %64 = arith.select %30, %62, %63 : vector<16x1xi1>, vector<16x1xf32>
    %65 = arith.subf %45, %60 : vector<16x1xf32>
    %66 = math.exp %65 : vector<16x1xf32>
    %cst_25 = arith.constant 0.000000e+00 : f32
    %67 = vector.broadcast %cst_25 : f32 to vector<16x1xf32>
    %68 = arith.select %43, %66, %67 : vector<16x1xi1>, vector<16x1xf32>
    %69 = arith.subf %58, %60 : vector<16x1xf32>
    %70 = math.exp %69 : vector<16x1xf32>
    %cst_26 = arith.constant 0.000000e+00 : f32
    %71 = vector.broadcast %cst_26 : f32 to vector<16x1xf32>
    %72 = arith.select %56, %70, %71 : vector<16x1xi1>, vector<16x1xf32>
    %73 = arith.addf %64, %68 : vector<16x1xf32>
    %74 = arith.addf %73, %72 : vector<16x1xf32>
    %cst_27 = arith.constant 1.000000e-30 : f32
    %75 = vector.broadcast %cst_27 : f32 to vector<16x1xf32>
    %76 = arith.addf %74, %75 : vector<16x1xf32>
    %77 = tpu.reciprocal %76 : vector<16x1xf32> -> vector<16x1xf32>
    %78 = vector.extract_strided_slice %19 {offsets = [7, 0], sizes = [16, 128], strides = [1, 1]} : vector<32x128xf32> to vector<16x128xf32>
    %79 = arith.mulf %64, %77 : vector<16x1xf32>
    %80 = vector.broadcast %79 : vector<16x1xf32> to vector<16x128xf32>
    %81 = arith.mulf %80, %78 : vector<16x128xf32>
    %82 = arith.addf %16, %81 : vector<16x128xf32>
    %83 = vector.extract_strided_slice %19 {offsets = [8, 0], sizes = [16, 128], strides = [1, 1]} : vector<32x128xf32> to vector<16x128xf32>
    %84 = arith.mulf %68, %77 : vector<16x1xf32>
    %85 = vector.broadcast %84 : vector<16x1xf32> to vector<16x128xf32>
    %86 = arith.mulf %85, %83 : vector<16x128xf32>
    %87 = arith.addf %82, %86 : vector<16x128xf32>
    %88 = vector.extract_strided_slice %19 {offsets = [9, 0], sizes = [16, 128], strides = [1, 1]} : vector<32x128xf32> to vector<16x128xf32>
    %89 = arith.mulf %72, %77 : vector<16x1xf32>
    %90 = vector.broadcast %89 : vector<16x1xf32> to vector<16x128xf32>
    %91 = arith.mulf %90, %88 : vector<16x128xf32>
    %92 = arith.addf %87, %91 : vector<16x128xf32>
    %93 = vector.extract_strided_slice %11 {offsets = [8, 384], sizes = [16, 128], strides = [1, 1]} : vector<32x768xf32> to vector<16x128xf32>
    %94 = vector.extract_strided_slice %11 {offsets = [0, 512], sizes = [32, 128], strides = [1, 1]} : vector<32x768xf32> to vector<32x128xf32>
    %95 = vector.extract_strided_slice %11 {offsets = [0, 640], sizes = [32, 128], strides = [1, 1]} : vector<32x768xf32> to vector<32x128xf32>
    %96 = vector.extract_strided_slice %94 {offsets = [6, 0], sizes = [16, 128], strides = [1, 1]} : vector<32x128xf32> to vector<16x128xf32>
    %97 = arith.mulf %93, %96 : vector<16x128xf32>
    %cst_28 = arith.constant dense<0.000000e+00> : vector<16xf32>
    %98 = vector.multi_reduction <add>, %97, %cst_28 [1] : vector<16x128xf32> to vector<16xf32>
    %99 = vector.shape_cast %98 : vector<16xf32> to vector<16x1xf32>
    %c-2_i32 = arith.constant -2 : i32
    %100 = vector.broadcast %c-2_i32 : i32 to vector<16x1xi32>
    %101 = arith.addi %15, %100 : vector<16x1xi32>
    %c0_i32_29 = arith.constant 0 : i32
    %102 = vector.broadcast %c0_i32_29 : i32 to vector<16x1xi32>
    %103 = arith.cmpi sge, %101, %102 : vector<16x1xi32>
    %c32_i32_30 = arith.constant 32 : i32
    %104 = vector.broadcast %c32_i32_30 : i32 to vector<16x1xi32>
    %105 = arith.cmpi slt, %101, %104 : vector<16x1xi32>
    %106 = arith.andi %103, %105 : vector<16x1xi1>
    %cst_31 = arith.constant -1.000000e+30 : f32
    %107 = vector.broadcast %cst_31 : f32 to vector<16x1xf32>
    %108 = arith.select %106, %99, %107 : vector<16x1xi1>, vector<16x1xf32>
    %109 = vector.extract_strided_slice %94 {offsets = [7, 0], sizes = [16, 128], strides = [1, 1]} : vector<32x128xf32> to vector<16x128xf32>
    %110 = arith.mulf %93, %109 : vector<16x128xf32>
    %cst_32 = arith.constant dense<0.000000e+00> : vector<16xf32>
    %111 = vector.multi_reduction <add>, %110, %cst_32 [1] : vector<16x128xf32> to vector<16xf32>
    %112 = vector.shape_cast %111 : vector<16xf32> to vector<16x1xf32>
    %c-1_i32_33 = arith.constant -1 : i32
    %113 = vector.broadcast %c-1_i32_33 : i32 to vector<16x1xi32>
    %114 = arith.addi %15, %113 : vector<16x1xi32>
    %c0_i32_34 = arith.constant 0 : i32
    %115 = vector.broadcast %c0_i32_34 : i32 to vector<16x1xi32>
    %116 = arith.cmpi sge, %114, %115 : vector<16x1xi32>
    %c32_i32_35 = arith.constant 32 : i32
    %117 = vector.broadcast %c32_i32_35 : i32 to vector<16x1xi32>
    %118 = arith.cmpi slt, %114, %117 : vector<16x1xi32>
    %119 = arith.andi %116, %118 : vector<16x1xi1>
    %cst_36 = arith.constant -1.000000e+30 : f32
    %120 = vector.broadcast %cst_36 : f32 to vector<16x1xf32>
    %121 = arith.select %119, %112, %120 : vector<16x1xi1>, vector<16x1xf32>
    %122 = vector.extract_strided_slice %94 {offsets = [8, 0], sizes = [16, 128], strides = [1, 1]} : vector<32x128xf32> to vector<16x128xf32>
    %123 = arith.mulf %93, %122 : vector<16x128xf32>
    %cst_37 = arith.constant dense<0.000000e+00> : vector<16xf32>
    %124 = vector.multi_reduction <add>, %123, %cst_37 [1] : vector<16x128xf32> to vector<16xf32>
    %125 = vector.shape_cast %124 : vector<16xf32> to vector<16x1xf32>
    %c0_i32_38 = arith.constant 0 : i32
    %126 = vector.broadcast %c0_i32_38 : i32 to vector<16x1xi32>
    %127 = arith.addi %15, %126 : vector<16x1xi32>
    %c0_i32_39 = arith.constant 0 : i32
    %128 = vector.broadcast %c0_i32_39 : i32 to vector<16x1xi32>
    %129 = arith.cmpi sge, %127, %128 : vector<16x1xi32>
    %c32_i32_40 = arith.constant 32 : i32
    %130 = vector.broadcast %c32_i32_40 : i32 to vector<16x1xi32>
    %131 = arith.cmpi slt, %127, %130 : vector<16x1xi32>
    %132 = arith.andi %129, %131 : vector<16x1xi1>
    %cst_41 = arith.constant -1.000000e+30 : f32
    %133 = vector.broadcast %cst_41 : f32 to vector<16x1xf32>
    %134 = arith.select %132, %125, %133 : vector<16x1xi1>, vector<16x1xf32>
    %135 = vector.extract_strided_slice %94 {offsets = [9, 0], sizes = [16, 128], strides = [1, 1]} : vector<32x128xf32> to vector<16x128xf32>
    %136 = arith.mulf %93, %135 : vector<16x128xf32>
    %cst_42 = arith.constant dense<0.000000e+00> : vector<16xf32>
    %137 = vector.multi_reduction <add>, %136, %cst_42 [1] : vector<16x128xf32> to vector<16xf32>
    %138 = vector.shape_cast %137 : vector<16xf32> to vector<16x1xf32>
    %c1_i32_43 = arith.constant 1 : i32
    %139 = vector.broadcast %c1_i32_43 : i32 to vector<16x1xi32>
    %140 = arith.addi %15, %139 : vector<16x1xi32>
    %c0_i32_44 = arith.constant 0 : i32
    %141 = vector.broadcast %c0_i32_44 : i32 to vector<16x1xi32>
    %142 = arith.cmpi sge, %140, %141 : vector<16x1xi32>
    %c32_i32_45 = arith.constant 32 : i32
    %143 = vector.broadcast %c32_i32_45 : i32 to vector<16x1xi32>
    %144 = arith.cmpi slt, %140, %143 : vector<16x1xi32>
    %145 = arith.andi %142, %144 : vector<16x1xi1>
    %cst_46 = arith.constant -1.000000e+30 : f32
    %146 = vector.broadcast %cst_46 : f32 to vector<16x1xf32>
    %147 = arith.select %145, %138, %146 : vector<16x1xi1>, vector<16x1xf32>
    %148 = vector.extract_strided_slice %94 {offsets = [10, 0], sizes = [16, 128], strides = [1, 1]} : vector<32x128xf32> to vector<16x128xf32>
    %149 = arith.mulf %93, %148 : vector<16x128xf32>
    %cst_47 = arith.constant dense<0.000000e+00> : vector<16xf32>
    %150 = vector.multi_reduction <add>, %149, %cst_47 [1] : vector<16x128xf32> to vector<16xf32>
    %151 = vector.shape_cast %150 : vector<16xf32> to vector<16x1xf32>
    %c2_i32 = arith.constant 2 : i32
    %152 = vector.broadcast %c2_i32 : i32 to vector<16x1xi32>
    %153 = arith.addi %15, %152 : vector<16x1xi32>
    %c0_i32_48 = arith.constant 0 : i32
    %154 = vector.broadcast %c0_i32_48 : i32 to vector<16x1xi32>
    %155 = arith.cmpi sge, %153, %154 : vector<16x1xi32>
    %c32_i32_49 = arith.constant 32 : i32
    %156 = vector.broadcast %c32_i32_49 : i32 to vector<16x1xi32>
    %157 = arith.cmpi slt, %153, %156 : vector<16x1xi32>
    %158 = arith.andi %155, %157 : vector<16x1xi1>
    %cst_50 = arith.constant -1.000000e+30 : f32
    %159 = vector.broadcast %cst_50 : f32 to vector<16x1xf32>
    %160 = arith.select %158, %151, %159 : vector<16x1xi1>, vector<16x1xf32>
    %161 = arith.maximumf %108, %121 : vector<16x1xf32>
    %162 = arith.maximumf %161, %134 : vector<16x1xf32>
    %163 = arith.maximumf %162, %147 : vector<16x1xf32>
    %164 = arith.maximumf %163, %160 : vector<16x1xf32>
    %165 = arith.subf %108, %164 : vector<16x1xf32>
    %166 = math.exp %165 : vector<16x1xf32>
    %cst_51 = arith.constant 0.000000e+00 : f32
    %167 = vector.broadcast %cst_51 : f32 to vector<16x1xf32>
    %168 = arith.select %106, %166, %167 : vector<16x1xi1>, vector<16x1xf32>
    %169 = arith.subf %121, %164 : vector<16x1xf32>
    %170 = math.exp %169 : vector<16x1xf32>
    %cst_52 = arith.constant 0.000000e+00 : f32
    %171 = vector.broadcast %cst_52 : f32 to vector<16x1xf32>
    %172 = arith.select %119, %170, %171 : vector<16x1xi1>, vector<16x1xf32>
    %173 = arith.subf %134, %164 : vector<16x1xf32>
    %174 = math.exp %173 : vector<16x1xf32>
    %cst_53 = arith.constant 0.000000e+00 : f32
    %175 = vector.broadcast %cst_53 : f32 to vector<16x1xf32>
    %176 = arith.select %132, %174, %175 : vector<16x1xi1>, vector<16x1xf32>
    %177 = arith.subf %147, %164 : vector<16x1xf32>
    %178 = math.exp %177 : vector<16x1xf32>
    %cst_54 = arith.constant 0.000000e+00 : f32
    %179 = vector.broadcast %cst_54 : f32 to vector<16x1xf32>
    %180 = arith.select %145, %178, %179 : vector<16x1xi1>, vector<16x1xf32>
    %181 = arith.subf %160, %164 : vector<16x1xf32>
    %182 = math.exp %181 : vector<16x1xf32>
    %cst_55 = arith.constant 0.000000e+00 : f32
    %183 = vector.broadcast %cst_55 : f32 to vector<16x1xf32>
    %184 = arith.select %158, %182, %183 : vector<16x1xi1>, vector<16x1xf32>
    %185 = arith.addf %168, %172 : vector<16x1xf32>
    %186 = arith.addf %185, %176 : vector<16x1xf32>
    %187 = arith.addf %186, %180 : vector<16x1xf32>
    %188 = arith.addf %187, %184 : vector<16x1xf32>
    %cst_56 = arith.constant 1.000000e-30 : f32
    %189 = vector.broadcast %cst_56 : f32 to vector<16x1xf32>
    %190 = arith.addf %188, %189 : vector<16x1xf32>
    %191 = tpu.reciprocal %190 : vector<16x1xf32> -> vector<16x1xf32>
    %192 = vector.extract_strided_slice %95 {offsets = [6, 0], sizes = [16, 128], strides = [1, 1]} : vector<32x128xf32> to vector<16x128xf32>
    %193 = arith.mulf %168, %191 : vector<16x1xf32>
    %194 = vector.broadcast %193 : vector<16x1xf32> to vector<16x128xf32>
    %195 = arith.mulf %194, %192 : vector<16x128xf32>
    %196 = arith.addf %92, %195 : vector<16x128xf32>
    %197 = vector.extract_strided_slice %95 {offsets = [7, 0], sizes = [16, 128], strides = [1, 1]} : vector<32x128xf32> to vector<16x128xf32>
    %198 = arith.mulf %172, %191 : vector<16x1xf32>
    %199 = vector.broadcast %198 : vector<16x1xf32> to vector<16x128xf32>
    %200 = arith.mulf %199, %197 : vector<16x128xf32>
    %201 = arith.addf %196, %200 : vector<16x128xf32>
    %202 = vector.extract_strided_slice %95 {offsets = [8, 0], sizes = [16, 128], strides = [1, 1]} : vector<32x128xf32> to vector<16x128xf32>
    %203 = arith.mulf %176, %191 : vector<16x1xf32>
    %204 = vector.broadcast %203 : vector<16x1xf32> to vector<16x128xf32>
    %205 = arith.mulf %204, %202 : vector<16x128xf32>
    %206 = arith.addf %201, %205 : vector<16x128xf32>
    %207 = vector.extract_strided_slice %95 {offsets = [9, 0], sizes = [16, 128], strides = [1, 1]} : vector<32x128xf32> to vector<16x128xf32>
    %208 = arith.mulf %180, %191 : vector<16x1xf32>
    %209 = vector.broadcast %208 : vector<16x1xf32> to vector<16x128xf32>
    %210 = arith.mulf %209, %207 : vector<16x128xf32>
    %211 = arith.addf %206, %210 : vector<16x128xf32>
    %212 = vector.extract_strided_slice %95 {offsets = [10, 0], sizes = [16, 128], strides = [1, 1]} : vector<32x128xf32> to vector<16x128xf32>
    %213 = arith.mulf %184, %191 : vector<16x1xf32>
    %214 = vector.broadcast %213 : vector<16x1xf32> to vector<16x128xf32>
    %215 = arith.mulf %214, %212 : vector<16x128xf32>
    %216 = arith.addf %211, %215 : vector<16x128xf32>
    %c0_57 = arith.constant 0 : index
    %c0_58 = arith.constant 0 : index
    %c0_59 = arith.constant 0 : index
    %217 = vector.load %arg7[%c0_57, %c0_58, %c0_59] : memref<1x16x128xf32, #tpu.memory_space<vmem>>, vector<1x16x128xf32>
    %218 = vector.shape_cast %217 : vector<1x16x128xf32> to vector<16x128xf32>
    %219 = vector.shape_cast %216 : vector<16x128xf32> to vector<1x16x128xf32>
    tpu.vector_store %arg7[%c0_57, %c0_58, %c0_59], %219 {strides = array<i32>} : memref<1x16x128xf32, #tpu.memory_space<vmem>>, vector<1x16x128xf32>,
    return
  }
  func.func @transform_0(%arg0: i32, %arg1: i32) -> (i32, i32, i32) {
    %c0_i32 = arith.constant 0 : i32
    %c0_i32_0 = arith.constant 0 : i32
    return %arg0, %arg1, %c0_i32 : i32, i32, i32
  }
  func.func @transform_1(%arg0: i32, %arg1: i32) -> (i32, i32, i32) {
    %c2_i32 = arith.constant 2 : i32
    %0 = arith.muli %arg1, %c2_i32 : i32
    %c1_i32 = arith.constant 1 : i32
    %1 = arith.subi %0, %c1_i32 : i32
    %c0_i32 = arith.constant 0 : i32
    %2 = arith.maxsi %1, %c0_i32 : i32
    %c0_i32_0 = arith.constant 0 : i32
    %c0_i32_1 = arith.constant 0 : i32
    return %arg0, %2, %c0_i32_0 : i32, i32, i32
  }
  func.func @transform_2(%arg0: i32, %arg1: i32) -> (i32, i32, i32) {
    %c1_i32 = arith.constant 1 : i32
    %0 = arith.addi %arg1, %c1_i32 : i32
    %c2_i32 = arith.constant 2 : i32
    %1 = arith.muli %0, %c2_i32 : i32
    %c3_i32 = arith.constant 3 : i32
    %2 = arith.minsi %1, %c3_i32 : i32
    %c0_i32 = arith.constant 0 : i32
    %c0_i32_0 = arith.constant 0 : i32
    return %arg0, %2, %c0_i32 : i32, i32, i32
  }
  func.func @transform_3(%arg0: i32, %arg1: i32) -> (i32, i32) {
    %c0_i32 = arith.constant 0 : i32
    %c0_i32_0 = arith.constant 0 : i32
    %c0_i32_1 = arith.constant 0 : i32
    return %c0_i32, %c0_i32_0 : i32, i32
  }
  func.func @transform_4(%arg0: i32, %arg1: i32) -> (i32, i32) {
    %c0_i32 = arith.constant 0 : i32
    %c0_i32_0 = arith.constant 0 : i32
    %c0_i32_1 = arith.constant 0 : i32
    return %c0_i32, %c0_i32_0 : i32, i32
  }
  func.func @transform_5(%arg0: i32, %arg1: i32) -> (i32, i32, i32) {
    %c0_i32 = arith.constant 0 : i32
    %c0_i32_0 = arith.constant 0 : i32
    return %arg0, %arg1, %c0_i32 : i32, i32, i32
  }
}

module attributes {stable_mosaic.version = 11 : i64} {
  func.func @_mhla_kernel(%arg0: i32, %arg1: i32, %arg2: memref<1x16x128xf32, #tpu.memory_space<vmem>>, %arg3: memref<1x8x128xf32, #tpu.memory_space<vmem>>, %arg4: memref<1x8x128xf32, #tpu.memory_space<vmem>>, %arg5: memref<128x768xf32, #tpu.memory_space<vmem>>, %arg6: memref<1x768xf32, #tpu.memory_space<vmem>>, %arg7: memref<1x16x128xf32, #tpu.memory_space<vmem>>) attributes {dimension_semantics = [#tpu.dimension_semantics<parallel>, #tpu.dimension_semantics<parallel>], iteration_bounds = array<i64: 2, 2>, scalar_prefetch = 0 : i64, scratch_operands = 0 : i64, tpu.core_type = #tpu.core_type<tc>, window_params = [{transform_indices = @transform_0, window_bounds = array<i64: 1, 16, 128>}, {transform_indices = @transform_1, window_bounds = array<i64: 1, 8, 128>}, {transform_indices = @transform_2, window_bounds = array<i64: 1, 8, 128>}, {pipeline_mode = #tpu.pipeline_mode<synchronous>, transform_indices = @transform_3, window_bounds = array<i64: 128, 768>}, {pipeline_mode = #tpu.pipeline_mode<synchronous>, transform_indices = @transform_4, window_bounds = array<i64: 1, 768>}, {transform_indices = @transform_5, window_bounds = array<i64: 1, 16, 128>}]} {
    %c0 = arith.constant 0 : index
    %c0_0 = arith.constant 0 : index
    %c0_1 = arith.constant 0 : index
    %0 = vector.load %arg2[%c0, %c0_0, %c0_1] : memref<1x16x128xf32, #tpu.memory_space<vmem>>, vector<1x16x128xf32>
    %1 = vector.shape_cast %0 : vector<1x16x128xf32> to vector<16x128xf32>
    %c0_2 = arith.constant 0 : index
    %c0_3 = arith.constant 0 : index
    %c0_4 = arith.constant 0 : index
    %2 = vector.load %arg3[%c0_2, %c0_3, %c0_4] : memref<1x8x128xf32, #tpu.memory_space<vmem>>, vector<1x8x128xf32>
    %3 = vector.shape_cast %2 : vector<1x8x128xf32> to vector<8x128xf32>
    %c0_5 = arith.constant 0 : index
    %c0_6 = arith.constant 0 : index
    %c0_7 = arith.constant 0 : index
    %4 = vector.load %arg4[%c0_5, %c0_6, %c0_7] : memref<1x8x128xf32, #tpu.memory_space<vmem>>, vector<1x8x128xf32>
    %5 = vector.shape_cast %4 : vector<1x8x128xf32> to vector<8x128xf32>
    %6 = tpu.concatenate %3, %1, %5 in 0 : vector<8x128xf32>, vector<16x128xf32>, vector<8x128xf32> -> vector<32x128xf32>
    %c0_8 = arith.constant 0 : index
    %c0_9 = arith.constant 0 : index
    %7 = vector.load %arg5[%c0_8, %c0_9] : memref<128x768xf32, #tpu.memory_space<vmem>>, vector<128x768xf32>
    %cst = arith.constant dense<0.000000e+00> : vector<32x768xf32>
    %8 = tpu.matmul %6, %7, %cst {dimension_numbers = #tpu.dot_dimension_numbers<[1], [0], [0], [1], [0, 0, 1, 1], [], []>} : vector<32x128xf32>, vector<128x768xf32>, vector<32x768xf32> -> vector<32x768xf32>
    %c0_10 = arith.constant 0 : index
    %c0_11 = arith.constant 0 : index
    %9 = vector.load %arg6[%c0_10, %c0_11] : memref<1x768xf32, #tpu.memory_space<vmem>>, vector<1x768xf32>
    %10 = vector.broadcast %9 : vector<1x768xf32> to vector<32x768xf32>
    %11 = arith.addf %8, %10 : vector<32x768xf32>
    %12 = tpu.iota {dimensions = array<i32: 0>} : vector<16x1xi32>
    %c16_i32 = arith.constant 16 : i32
    %13 = arith.muli %arg1, %c16_i32 : i32
    %14 = vector.broadcast %13 : i32 to vector<16x1xi32>
    %15 = arith.addi %12, %14 : vector<16x1xi32>
    %cst_12 = arith.constant 0.000000e+00 : f32
    %16 = vector.broadcast %cst_12 : f32 to vector<16x128xf32>
    %17 = vector.extract_strided_slice %11 {offsets = [8, 0], sizes = [16, 128], strides = [1, 1]} : vector<32x768xf32> to vector<16x128xf32>
    %18 = vector.extract_strided_slice %11 {offsets = [0, 128], sizes = [32, 128], strides = [1, 1]} : vector<32x768xf32> to vector<32x128xf32>
    %19 = vector.extract_strided_slice %11 {offsets = [0, 256], sizes = [32, 128], strides = [1, 1]} : vector<32x768xf32> to vector<32x128xf32>
    %20 = vector.extract_strided_slice %18 {offsets = [7, 0], sizes = [16, 128], strides = [1, 1]} : vector<32x128xf32> to vector<16x128xf32>
    %21 = arith.mulf %17, %20 : vector<16x128xf32>
    %cst_13 = arith.constant dense<0.000000e+00> : vector<16xf32>
    %22 = vector.multi_reduction <add>, %21, %cst_13 [1] : vector<16x128xf32> to vector<16xf32>
    %23 = vector.shape_cast %22 : vector<16xf32> to vector<16x1xf32>
    %c-1_i32 = arith.constant -1 : i32
    %24 = vector.broadcast %c-1_i32 : i32 to vector<16x1xi32>
    %25 = arith.addi %15, %24 : vector<16x1xi32>
    %c0_i32 = arith.constant 0 : i32
    %26 = vector.broadcast %c0_i32 : i32 to vector<16x1xi32>
    %27 = arith.cmpi sge, %25, %26 : vector<16x1xi32>
    %c32_i32 = arith.constant 32 : i32
    %28 = vector.broadcast %c32_i32 : i32 to vector<16x1xi32>
    %29 = arith.cmpi slt, %25, %28 : vector<16x1xi32>
    %30 = arith.andi %27, %29 : vector<16x1xi1>
    %cst_14 = arith.constant -1.000000e+30 : f32
    %31 = vector.broadcast %cst_14 : f32 to vector<16x1xf32>
    %32 = arith.select %30, %23, %31 : vector<16x1xi1>, vector<16x1xf32>
    %33 = vector.extract_strided_slice %18 {offsets = [8, 0], sizes = [16, 128], strides = [1, 1]} : vector<32x128xf32> to vector<16x128xf32>
    %34 = arith.mulf %17, %33 : vector<16x128xf32>
    %cst_15 = arith.constant dense<0.000000e+00> : vector<16xf32>
    %35 = vector.multi_reduction <add>, %34, %cst_15 [1] : vector<16x128xf32> to vector<16xf32>
    %36 = vector.shape_cast %35 : vector<16xf32> to vector<16x1xf32>
    %c0_i32_16 = arith.constant 0 : i32
    %37 = vector.broadcast %c0_i32_16 : i32 to vector<16x1xi32>
    %38 = arith.addi %15, %37 : vector<16x1xi32>
    %c0_i32_17 = arith.constant 0 : i32
    %39 = vector.broadcast %c0_i32_17 : i32 to vector<16x1xi32>
    %40 = arith.cmpi sge, %38, %39 : vector<16x1xi32>
    %c32_i32_18 = arith.constant 32 : i32
    %41 = vector.broadcast %c32_i32_18 : i32 to vector<16x1xi32>
    %42 = arith.cmpi slt, %38, %41 : vector<16x1xi32>
    %43 = arith.andi %40, %42 : vector<16x1xi1>
    %cst_19 = arith.constant -1.000000e+30 : f32
    %44 = vector.broadcast %cst_19 : f32 to vector<16x1xf32>
    %45 = arith.select %43, %36, %44 : vector<16x1xi1>, vector<16x1xf32>
    %46 = vector.extract_strided_slice %18 {offsets = [9, 0], sizes = [16, 128], strides = [1, 1]} : vector<32x128xf32> to vector<16x128xf32>
    %47 = arith.mulf %17, %46 : vector<16x128xf32>
    %cst_20 = arith.constant dense<0.000000e+00> : vector<16xf32>
    %48 = vector.multi_reduction <add>, %47, %cst_20 [1] : vector<16x128xf32> to vector<16xf32>
    %49 = vector.shape_cast %48 : vector<16xf32> to vector<16x1xf32>
    %c1_i32 = arith.constant 1 : i32
    %50 = vector.broadcast %c1_i32 : i32 to vector<16x1xi32>
    %51 = arith.addi %15, %50 : vector<16x1xi32>
    %c0_i32_21 = arith.constant 0 : i32
    %52 = vector.broadcast %c0_i32_21 : i32 to vector<16x1xi32>
    %53 = arith.cmpi sge, %51, %52 : vector<16x1xi32>
    %c32_i32_22 = arith.constant 32 : i32
    %54 = vector.broadcast %c32_i32_22 : i32 to vector<16x1xi32>
    %55 = arith.cmpi slt, %51, %54 : vector<16x1xi32>
    %56 = arith.andi %53, %55 : vector<16x1xi1>
    %cst_23 = arith.constant -1.000000e+30 : f32
    %57 = vector.broadcast %cst_23 : f32 to vector<16x1xf32>
    %58 = arith.select %56, %49, %57 : vector<16x1xi1>, vector<16x1xf32>
    %59 = arith.maximumf %32, %45 : vector<16x1xf32>
    %60 = arith.maximumf %59, %58 : vector<16x1xf32>
    %61 = arith.subf %32, %60 : vector<16x1xf32>
    %62 = math.exp %61 : vector<16x1xf32>
    %cst_24 = arith.constant 0.000000e+00 : f32
    %63 = vector.broadcast %cst_24 : f32 to vector<16x1xf32>
    %64 = arith.select %30, %62, %63 : vector<16x1xi1>, vector<16x1xf32>
    %65 = arith.subf %45, %60 : vector<16x1xf32>
    %66 = math.exp %65 : vector<16x1xf32>
    %cst_25 = arith.constant 0.000000e+00 : f32
    %67 = vector.broadcast %cst_25 : f32 to vector<16x1xf32>
    %68 = arith.select %43, %66, %67 : vector<16x1xi1>, vector<16x1xf32>
    %69 = arith.subf %58, %60 : vector<16x1xf32>
    %70 = math.exp %69 : vector<16x1xf32>
    %cst_26 = arith.constant 0.000000e+00 : f32
    %71 = vector.broadcast %cst_26 : f32 to vector<16x1xf32>
    %72 = arith.select %56, %70, %71 : vector<16x1xi1>, vector<16x1xf32>
    %73 = arith.addf %64, %68 : vector<16x1xf32>
    %74 = arith.addf %73, %72 : vector<16x1xf32>
    %cst_27 = arith.constant 1.000000e-30 : f32
    %75 = vector.broadcast %cst_27 : f32 to vector<16x1xf32>
    %76 = arith.addf %74, %75 : vector<16x1xf32>
    %77 = tpu.reciprocal %76 : vector<16x1xf32> -> vector<16x1xf32>
    %78 = vector.extract_strided_slice %19 {offsets = [7, 0], sizes = [16, 128], strides = [1, 1]} : vector<32x128xf32> to vector<16x128xf32>
    %79 = arith.mulf %64, %77 : vector<16x1xf32>
    %80 = vector.broadcast %79 : vector<16x1xf32> to vector<16x128xf32>
    %81 = arith.mulf %80, %78 : vector<16x128xf32>
    %82 = arith.addf %16, %81 : vector<16x128xf32>
    %83 = vector.extract_strided_slice %19 {offsets = [8, 0], sizes = [16, 128], strides = [1, 1]} : vector<32x128xf32> to vector<16x128xf32>
    %84 = arith.mulf %68, %77 : vector<16x1xf32>
    %85 = vector.broadcast %84 : vector<16x1xf32> to vector<16x128xf32>
    %86 = arith.mulf %85, %83 : vector<16x128xf32>
    %87 = arith.addf %82, %86 : vector<16x128xf32>
    %88 = vector.extract_strided_slice %19 {offsets = [9, 0], sizes = [16, 128], strides = [1, 1]} : vector<32x128xf32> to vector<16x128xf32>
    %89 = arith.mulf %72, %77 : vector<16x1xf32>
    %90 = vector.broadcast %89 : vector<16x1xf32> to vector<16x128xf32>
    %91 = arith.mulf %90, %88 : vector<16x128xf32>
    %92 = arith.addf %87, %91 : vector<16x128xf32>
    %93 = vector.extract_strided_slice %11 {offsets = [8, 384], sizes = [16, 128], strides = [1, 1]} : vector<32x768xf32> to vector<16x128xf32>
    %94 = vector.extract_strided_slice %11 {offsets = [0, 512], sizes = [32, 128], strides = [1, 1]} : vector<32x768xf32> to vector<32x128xf32>
    %95 = vector.extract_strided_slice %11 {offsets = [0, 640], sizes = [32, 128], strides = [1, 1]} : vector<32x768xf32> to vector<32x128xf32>
    %96 = vector.extract_strided_slice %94 {offsets = [6, 0], sizes = [16, 128], strides = [1, 1]} : vector<32x128xf32> to vector<16x128xf32>
    %97 = arith.mulf %93, %96 : vector<16x128xf32>
    %cst_28 = arith.constant dense<0.000000e+00> : vector<16xf32>
    %98 = vector.multi_reduction <add>, %97, %cst_28 [1] : vector<16x128xf32> to vector<16xf32>
    %99 = vector.shape_cast %98 : vector<16xf32> to vector<16x1xf32>
    %c-2_i32 = arith.constant -2 : i32
    %100 = vector.broadcast %c-2_i32 : i32 to vector<16x1xi32>
    %101 = arith.addi %15, %100 : vector<16x1xi32>
    %c0_i32_29 = arith.constant 0 : i32
    %102 = vector.broadcast %c0_i32_29 : i32 to vector<16x1xi32>
    %103 = arith.cmpi sge, %101, %102 : vector<16x1xi32>
    %c32_i32_30 = arith.constant 32 : i32
    %104 = vector.broadcast %c32_i32_30 : i32 to vector<16x1xi32>
    %105 = arith.cmpi slt, %101, %104 : vector<16x1xi32>
    %106 = arith.andi %103, %105 : vector<16x1xi1>
    %cst_31 = arith.constant -1.000000e+30 : f32
    %107 = vector.broadcast %cst_31 : f32 to vector<16x1xf32>
    %108 = arith.select %106, %99, %107 : vector<16x1xi1>, vector<16x1xf32>
    %109 = vector.extract_strided_slice %94 {offsets = [7, 0], sizes = [16, 128], strides = [1, 1]} : vector<32x128xf32> to vector<16x128xf32>
    %110 = arith.mulf %93, %109 : vector<16x128xf32>
    %cst_32 = arith.constant dense<0.000000e+00> : vector<16xf32>
    %111 = vector.multi_reduction <add>, %110, %cst_32 [1] : vector<16x128xf32> to vector<16xf32>
    %112 = vector.shape_cast %111 : vector<16xf32> to vector<16x1xf32>
    %c-1_i32_33 = arith.constant -1 : i32
    %113 = vector.broadcast %c-1_i32_33 : i32 to vector<16x1xi32>
    %114 = arith.addi %15, %113 : vector<16x1xi32>
    %c0_i32_34 = arith.constant 0 : i32
    %115 = vector.broadcast %c0_i32_34 : i32 to vector<16x1xi32>
    %116 = arith.cmpi sge, %114, %115 : vector<16x1xi32>
    %c32_i32_35 = arith.constant 32 : i32
    %117 = vector.broadcast %c32_i32_35 : i32 to vector<16x1xi32>
    %118 = arith.cmpi slt, %114, %117 : vector<16x1xi32>
    %119 = arith.andi %116, %118 : vector<16x1xi1>
    %cst_36 = arith.constant -1.000000e+30 : f32
    %120 = vector.broadcast %cst_36 : f32 to vector<16x1xf32>
    %121 = arith.select %119, %112, %120 : vector<16x1xi1>, vector<16x1xf32>
    %122 = vector.extract_strided_slice %94 {offsets = [8, 0], sizes = [16, 128], strides = [1, 1]} : vector<32x128xf32> to vector<16x128xf32>
    %123 = arith.mulf %93, %122 : vector<16x128xf32>
    %cst_37 = arith.constant dense<0.000000e+00> : vector<16xf32>
    %124 = vector.multi_reduction <add>, %123, %cst_37 [1] : vector<16x128xf32> to vector<16xf32>
    %125 = vector.shape_cast %124 : vector<16xf32> to vector<16x1xf32>
    %c0_i32_38 = arith.constant 0 : i32
    %126 = vector.broadcast %c0_i32_38 : i32 to vector<16x1xi32>
    %127 = arith.addi %15, %126 : vector<16x1xi32>
    %c0_i32_39 = arith.constant 0 : i32
    %128 = vector.broadcast %c0_i32_39 : i32 to vector<16x1xi32>
    %129 = arith.cmpi sge, %127, %128 : vector<16x1xi32>
    %c32_i32_40 = arith.constant 32 : i32
    %130 = vector.broadcast %c32_i32_40 : i32 to vector<16x1xi32>
    %131 = arith.cmpi slt, %127, %130 : vector<16x1xi32>
    %132 = arith.andi %129, %131 : vector<16x1xi1>
    %cst_41 = arith.constant -1.000000e+30 : f32
    %133 = vector.broadcast %cst_41 : f32 to vector<16x1xf32>
    %134 = arith.select %132, %125, %133 : vector<16x1xi1>, vector<16x1xf32>
    %135 = vector.extract_strided_slice %94 {offsets = [9, 0], sizes = [16, 128], strides = [1, 1]} : vector<32x128xf32> to vector<16x128xf32>
    %136 = arith.mulf %93, %135 : vector<16x128xf32>
    %cst_42 = arith.constant dense<0.000000e+00> : vector<16xf32>
    %137 = vector.multi_reduction <add>, %136, %cst_42 [1] : vector<16x128xf32> to vector<16xf32>
    %138 = vector.shape_cast %137 : vector<16xf32> to vector<16x1xf32>
    %c1_i32_43 = arith.constant 1 : i32
    %139 = vector.broadcast %c1_i32_43 : i32 to vector<16x1xi32>
    %140 = arith.addi %15, %139 : vector<16x1xi32>
    %c0_i32_44 = arith.constant 0 : i32
    %141 = vector.broadcast %c0_i32_44 : i32 to vector<16x1xi32>
    %142 = arith.cmpi sge, %140, %141 : vector<16x1xi32>
    %c32_i32_45 = arith.constant 32 : i32
    %143 = vector.broadcast %c32_i32_45 : i32 to vector<16x1xi32>
    %144 = arith.cmpi slt, %140, %143 : vector<16x1xi32>
    %145 = arith.andi %142, %144 : vector<16x1xi1>
    %cst_46 = arith.constant -1.000000e+30 : f32
    %146 = vector.broadcast %cst_46 : f32 to vector<16x1xf32>
    %147 = arith.select %145, %138, %146 : vector<16x1xi1>, vector<16x1xf32>
    %148 = vector.extract_strided_slice %94 {offsets = [10, 0], sizes = [16, 128], strides = [1, 1]} : vector<32x128xf32> to vector<16x128xf32>
    %149 = arith.mulf %93, %148 : vector<16x128xf32>
    %cst_47 = arith.constant dense<0.000000e+00> : vector<16xf32>
    %150 = vector.multi_reduction <add>, %149, %cst_47 [1] : vector<16x128xf32> to vector<16xf32>
    %151 = vector.shape_cast %150 : vector<16xf32> to vector<16x1xf32>
    %c2_i32 = arith.constant 2 : i32
    %152 = vector.broadcast %c2_i32 : i32 to vector<16x1xi32>
    %153 = arith.addi %15, %152 : vector<16x1xi32>
    %c0_i32_48 = arith.constant 0 : i32
    %154 = vector.broadcast %c0_i32_48 : i32 to vector<16x1xi32>
    %155 = arith.cmpi sge, %153, %154 : vector<16x1xi32>
    %c32_i32_49 = arith.constant 32 : i32
    %156 = vector.broadcast %c32_i32_49 : i32 to vector<16x1xi32>
    %157 = arith.cmpi slt, %153, %156 : vector<16x1xi32>
    %158 = arith.andi %155, %157 : vector<16x1xi1>
    %cst_50 = arith.constant -1.000000e+30 : f32
    %159 = vector.broadcast %cst_50 : f32 to vector<16x1xf32>
    %160 = arith.select %158, %151, %159 : vector<16x1xi1>, vector<16x1xf32>
    %161 = arith.maximumf %108, %121 : vector<16x1xf32>
    %162 = arith.maximumf %161, %134 : vector<16x1xf32>
    %163 = arith.maximumf %162, %147 : vector<16x1xf32>
    %164 = arith.maximumf %163, %160 : vector<16x1xf32>
    %165 = arith.subf %108, %164 : vector<16x1xf32>
    %166 = math.exp %165 : vector<16x1xf32>
    %cst_51 = arith.constant 0.000000e+00 : f32
    %167 = vector.broadcast %cst_51 : f32 to vector<16x1xf32>
    %168 = arith.select %106, %166, %167 : vector<16x1xi1>, vector<16x1xf32>
    %169 = arith.subf %121, %164 : vector<16x1xf32>
    %170 = math.exp %169 : vector<16x1xf32>
    %cst_52 = arith.constant 0.000000e+00 : f32
    %171 = vector.broadcast %cst_52 : f32 to vector<16x1xf32>
    %172 = arith.select %119, %170, %171 : vector<16x1xi1>, vector<16x1xf32>
    %173 = arith.subf %134, %164 : vector<16x1xf32>
    %174 = math.exp %173 : vector<16x1xf32>
    %cst_53 = arith.constant 0.000000e+00 : f32
    %175 = vector.broadcast %cst_53 : f32 to vector<16x1xf32>
    %176 = arith.select %132, %174, %175 : vector<16x1xi1>, vector<16x1xf32>
    %177 = arith.subf %147, %164 : vector<16x1xf32>
    %178 = math.exp %177 : vector<16x1xf32>
    %cst_54 = arith.constant 0.000000e+00 : f32
    %179 = vector.broadcast %cst_54 : f32 to vector<16x1xf32>
    %180 = arith.select %145, %178, %179 : vector<16x1xi1>, vector<16x1xf32>
    %181 = arith.subf %160, %164 : vector<16x1xf32>
    %182 = math.exp %181 : vector<16x1xf32>
    %cst_55 = arith.constant 0.000000e+00 : f32
    %183 = vector.broadcast %cst_55 : f32 to vector<16x1xf32>
    %184 = arith.select %158, %182, %183 : vector<16x1xi1>, vector<16x1xf32>
    %185 = arith.addf %168, %172 : vector<16x1xf32>
    %186 = arith.addf %185, %176 : vector<16x1xf32>
    %187 = arith.addf %186, %180 : vector<16x1xf32>
    %188 = arith.addf %187, %184 : vector<16x1xf32>
    %cst_56 = arith.constant 1.000000e-30 : f32
    %189 = vector.broadcast %cst_56 : f32 to vector<16x1xf32>
    %190 = arith.addf %188, %189 : vector<16x1xf32>
    %191 = tpu.reciprocal %190 : vector<16x1xf32> -> vector<16x1xf32>
    %192 = vector.extract_strided_slice %95 {offsets = [6, 0], sizes = [16, 128], strides = [1, 1]} : vector<32x128xf32> to vector<16x128xf32>
    %193 = arith.mulf %168, %191 : vector<16x1xf32>
    %194 = vector.broadcast %193 : vector<16x1xf32> to vector<16x128xf32>
    %195 = arith.mulf %194, %192 : vector<16x128xf32>
    %196 = arith.addf %92, %195 : vector<16x128xf32>
    %197 = vector.extract_strided_slice %95 {offsets = [7, 0], sizes = [16, 128], strides = [1, 1]} : vector<32x128xf32> to vector<16x128xf32>
    %198 = arith.mulf %172, %191 : vector<16x1xf32>
    %199 = vector.broadcast %198 : vector<16x1xf32> to vector<16x128xf32>
    %200 = arith.mulf %199, %197 : vector<16x128xf32>
    %201 = arith.addf %196, %200 : vector<16x128xf32>
    %202 = vector.extract_strided_slice %95 {offsets = [8, 0], sizes = [16, 128], strides = [1, 1]} : vector<32x128xf32> to vector<16x128xf32>
    %203 = arith.mulf %176, %191 : vector<16x1xf32>
    %204 = vector.broadcast %203 : vector<16x1xf32> to vector<16x128xf32>
    %205 = arith.mulf %204, %202 : vector<16x128xf32>
    %206 = arith.addf %201, %205 : vector<16x128xf32>
    %207 = vector.extract_strided_slice %95 {offsets = [9, 0], sizes = [16, 128], strides = [1, 1]} : vector<32x128xf32> to vector<16x128xf32>
    %208 = arith.mulf %180, %191 : vector<16x1xf32>
    %209 = vector.broadcast %208 : vector<16x1xf32> to vector<16x128xf32>
    %210 = arith.mulf %209, %207 : vector<16x128xf32>
    %211 = arith.addf %206, %210 : vector<16x128xf32>
    %212 = vector.extract_strided_slice %95 {offsets = [10, 0], sizes = [16, 128], strides = [1, 1]} : vector<32x128xf32> to vector<16x128xf32>
    %213 = arith.mulf %184, %191 : vector<16x1xf32>
    %214 = vector.broadcast %213 : vector<16x1xf32> to vector<16x128xf32>
    %215 = arith.mulf %214, %212 : vector<16x128xf32>
    %216 = arith.addf %211, %215 : vector<16x128xf32>
    %c0_57 = arith.constant 0 : index
    %c0_58 = arith.constant 0 : index
    %c0_59 = arith.constant 0 : index
    %217 = vector.load %arg7[%c0_57, %c0_58, %c0_59] : memref<1x16x128xf32, #tpu.memory_space<vmem>>, vector<1x16x128xf32>
    %218 = vector.shape_cast %217 : vector<1x16x128xf32> to vector<16x128xf32>
    %219 = vector.shape_cast %216 : vector<16x128xf32> to vector<1x16x128xf32>
    tpu.vector_store %arg7[%c0_57, %c0_58, %c0_59], %219 {strides = array<i32>} : memref<1x16x128xf32, #tpu.memory_space<vmem>>, vector<1x16x128xf32>,
    return
  }
  func.func @transform_0(%arg0: i32, %arg1: i32) -> (i32, i32, i32) {
    %c0_i32 = arith.constant 0 : i32
    %c0_i32_0 = arith.constant 0 : i32
    return %arg0, %arg1, %c0_i32 : i32, i32, i32
  }
  func.func @transform_1(%arg0: i32, %arg1: i32) -> (i32, i32, i32) {
    %c2_i32 = arith.constant 2 : i32
    %0 = arith.muli %arg1, %c2_i32 : i32
    %c1_i32 = arith.constant 1 : i32
    %1 = arith.subi %0, %c1_i32 : i32
    %c0_i32 = arith.constant 0 : i32
    %2 = arith.maxsi %1, %c0_i32 : i32
    %c0_i32_0 = arith.constant 0 : i32
    %c0_i32_1 = arith.constant 0 : i32
    return %arg0, %2, %c0_i32_0 : i32, i32, i32
  }
  func.func @transform_2(%arg0: i32, %arg1: i32) -> (i32, i32, i32) {
    %c1_i32 = arith.constant 1 : i32
    %0 = arith.addi %arg1, %c1_i32 : i32
    %c2_i32 = arith.constant 2 : i32
    %1 = arith.muli %0, %c2_i32 : i32
    %c3_i32 = arith.constant 3 : i32
    %2 = arith.minsi %1, %c3_i32 : i32
    %c0_i32 = arith.constant 0 : i32
    %c0_i32_0 = arith.constant 0 : i32
    return %arg0, %2, %c0_i32 : i32, i32, i32
  }
  func.func @transform_3(%arg0: i32, %arg1: i32) -> (i32, i32) {
    %c0_i32 = arith.constant 0 : i32
    %c0_i32_0 = arith.constant 0 : i32
    %c0_i32_1 = arith.constant 0 : i32
    return %c0_i32, %c0_i32_0 : i32, i32
  }
  func.func @transform_4(%arg0: i32, %arg1: i32) -> (i32, i32) {
    %c0_i32 = arith.constant 0 : i32
    %c0_i32_0 = arith.constant 0 : i32
    %c0_i32_1 = arith.constant 0 : i32
    return %c0_i32, %c0_i32_0 : i32, i32
  }
  func.func @transform_5(%arg0: i32, %arg1: i32) -> (i32, i32, i32) {
    %c0_i32 = arith.constant 0 : i32
    %c0_i32_0 = arith.constant 0 : i32
    return %arg0, %arg1, %c0_i32 : i32, i32, i32
  }
}

</mosaic_0001>

<llo_original>
// kernel: tpu_custom_call.1
$region0: #{tpu_custom_call.1}
  #allocation0 [shape = 'u32[]', space=smem, size = 0x4, offset = 0x4, fixed_abs, tag = 'smem constant byte address 0x4 - core index']
  #allocation1 [shape = 'u32[72,128]{1,0:T(1,128)}', space=vmem, size = 0x9000, scoped, tag = 'internal scratch']
  %s0 = inlined_call_operand.hbm [shape: f32[2,32,128], index: 0, kind: input, shape index: {}]
  %s1 = inlined_call_operand.hbm [shape: f32[2,32,128], index: 1, kind: input, shape index: {}]
  %s2 = inlined_call_operand.hbm [shape: f32[2,32,128], index: 2, kind: input, shape index: {}]
  %s3 = inlined_call_operand.hbm [shape: f32[128,768], index: 3, kind: input, shape index: {}]
  %s4 = inlined_call_operand.hbm [shape: f32[1,768], index: 4, kind: input, shape index: {}]
  %s5 = inlined_call_operand.hbm [shape: f32[2,32,128], index: 5, kind: output, shape index: {}]
  %s6 = sld [smem:[#allocation0]]
  $region73: #{tpu_custom_call.1} parent=0
    _
  %s8 = ssub.s32 1, %s6
  %s9 = scalar_select 0, %s8, %s6
  $region1: #{tpu_custom_call.1} parent=0
    #allocation2 [shape = 'u8[16384]{0}', space=vmem, size = 0x4000, scoped, tag = 'input window, operand 0']
    #allocation3 [shape = 's32[2]{0}', space=sflag, size = 0x8, scoped, tag = 'scoped memory for tpu_custom_call.1']
    #allocation4 [shape = 's32[2]{0}', space=sflag, size = 0x8, scoped, tag = 'scoped memory for tpu_custom_call.1']
    #allocation5 [shape = 'u8[8192]{0}', space=vmem, size = 0x2000, scoped, tag = 'input window, operand 1']
    #allocation6 [shape = 's32[2]{0}', space=sflag, size = 0x8, scoped, tag = 'scoped memory for tpu_custom_call.1']
    #allocation7 [shape = 'u8[8192]{0}', space=vmem, size = 0x2000, scoped, tag = 'input window, operand 2']
    #allocation8 [shape = 'u8[393216]{0}', space=vmem, size = 0x60000, scoped, tag = 'input window, operand 3, single buffered']
    #allocation9 [shape = 's32[1]{0}', space=sflag, size = 0x4, scoped, tag = 'scoped memory for tpu_custom_call.1']
    #allocation10 [shape = 'u8[3072]{0}', space=vmem, size = 0xc00, scoped, tag = 'input window, operand 4, single buffered']
    #allocation11 [shape = 'u8[16384]{0}', space=vmem, size = 0x4000, scoped, tag = 'output window, operand 0']
    %10 = vsyncpa [#allocation3], 0
    %s11 = scalar_lea.sflag [#allocation3], 1
    %12 = vsyncpa %s11, 0
    %13 = vsyncpa [#allocation6], 0
    %s14 = scalar_lea.sflag [#allocation6], 1
    %15 = vsyncpa %s14, 0
    %16 = vsyncpa [#allocation9], 0
    %17 = vsyncpa [#allocation4], 0
    %s18 = scalar_lea.sflag [#allocation4], 1
    %19 = vsyncpa %s18, 0
    loop: start=0, step=1, limit=6
    $region2: #{tpu_custom_call.1} parent=1 // loop_pre_header
      _
    $region3: #{tpu_custom_call.1} parent=1 // loop_header
      %s21 = sphi 0, %s25
      %p22 = scmp.ge.s32.totalorder %s21, 6
      %s28 = sphi 0, %s40
      %s29 = sphi 0, %s36
      %s30 = sphi 0, %s28
      %s31 = sphi 0, %s29
      %s32 = sphi 0, %s30
      %s33 = sphi 0, %s31
      %s45 = sphi 0, %s47
      %s48 = sphi 0, %s45
      %s49 = sphi 0, %s48
      %s65 = sphi 0, %s49
      %s81 = sphi 0, %s83
      %s84 = sphi 0, %s81
      %s85 = sphi 0, %s84
      %s101 = sphi 0, %s85
      %s117 = sphi 0, %s119
      %s120 = sphi 0, %s117
      %s121 = sphi 0, %s120
      %s137 = sphi 0, %s121
      %s141 = sphi 0, %s141
      %s143 = sphi 0, %s141
      %s144 = sphi 0, %s143
      %s158 = sphi 0, %s144
      %s162 = sphi 0, %s162
      %s164 = sphi 0, %s162
      %s165 = sphi 0, %s164
      %s179 = sphi 0, %s165
      %s187 = sphi 0, %s189
      %s190 = sphi 0, %s187
      %s191 = sphi 0, %s190
      %s207 = sphi 0, %s191
    $region4: #{tpu_custom_call.1} parent=1 // loop_header_branch
      %24 = sbr.rel (%p22) target = $region8
    $region5: #{tpu_custom_call.1} parent=1 // loop_body
      %s26 = ssub.s32 %s21, 1
      %s27 = ssub.s32 %s21, 2
      %s34 = sadd.s32 1, %s29
      %p35 = scmp.ge.s32.totalorder %s34, 2
      %s36 = scalar_select %p35, 0, %s34
      %s37 = sadd.s32 1, %s28
      %s38 = scalar_select %p35, %s37, %s28
      %p39 = scmp.ge.s32.totalorder %s38, 2
      %s40 = scalar_select %p39, 0, %s38
      %s41 = ssub.s32 %s28, %s40
      %s42 = ssub.s32 %s29, %s36
      %s43 = sor.u32 %s41, %s42
      %p44 = scmp.eq.s32.totalorder %s43, 0
      %s46 = sadd.s32 %s45, 1
      %s47 = scalar_select %p44, %s45, %s46
      %p50 = pneg %p44
      %p51 = scmp.eq.s32.totalorder %s21, 3
      %p52 = por %p50, %p51
      %p53 = scmp.ne.s32.totalorder %s45, %s48
      %p54 = scmp.eq.s32.totalorder %s21, 0
      %p55 = por %p53, %p54
      %p56 = scmp.ne.s32.totalorder %s45, %s48
      %p57 = scmp.eq.s32.totalorder %s26, 3
      %p58 = por %p56, %p57
      %p59 = scmp.ne.s32.totalorder %s48, %s49
      %p60 = scmp.eq.s32.totalorder %s26, 0
      %p61 = por %p59, %p60
      %p62 = scmp.ne.s32.totalorder %s48, %s49
      %p63 = scmp.eq.s32.totalorder %s27, 3
      %p64 = por %p62, %p63
      %p66 = scmp.ne.s32.totalorder %s49, %s65
      %p67 = scmp.eq.s32.totalorder %s27, 0
      %p68 = por %p66, %p67
      %s69 = smul.u32 %s29, 2
      %s70 = ssub.s32 %s69, 1
      %p71 = scmp.gt.s32.totalorder %s70, 0
      %s72 = scalar_select %p71, %s70, 0
      %s73 = smul.u32 %s36, 2
      %s74 = ssub.s32 %s73, 1
      %p75 = scmp.gt.s32.totalorder %s74, 0
      %s76 = scalar_select %p75, %s74, 0
      %s77 = ssub.s32 %s28, %s40
      %s78 = ssub.s32 %s72, %s76
      %s79 = sor.u32 %s77, %s78
      %p80 = scmp.eq.s32.totalorder %s79, 0
      %s82 = sadd.s32 %s81, 1
      %s83 = scalar_select %p80, %s81, %s82
      %p86 = pneg %p80
      %p87 = scmp.eq.s32.totalorder %s21, 3
      %p88 = por %p86, %p87
      %p89 = scmp.ne.s32.totalorder %s81, %s84
      %p90 = scmp.eq.s32.totalorder %s21, 0
      %p91 = por %p89, %p90
      %p92 = scmp.ne.s32.totalorder %s81, %s84
      %p93 = scmp.eq.s32.totalorder %s26, 3
      %p94 = por %p92, %p93
      %p95 = scmp.ne.s32.totalorder %s84, %s85
      %p96 = scmp.eq.s32.totalorder %s26, 0
      %p97 = por %p95, %p96
      %p98 = scmp.ne.s32.totalorder %s84, %s85
      %p99 = scmp.eq.s32.totalorder %s27, 3
      %p100 = por %p98, %p99
      %p102 = scmp.ne.s32.totalorder %s85, %s101
      %p103 = scmp.eq.s32.totalorder %s27, 0
      %p104 = por %p102, %p103
      %s105 = sadd.s32 %s29, 1
      %s106 = smul.u32 %s105, 2
      %p107 = scmp.lt.s32.totalorder %s106, 3
      %s108 = scalar_select %p107, %s106, 3
      %s109 = sadd.s32 %s36, 1
      %s110 = smul.u32 %s109, 2
      %p111 = scmp.lt.s32.totalorder %s110, 3
      %s112 = scalar_select %p111, %s110, 3
      %s113 = ssub.s32 %s28, %s40
      %s114 = ssub.s32 %s108, %s112
      %s115 = sor.u32 %s113, %s114
      %p116 = scmp.eq.s32.totalorder %s115, 0
      %s118 = sadd.s32 %s117, 1
      %s119 = scalar_select %p116, %s117, %s118
      %p122 = pneg %p116
      %p123 = scmp.eq.s32.totalorder %s21, 3
      %p124 = por %p122, %p123
      %p125 = scmp.ne.s32.totalorder %s117, %s120
      %p126 = scmp.eq.s32.totalorder %s21, 0
      %p127 = por %p125, %p126
      %p128 = scmp.ne.s32.totalorder %s117, %s120
      %p129 = scmp.eq.s32.totalorder %s26, 3
      %p130 = por %p128, %p129
      %p131 = scmp.ne.s32.totalorder %s120, %s121
      %p132 = scmp.eq.s32.totalorder %s26, 0
      %p133 = por %p131, %p132
      %p134 = scmp.ne.s32.totalorder %s120, %s121
      %p135 = scmp.eq.s32.totalorder %s27, 3
      %p136 = por %p134, %p135
      %p138 = scmp.ne.s32.totalorder %s121, %s137
      %p139 = scmp.eq.s32.totalorder %s27, 0
      %p140 = por %p138, %p139
      %s142 = sadd.s32 %s141, 1
      %p145 = scmp.eq.s32.totalorder %s21, 3
      %p146 = scmp.ne.s32.totalorder %s141, %s143
      %p147 = scmp.eq.s32.totalorder %s21, 0
      %p148 = por %p146, %p147
      %p149 = scmp.ne.s32.totalorder %s141, %s143
      %p150 = scmp.eq.s32.totalorder %s26, 3
      %p151 = por %p149, %p150
      %p152 = scmp.ne.s32.totalorder %s143, %s144
      %p153 = scmp.eq.s32.totalorder %s26, 0
      %p154 = por %p152, %p153
      %p155 = scmp.ne.s32.totalorder %s143, %s144
      %p156 = scmp.eq.s32.totalorder %s27, 3
      %p157 = por %p155, %p156
      %p159 = scmp.ne.s32.totalorder %s144, %s158
      %p160 = scmp.eq.s32.totalorder %s27, 0
      %p161 = por %p159, %p160
      %s163 = sadd.s32 %s162, 1
      %p166 = scmp.eq.s32.totalorder %s21, 3
      %p167 = scmp.ne.s32.totalorder %s162, %s164
      %p168 = scmp.eq.s32.totalorder %s21, 0
      %p169 = por %p167, %p168
      %p170 = scmp.ne.s32.totalorder %s162, %s164
      %p171 = scmp.eq.s32.totalorder %s26, 3
      %p172 = por %p170, %p171
      %p173 = scmp.ne.s32.totalorder %s164, %s165
      %p174 = scmp.eq.s32.totalorder %s26, 0
      %p175 = por %p173, %p174
      %p176 = scmp.ne.s32.totalorder %s164, %s165
      %p177 = scmp.eq.s32.totalorder %s27, 3
      %p178 = por %p176, %p177
      %p180 = scmp.ne.s32.totalorder %s165, %s179
      %p181 = scmp.eq.s32.totalorder %s27, 0
      %p182 = por %p180, %p181
      %s183 = ssub.s32 %s28, %s40
      %s184 = ssub.s32 %s29, %s36
      %s185 = sor.u32 %s183, %s184
      %p186 = scmp.eq.s32.totalorder %s185, 0
      %s188 = sadd.s32 %s187, 1
      %s189 = scalar_select %p186, %s187, %s188
      %p192 = pneg %p186
      %p193 = scmp.eq.s32.totalorder %s21, 3
      %p194 = por %p192, %p193
      %p195 = scmp.ne.s32.totalorder %s187, %s190
      %p196 = scmp.eq.s32.totalorder %s21, 0
      %p197 = por %p195, %p196
      %p198 = scmp.ne.s32.totalorder %s187, %s190
      %p199 = scmp.eq.s32.totalorder %s26, 3
      %p200 = por %p198, %p199
      %p201 = scmp.ne.s32.totalorder %s190, %s191
      %p202 = scmp.eq.s32.totalorder %s26, 0
      %p203 = por %p201, %p202
      %p204 = scmp.ne.s32.totalorder %s190, %s191
      %p205 = scmp.eq.s32.totalorder %s27, 3
      %p206 = por %p204, %p205
      %p208 = scmp.ne.s32.totalorder %s191, %s207
      %p209 = scmp.eq.s32.totalorder %s27, 0
      %p210 = por %p208, %p209
      %p211 = scmp.le.s32.totalorder 1, %s21
      %p212 = scmp.lt.s32.totalorder %s21, 5
      %p213 = pnand %p211, %p212
      %p214 = pneg %p213
      // Predicated region
      $region9: #{tpu_custom_call.1} parent=5 // pred_check
        _
      $region10: #{tpu_custom_call.1} parent=5 // pred_check_branch
        %216 = sbr.rel (%p213) target = $region12
      $region11: #{tpu_custom_call.1} parent=5 // pred_region
        %s217 = ssub.s32 %s21, 1
        // Predicated region
        $region13: #{tpu_custom_call.1} parent=11 // pred_check
          %p218 = pneg %p154
        $region14: #{tpu_custom_call.1} parent=11 // pred_check_branch
          %220 = sbr.rel (%p218) target = $region16
        $region15: #{tpu_custom_call.1} parent=11 // pred_region
          %222 = vsyncadd [#allocation9], 0
          %s223 = sshll.u32 %s3, 4
          %s224 = int_to_ptr.hbm [resolvable:$true] %s223
          %s225 = sshll.u32 [#allocation8], 4
          %s226 = int_to_ptr.vmem [resolvable:$true] %s225
          %231 = dma.hbm_to_vmem [thread:$0]  %s224, 12288, %s226, [#allocation9], 768, 768, 48
        $region16: #{tpu_custom_call.1} parent=11 // pred_fallthru
          _
        // Predicated region
        $region17: #{tpu_custom_call.1} parent=11 // pred_check
          %p232 = pneg %p175
        $region18: #{tpu_custom_call.1} parent=11 // pred_check_branch
          %234 = sbr.rel (%p232) target = $region20
        $region19: #{tpu_custom_call.1} parent=11 // pred_region
          %236 = vsyncadd [#allocation9], 0
          %s238 = sshll.u32 %s4, 4
          %s239 = int_to_ptr.hbm [resolvable:$true] %s238
          %s240 = sshll.u32 [#allocation10], 4
          %s241 = int_to_ptr.vmem [resolvable:$true] %s240
          %243 = dma.hbm_to_vmem [thread:$0]  %s239, 96, %s241, [#allocation9]
        $region20: #{tpu_custom_call.1} parent=11 // pred_fallthru
          _
      $region12: #{tpu_custom_call.1} parent=5 // pred_fallthru
        _
      %p244 = scmp.lt.s32.totalorder %s21, 4
      // Predicated region
      $region21: #{tpu_custom_call.1} parent=5 // pred_check
        %p245 = pneg %p244
      $region22: #{tpu_custom_call.1} parent=5 // pred_check_branch
        %247 = sbr.rel (%p245) target = $region24
      $region23: #{tpu_custom_call.1} parent=5 // pred_region
        // Predicated region
        $region25: #{tpu_custom_call.1} parent=23 // pred_check
          %p248 = pneg %p55
        $region26: #{tpu_custom_call.1} parent=23 // pred_check_branch
          %250 = sbr.rel (%p248) target = $region28
        $region27: #{tpu_custom_call.1} parent=23 // pred_region
          %s251 = sand.u32 %s45, 1
          %s252 = scalar_lea.sflag [#allocation3], %s251
          %s253 = sand.u32 %s45, 1
          %s254 = smul.addr %s253, 16
          %s255 = scalar_lea.vmem [#allocation2], %s254
          %s256 = smul.u32 2, %s29
          %258 = vsyncadd %s252, 0
          %s259 = smul.addr %s28, 4
          %s260 = sadd.s32 %s256, %s259
          %s261 = smul.addr %s260, 8
          %s262 = scalar_lea.hbm %s0, %s261
          %s263 = sshll.u32 %s262, 4
          %s264 = int_to_ptr.hbm [resolvable:$true] %s263
          %s265 = sshll.u32 %s255, 4
          %s266 = int_to_ptr.vmem [resolvable:$true] %s265
          %271 = dma.hbm_to_vmem [thread:$0]  %s264, 256, %s266, %s252, 128, 128, 8
        $region28: #{tpu_custom_call.1} parent=23 // pred_fallthru
          _
        // Predicated region
        $region29: #{tpu_custom_call.1} parent=23 // pred_check
          %p272 = pneg %p91
        $region30: #{tpu_custom_call.1} parent=23 // pred_check_branch
          %274 = sbr.rel (%p272) target = $region32
        $region31: #{tpu_custom_call.1} parent=23 // pred_region
          %s275 = sand.u32 %s21, 1
          %s276 = scalar_lea.sflag [#allocation6], %s275
          %s277 = sand.u32 %s81, 1
          %s278 = smul.addr %s277, 8
          %s279 = scalar_lea.vmem [#allocation5], %s278
          %s280 = smul.u32 %s29, 2
          %s281 = ssub.s32 %s280, 1
          %p282 = scmp.gt.s32.totalorder %s281, 0
          %s283 = scalar_select %p282, %s281, 0
          %285 = vsyncadd %s276, 0
          %s286 = smul.addr %s28, 4
          %s287 = sadd.s32 %s283, %s286
          %s288 = smul.addr %s287, 8
          %s289 = scalar_lea.hbm %s1, %s288
          %s291 = sshll.u32 %s289, 4
          %s292 = int_to_ptr.hbm [resolvable:$true] %s291
          %s293 = sshll.u32 %s279, 4
          %s294 = int_to_ptr.vmem [resolvable:$true] %s293
          %296 = dma.hbm_to_vmem [thread:$0]  %s292, 128, %s294, %s276
        $region32: #{tpu_custom_call.1} parent=23 // pred_fallthru
          _
        // Predicated region
        $region33: #{tpu_custom_call.1} parent=23 // pred_check
          %p297 = pneg %p127
        $region34: #{tpu_custom_call.1} parent=23 // pred_check_branch
          %299 = sbr.rel (%p297) target = $region36
        $region35: #{tpu_custom_call.1} parent=23 // pred_region
          %s300 = sand.u32 %s21, 1
          %s301 = scalar_lea.sflag [#allocation6], %s300
          %s302 = sand.u32 %s117, 1
          %s303 = smul.addr %s302, 8
          %s304 = scalar_lea.vmem [#allocation7], %s303
          %s305 = sadd.s32 %s29, 1
          %s306 = smul.u32 %s305, 2
          %p307 = scmp.lt.s32.totalorder %s306, 3
          %s308 = scalar_select %p307, %s306, 3
          %310 = vsyncadd %s301, 0
          %s311 = smul.addr %s28, 4
          %s312 = sadd.s32 %s308, %s311
          %s313 = smul.addr %s312, 8
          %s314 = scalar_lea.hbm %s2, %s313
          %s316 = sshll.u32 %s314, 4
          %s317 = int_to_ptr.hbm [resolvable:$true] %s316
          %s318 = sshll.u32 %s304, 4
          %s319 = int_to_ptr.vmem [resolvable:$true] %s318
          %321 = dma.hbm_to_vmem [thread:$0]  %s317, 128, %s319, %s301
        $region36: #{tpu_custom_call.1} parent=23 // pred_fallthru
          _
      $region24: #{tpu_custom_call.1} parent=5 // pred_fallthru
        _
      %p322 = scmp.le.s32.totalorder 1, %s21
      %p323 = scmp.lt.s32.totalorder %s21, 5
      %p324 = pnand %p322, %p323
      %p325 = pneg %p324
      // Predicated region
      $region37: #{tpu_custom_call.1} parent=5 // pred_check
        _
      $region38: #{tpu_custom_call.1} parent=5 // pred_check_branch
        %327 = sbr.rel (%p324) target = $region40
      $region39: #{tpu_custom_call.1} parent=5 // pred_region
        %s328 = ssub.s32 %s21, 1
        %s329 = sand.u32 %s48, 1
        %s330 = scalar_lea.sflag [#allocation3], %s329
        %s331 = sand.u32 %s48, 1
        %s332 = smul.addr %s331, 16
        %s333 = scalar_lea.vmem [#allocation2], %s332
        // Predicated region
        $region41: #{tpu_custom_call.1} parent=39 // pred_check
          %p334 = pneg %p61
        $region42: #{tpu_custom_call.1} parent=39 // pred_check_branch
          %336 = sbr.rel (%p334) target = $region44
        $region43: #{tpu_custom_call.1} parent=39 // pred_region
          %338 = dma.done %s330, 256
        $region44: #{tpu_custom_call.1} parent=39 // pred_fallthru
          _
        %s339 = sand.u32 %s26, 1
        %s340 = scalar_lea.sflag [#allocation6], %s339
        %s341 = sand.u32 %s84, 1
        %s342 = smul.addr %s341, 8
        %s343 = scalar_lea.vmem [#allocation5], %s342
        // Predicated region
        $region45: #{tpu_custom_call.1} parent=39 // pred_check
          %p344 = pneg %p97
        $region46: #{tpu_custom_call.1} parent=39 // pred_check_branch
          %346 = sbr.rel (%p344) target = $region48
        $region47: #{tpu_custom_call.1} parent=39 // pred_region
          %348 = dma.done %s340, 128
        $region48: #{tpu_custom_call.1} parent=39 // pred_fallthru
          _
        %s349 = sand.u32 %s26, 1
        %s350 = scalar_lea.sflag [#allocation6], %s349
        %s351 = sand.u32 %s120, 1
        %s352 = smul.addr %s351, 8
        %s353 = scalar_lea.vmem [#allocation7], %s352
        // Predicated region
        $region49: #{tpu_custom_call.1} parent=39 // pred_check
          %p354 = pneg %p133
        $region50: #{tpu_custom_call.1} parent=39 // pred_check_branch
          %356 = sbr.rel (%p354) target = $region52
        $region51: #{tpu_custom_call.1} parent=39 // pred_region
          %358 = dma.done %s350, 128
        $region52: #{tpu_custom_call.1} parent=39 // pred_fallthru
          _
        // Predicated region
        $region53: #{tpu_custom_call.1} parent=39 // pred_check
          %p359 = pneg %p154
        $region54: #{tpu_custom_call.1} parent=39 // pred_check_branch
          %361 = sbr.rel (%p359) target = $region56
        $region55: #{tpu_custom_call.1} parent=39 // pred_region
          %363 = dma.done [#allocation9], 12288
        $region56: #{tpu_custom_call.1} parent=39 // pred_fallthru
          _
        // Predicated region
        $region57: #{tpu_custom_call.1} parent=39 // pred_check
          %p364 = pneg %p175
        $region58: #{tpu_custom_call.1} parent=39 // pred_check_branch
          %366 = sbr.rel (%p364) target = $region60
        $region59: #{tpu_custom_call.1} parent=39 // pred_region
          %368 = dma.done [#allocation9], 96
        $region60: #{tpu_custom_call.1} parent=39 // pred_fallthru
          _
        %s369 = sand.u32 %s48, 1
        %s370 = scalar_lea.sflag [#allocation3], %s369
        %s371 = sand.u32 %s48, 1
        %s372 = smul.addr %s371, 16
        %s373 = scalar_lea.vmem [#allocation2], %s372
        %p374 = pneg %p61
        %p375 = pneg %p58
        %s376 = sand.u32 %s26, 1
        %s377 = scalar_lea.sflag [#allocation6], %s376
        %s378 = sand.u32 %s84, 1
        %s379 = smul.addr %s378, 8
        %s380 = scalar_lea.vmem [#allocation5], %s379
        %p381 = pneg %p97
        %p382 = pneg %p94
        %s383 = sand.u32 %s26, 1
        %s384 = scalar_lea.sflag [#allocation6], %s383
        %s385 = sand.u32 %s120, 1
        %s386 = smul.addr %s385, 8
        %s387 = scalar_lea.vmem [#allocation7], %s386
        %p388 = pneg %p133
        %p389 = pneg %p130
        %p390 = pneg %p154
        %p391 = pneg %p151
        %p392 = pneg %p175
        %p393 = pneg %p172
        %p394 = pneg %p203
        %p395 = pneg %p200
        %s396 = sand.u32 %s190, 1
        %s397 = scalar_lea.sflag [#allocation4], %s396
        %s398 = sand.u32 %s190, 1
        %s399 = smul.addr %s398, 16
        %s400 = scalar_lea.vmem [#allocation11], %s399
        %s401 = smul.u32 2, %s31
        %s402 = smul.u32 %s31, 2
        %s403 = ssub.s32 %s402, 1
        %p404 = scmp.gt.s32.totalorder %s403, 0
        %s405 = scalar_select %p404, %s403, 0
        %s406 = sadd.s32 %s31, 1
        %s407 = smul.u32 %s406, 2
        %p408 = scmp.lt.s32.totalorder %s407, 3
        %s409 = scalar_select %p408, %s407, 3
        %s410 = smul.u32 2, %s31
        %v411 = vld [vmem:[%s333] sm:$0xff]
        %v412 = vld [vmem:[%s333 + $0x8] sm:$0xff]
        %v413 = vld [vmem:[%s343] sm:$0xff]
        %v414 = vld [vmem:[%s353] sm:$0xff]
        %v415 = vld [vmem:[#allocation8] sm:$0xff]
        %v416 = vld [vmem:[#allocation8 + $0x8] sm:$0xff]
        %v417 = vld [vmem:[#allocation8 + $0x10] sm:$0xff]
        %v418 = vld [vmem:[#allocation8 + $0x18] sm:$0xff]
        %v419 = vld [vmem:[#allocation8 + $0x20] sm:$0xff]
        %v420 = vld [vmem:[#allocation8 + $0x28] sm:$0xff]
        %v421 = vld [vmem:[#allocation8 + $0x30] sm:$0xff]
        %v422 = vld [vmem:[#allocation8 + $0x38] sm:$0xff]
        %v423 = vld [vmem:[#allocation8 + $0x40] sm:$0xff]
        %v424 = vld [vmem:[#allocation8 + $0x48] sm:$0xff]
        %v425 = vld [vmem:[#allocation8 + $0x50] sm:$0xff]
        %v426 = vld [vmem:[#allocation8 + $0x58] sm:$0xff]
        %v427 = vld [vmem:[#allocation8 + $0x60] sm:$0xff]
        %v428 = vld [vmem:[#allocation8 + $0x68] sm:$0xff]
        %v429 = vld [vmem:[#allocation8 + $0x70] sm:$0xff]
        %v430 = vld [vmem:[#allocation8 + $0x78] sm:$0xff]
        %v431 = vld [vmem:[#allocation8 + $0x80] sm:$0xff]
        %v432 = vld [vmem:[#allocation8 + $0x88] sm:$0xff]
        %v433 = vld [vmem:[#allocation8 + $0x90] sm:$0xff]
        %v434 = vld [vmem:[#allocation8 + $0x98] sm:$0xff]
        %v435 = vld [vmem:[#allocation8 + $0xa0] sm:$0xff]
        %v436 = vld [vmem:[#allocation8 + $0xa8] sm:$0xff]
        %v437 = vld [vmem:[#allocation8 + $0xb0] sm:$0xff]
        %v438 = vld [vmem:[#allocation8 + $0xb8] sm:$0xff]
        %v439 = vld [vmem:[#allocation8 + $0xc0] sm:$0xff]
        %v440 = vld [vmem:[#allocation8 + $0xc8] sm:$0xff]
        %v441 = vld [vmem:[#allocation8 + $0xd0] sm:$0xff]
        %v442 = vld [vmem:[#allocation8 + $0xd8] sm:$0xff]
        %v443 = vld [vmem:[#allocation8 + $0xe0] sm:$0xff]
        %v444 = vld [vmem:[#allocation8 + $0xe8] sm:$0xff]
        %v445 = vld [vmem:[#allocation8 + $0xf0] sm:$0xff]
        %v446 = vld [vmem:[#allocation8 + $0xf8] sm:$0xff]
        %v447 = vld [vmem:[#allocation8 + $0x100] sm:$0xff]
        %v448 = vld [vmem:[#allocation8 + $0x108] sm:$0xff]
        %v449 = vld [vmem:[#allocation8 + $0x110] sm:$0xff]
        %v450 = vld [vmem:[#allocation8 + $0x118] sm:$0xff]
        %v451 = vld [vmem:[#allocation8 + $0x120] sm:$0xff]
        %v452 = vld [vmem:[#allocation8 + $0x128] sm:$0xff]
        %v453 = vld [vmem:[#allocation8 + $0x130] sm:$0xff]
        %v454 = vld [vmem:[#allocation8 + $0x138] sm:$0xff]
        %v455 = vld [vmem:[#allocation8 + $0x140] sm:$0xff]
        %v456 = vld [vmem:[#allocation8 + $0x148] sm:$0xff]
        %v457 = vld [vmem:[#allocation8 + $0x150] sm:$0xff]
        %v458 = vld [vmem:[#allocation8 + $0x158] sm:$0xff]
        %v459 = vld [vmem:[#allocation8 + $0x160] sm:$0xff]
        %v460 = vld [vmem:[#allocation8 + $0x168] sm:$0xff]
        %v461 = vld [vmem:[#allocation8 + $0x170] sm:$0xff]
        %v462 = vld [vmem:[#allocation8 + $0x178] sm:$0xff]
        %v463 = vld [vmem:[#allocation8 + $0x180] sm:$0xff]
        %v464 = vld [vmem:[#allocation8 + $0x188] sm:$0xff]
        %v465 = vld [vmem:[#allocation8 + $0x190] sm:$0xff]
        %v466 = vld [vmem:[#allocation8 + $0x198] sm:$0xff]
        %v467 = vld [vmem:[#allocation8 + $0x1a0] sm:$0xff]
        %v468 = vld [vmem:[#allocation8 + $0x1a8] sm:$0xff]
        %v469 = vld [vmem:[#allocation8 + $0x1b0] sm:$0xff]
        %v470 = vld [vmem:[#allocation8 + $0x1b8] sm:$0xff]
        %v471 = vld [vmem:[#allocation8 + $0x1c0] sm:$0xff]
        %v472 = vld [vmem:[#allocation8 + $0x1c8] sm:$0xff]
        %v473 = vld [vmem:[#allocation8 + $0x1d0] sm:$0xff]
        %v474 = vld [vmem:[#allocation8 + $0x1d8] sm:$0xff]
        %v475 = vld [vmem:[#allocation8 + $0x1e0] sm:$0xff]
        %v476 = vld [vmem:[#allocation8 + $0x1e8] sm:$0xff]
        %v477 = vld [vmem:[#allocation8 + $0x1f0] sm:$0xff]
        %v478 = vld [vmem:[#allocation8 + $0x1f8] sm:$0xff]
        %v479 = vld [vmem:[#allocation8 + $0x200] sm:$0xff]
        %v480 = vld [vmem:[#allocation8 + $0x208] sm:$0xff]
        %v481 = vld [vmem:[#allocation8 + $0x210] sm:$0xff]
        %v482 = vld [vmem:[#allocation8 + $0x218] sm:$0xff]
        %v483 = vld [vmem:[#allocation8 + $0x220] sm:$0xff]
        %v484 = vld [vmem:[#allocation8 + $0x228] sm:$0xff]
        %v485 = vld [vmem:[#allocation8 + $0x230] sm:$0xff]
        %v486 = vld [vmem:[#allocation8 + $0x238] sm:$0xff]
        %v487 = vld [vmem:[#allocation8 + $0x240] sm:$0xff]
        %v488 = vld [vmem:[#allocation8 + $0x248] sm:$0xff]
        %v489 = vld [vmem:[#allocation8 + $0x250] sm:$0xff]
        %v490 = vld [vmem:[#allocation8 + $0x258] sm:$0xff]
        %v491 = vld [vmem:[#allocation8 + $0x260] sm:$0xff]
        %v492 = vld [vmem:[#allocation8 + $0x268] sm:$0xff]
        %v493 = vld [vmem:[#allocation8 + $0x270] sm:$0xff]
        %v494 = vld [vmem:[#allocation8 + $0x278] sm:$0xff]
        %v495 = vld [vmem:[#allocation8 + $0x280] sm:$0xff]
        %v496 = vld [vmem:[#allocation8 + $0x288] sm:$0xff]
        %v497 = vld [vmem:[#allocation8 + $0x290] sm:$0xff]
        %v498 = vld [vmem:[#allocation8 + $0x298] sm:$0xff]
        %v499 = vld [vmem:[#allocation8 + $0x2a0] sm:$0xff]
        %v500 = vld [vmem:[#allocation8 + $0x2a8] sm:$0xff]
        %v501 = vld [vmem:[#allocation8 + $0x2b0] sm:$0xff]
        %v502 = vld [vmem:[#allocation8 + $0x2b8] sm:$0xff]
        %v503 = vld [vmem:[#allocation8 + $0x2c0] sm:$0xff]
        %v504 = vld [vmem:[#allocation8 + $0x2c8] sm:$0xff]
        %v505 = vld [vmem:[#allocation8 + $0x2d0] sm:$0xff]
        %v506 = vld [vmem:[#allocation8 + $0x2d8] sm:$0xff]
        %v507 = vld [vmem:[#allocation8 + $0x2e0] sm:$0xff]
        %v508 = vld [vmem:[#allocation8 + $0x2e8] sm:$0xff]
        %v509 = vld [vmem:[#allocation8 + $0x2f0] sm:$0xff]
        %v510 = vld [vmem:[#allocation8 + $0x2f8] sm:$0xff]
        %v511 = vld [vmem:[#allocation10] sm:$0x3f]
        %v513 = vperm.slane %v511, 0
        %v514 = vperm.slane %v511, 1
        %v515 = vperm.slane %v511, 2
        %v516 = vperm.slane %v511, 3
        %v517 = vperm.slane %v511, 4
        %v518 = vperm.slane %v511, 5
        %525 = vmatpush.msra.mxu0 %v505
        %526 = vmatpush.msra.mxu0 %v499
        %527 = vmatpush.msra.mxu0 %v493
        %528 = vmatpush.msra.mxu0 %v487
        %529 = vmatpush.msra.mxu0 %v481
        %530 = vmatpush.msra.mxu0 %v475
        %531 = vmatpush.msra.mxu0 %v469
        %532 = vmatpush.msra.mxu0 %v463
        %533 = vmatpush.msra.mxu0 %v457
        %534 = vmatpush.msra.mxu0 %v451
        %535 = vmatpush.msra.mxu0 %v445
        %536 = vmatpush.msra.mxu0 %v439
        %537 = vmatpush.msra.mxu0 %v433
        %538 = vmatpush.msra.mxu0 %v427
        %539 = vmatpush.msra.mxu0 %v421
        %540 = vmatpush.msra.mxu0 %v415
        %541 = vmatmul.f32.gmra.mxu0 %v413
        %v542 = vpop.f32.mrf.mxu0
        %543 = vmatmul.f32.gmra.mxu0 %v411
        %v544 = vpop.f32.mrf.mxu0
        %v545 = vadd.f32 %v513, %v544
        %546 = vmatmul.f32.gmra.mxu0 %v412
        %v547 = vpop.f32.mrf.mxu0
        %v548 = vadd.f32 %v513, %v547
        %549 = vmatmul.f32.gmra.mxu0 %v414
        %v550 = vpop.f32.mrf.mxu0
        %551 = vdwg.mxu0
        %552 = vmatpush.msra.mxu0 %v506
        %553 = vmatpush.msra.mxu0 %v500
        %554 = vmatpush.msra.mxu0 %v494
        %555 = vmatpush.msra.mxu0 %v488
        %556 = vmatpush.msra.mxu0 %v482
        %557 = vmatpush.msra.mxu0 %v476
        %558 = vmatpush.msra.mxu0 %v470
        %559 = vmatpush.msra.mxu0 %v464
        %560 = vmatpush.msra.mxu0 %v458
        %561 = vmatpush.msra.mxu0 %v452
        %562 = vmatpush.msra.mxu0 %v446
        %563 = vmatpush.msra.mxu0 %v440
        %564 = vmatpush.msra.mxu0 %v434
        %565 = vmatpush.msra.mxu0 %v428
        %566 = vmatpush.msra.mxu0 %v422
        %567 = vmatpush.msra.mxu0 %v416
        %568 = vmatmul.f32.gmra.mxu0 %v413
        %v569 = vpop.f32.mrf.mxu0
        %v570 = vadd.f32 %v514, %v569
        %571 = vmatmul.f32.gmra.mxu0 %v411
        %v572 = vpop.f32.mrf.mxu0
        %v573 = vadd.f32 %v514, %v572
        %574 = vmatmul.f32.gmra.mxu0 %v412
        %v575 = vpop.f32.mrf.mxu0
        %v576 = vadd.f32 %v514, %v575
        %577 = vmatmul.f32.gmra.mxu0 %v414
        %v578 = vpop.f32.mrf.mxu0
        %v579 = vadd.f32 %v514, %v578
        %580 = vdwg.mxu0
        %581 = vmatpush.msra.mxu0 %v507
        %582 = vmatpush.msra.mxu0 %v501
        %583 = vmatpush.msra.mxu0 %v495
        %584 = vmatpush.msra.mxu0 %v489
        %585 = vmatpush.msra.mxu0 %v483
        %586 = vmatpush.msra.mxu0 %v477
        %587 = vmatpush.msra.mxu0 %v471
        %588 = vmatpush.msra.mxu0 %v465
        %589 = vmatpush.msra.mxu0 %v459
        %590 = vmatpush.msra.mxu0 %v453
        %591 = vmatpush.msra.mxu0 %v447
        %592 = vmatpush.msra.mxu0 %v441
        %593 = vmatpush.msra.mxu0 %v435
        %594 = vmatpush.msra.mxu0 %v429
        %595 = vmatpush.msra.mxu0 %v423
        %596 = vmatpush.msra.mxu0 %v417
        %597 = vmatmul.f32.gmra.mxu0 %v413
        %v598 = vpop.f32.mrf.mxu0
        %v599 = vadd.f32 %v515, %v598
        %600 = vmatmul.f32.gmra.mxu0 %v411
        %v601 = vpop.f32.mrf.mxu0
        %v602 = vadd.f32 %v515, %v601
        %603 = vmatmul.f32.gmra.mxu0 %v412
        %v604 = vpop.f32.mrf.mxu0
        %v605 = vadd.f32 %v515, %v604
        %606 = vmatmul.f32.gmra.mxu0 %v414
        %v607 = vpop.f32.mrf.mxu0
        %v608 = vadd.f32 %v515, %v607
        %609 = vdwg.mxu0
        %610 = vmatpush.msra.mxu0 %v508
        %611 = vmatpush.msra.mxu0 %v502
        %612 = vmatpush.msra.mxu0 %v496
        %613 = vmatpush.msra.mxu0 %v490
        %614 = vmatpush.msra.mxu0 %v484
        %615 = vmatpush.msra.mxu0 %v478
        %616 = vmatpush.msra.mxu0 %v472
        %617 = vmatpush.msra.mxu0 %v466
        %618 = vmatpush.msra.mxu0 %v460
        %619 = vmatpush.msra.mxu0 %v454
        %620 = vmatpush.msra.mxu0 %v448
        %621 = vmatpush.msra.mxu0 %v442
        %622 = vmatpush.msra.mxu0 %v436
        %623 = vmatpush.msra.mxu0 %v430
        %624 = vmatpush.msra.mxu0 %v424
        %625 = vmatpush.msra.mxu0 %v418
        %626 = vmatmul.f32.gmra.mxu0 %v413
        %v627 = vpop.f32.mrf.mxu0
        %628 = vmatmul.f32.gmra.mxu0 %v411
        %v629 = vpop.f32.mrf.mxu0
        %v630 = vadd.f32 %v516, %v629
        %631 = vmatmul.f32.gmra.mxu0 %v412
        %v632 = vpop.f32.mrf.mxu0
        %v633 = vadd.f32 %v516, %v632
        %634 = vmatmul.f32.gmra.mxu0 %v414
        %v635 = vpop.f32.mrf.mxu0
        %636 = vdwg.mxu0
        %637 = vmatpush.msra.mxu0 %v509
        %638 = vmatpush.msra.mxu0 %v503
        %639 = vmatpush.msra.mxu0 %v497
        %640 = vmatpush.msra.mxu0 %v491
        %641 = vmatpush.msra.mxu0 %v485
        %642 = vmatpush.msra.mxu0 %v479
        %643 = vmatpush.msra.mxu0 %v473
        %644 = vmatpush.msra.mxu0 %v467
        %645 = vmatpush.msra.mxu0 %v461
        %646 = vmatpush.msra.mxu0 %v455
        %647 = vmatpush.msra.mxu0 %v449
        %648 = vmatpush.msra.mxu0 %v443
        %649 = vmatpush.msra.mxu0 %v437
        %650 = vmatpush.msra.mxu0 %v431
        %651 = vmatpush.msra.mxu0 %v425
        %652 = vmatpush.msra.mxu0 %v419
        %653 = vmatmul.f32.gmra.mxu0 %v413
        %v654 = vpop.f32.mrf.mxu0
        %v655 = vadd.f32 %v517, %v654
        %656 = vmatmul.f32.gmra.mxu0 %v411
        %v657 = vpop.f32.mrf.mxu0
        %v658 = vadd.f32 %v517, %v657
        %659 = vmatmul.f32.gmra.mxu0 %v412
        %v660 = vpop.f32.mrf.mxu0
        %v661 = vadd.f32 %v517, %v660
        %662 = vmatmul.f32.gmra.mxu0 %v414
        %v663 = vpop.f32.mrf.mxu0
        %v664 = vadd.f32 %v517, %v663
        %665 = vdwg.mxu0
        %666 = vmatpush.msra.mxu0 %v510
        %667 = vmatpush.msra.mxu0 %v504
        %668 = vmatpush.msra.mxu0 %v498
        %669 = vmatpush.msra.mxu0 %v492
        %670 = vmatpush.msra.mxu0 %v486
        %671 = vmatpush.msra.mxu0 %v480
        %672 = vmatpush.msra.mxu0 %v474
        %673 = vmatpush.msra.mxu0 %v468
        %674 = vmatpush.msra.mxu0 %v462
        %675 = vmatpush.msra.mxu0 %v456
        %676 = vmatpush.msra.mxu0 %v450
        %677 = vmatpush.msra.mxu0 %v444
        %678 = vmatpush.msra.mxu0 %v438
        %679 = vmatpush.msra.mxu0 %v432
        %680 = vmatpush.msra.mxu0 %v426
        %681 = vmatpush.msra.mxu0 %v420
        %682 = vmatmul.f32.gmra.mxu0 %v413
        %v683 = vpop.f32.mrf.mxu0
        %v684 = vadd.f32 %v518, %v683
        %685 = vmatmul.f32.gmra.mxu0 %v411
        %v686 = vpop.f32.mrf.mxu0
        %v687 = vadd.f32 %v518, %v686
        %688 = vmatmul.f32.gmra.mxu0 %v412
        %v689 = vpop.f32.mrf.mxu0
        %v690 = vadd.f32 %v518, %v689
        %691 = vmatmul.f32.gmra.mxu0 %v414
        %v692 = vpop.f32.mrf.mxu0
        %v693 = vadd.f32 %v518, %v692
        %694 = vdwg.mxu0
        %v695 = vlaneseq
        %v696 = vshrl.u32 %v695, 7
        %v697 = vadd.s32 %v696, 8
        %s698 = smul.u32 %s31, 16
        %v699 = vstv %s698
        %v700 = vadd.s32 %v696, %v699
        %v701 = vadd.s32 %v697, %v699
        %vm705 = vcmask 1040384
        %v706 = vrot.slane %v570, 7
        %v707 = vrot.slane %v573, 7
        %v708 = vsel %vm705, %v706, %v707
        %v709 = vrot.slane %v576, 7
        %v710 = vsel %vm705, %v707, %v709
        %v713 = vmul.f32 %v545, %v708
        %v714 = vmul.f32 %v548, %v710
        %715 = vadd.xlane.f32.xlu0 %v713
        %v716 = vpop.xlane.xlu0 %715
        %717 = vadd.xlane.f32.xlu0 %v714
        %v718 = vpop.xlane.xlu0 %717
        %v719 = vadd.s32 %v700, 4294967295
        %v720 = vadd.s32 %v701, 4294967295
        %vm721 = vcmp.ge.s32.totalorder %v719, 0
        %vm722 = vcmp.ge.s32.totalorder %v720, 0
        %vm723 = vcmp.lt.s32.totalorder %v719, 32
        %vm724 = vcmp.lt.s32.totalorder %v720, 32
        %vm725 = vmand %vm721, %vm723
        %vm726 = vmand %vm722, %vm724
        %v727 = vsel %vm725, %v716, -1e+30
        %v728 = vsel %vm726, %v718, -1e+30
        %v729 = vmul.f32 %v545, %v573
        %v730 = vmul.f32 %v548, %v576
        %731 = vadd.xlane.f32.xlu0 %v729
        %v732 = vpop.xlane.xlu0 %731
        %733 = vadd.xlane.f32.xlu0 %v730
        %v734 = vpop.xlane.xlu0 %733
        %vm735 = vcmp.ge.s32.totalorder %v700, 0
        %vm736 = vcmp.ge.s32.totalorder %v701, 0
        %vm737 = vcmp.lt.s32.totalorder %v700, 32
        %vm738 = vcmp.lt.s32.totalorder %v701, 32
        %vm739 = vmand %vm735, %vm737
        %vm740 = vmand %vm736, %vm738
        %v741 = vsel %vm739, %v732, -1e+30
        %v742 = vsel %vm740, %v734, -1e+30
        %vm744 = vcmask 1046528
        %v745 = vrot.slane %v573, 1
        %v746 = vrot.slane %v576, 1
        %v747 = vsel %vm744, %v745, %v746
        %v748 = vrot.slane %v579, 1
        %v749 = vsel %vm744, %v746, %v748
        %v752 = vmul.f32 %v545, %v747
        %v753 = vmul.f32 %v548, %v749
        %754 = vadd.xlane.f32.xlu0 %v752
        %v755 = vpop.xlane.xlu0 %754
        %756 = vadd.xlane.f32.xlu0 %v753
        %v757 = vpop.xlane.xlu0 %756
        %v758 = vadd.s32 %v700, 1
        %v759 = vadd.s32 %v701, 1
        %vm760 = vcmp.ge.s32.totalorder %v758, 0
        %vm761 = vcmp.ge.s32.totalorder %v759, 0
        %vm762 = vcmp.lt.s32.totalorder %v758, 32
        %vm763 = vcmp.lt.s32.totalorder %v759, 32
        %vm764 = vmand %vm760, %vm762
        %vm765 = vmand %vm761, %vm763
        %v766 = vsel %vm764, %v755, -1e+30
        %v767 = vsel %vm765, %v757, -1e+30
        %v768 = vmax.f32 %v727, %v741
        %v769 = vmax.f32 %v728, %v742
        %v770 = vmax.f32 %v768, %v766
        %v771 = vmax.f32 %v769, %v767
        %v772 = vsub.f32 %v727, %v770
        %v773 = vsub.f32 %v728, %v771
        %v774 = vmul.f32 %v772, 1.442695
        %v775 = vpow.pop %v774
        %v776 = vmul.f32 %v773, 1.442695
        %v777 = vpow.pop %v776
        %v778 = vsel %vm725, %v775, 0.0
        %v779 = vsel %vm726, %v777, 0.0
        %v780 = vsub.f32 %v741, %v770
        %v781 = vsub.f32 %v742, %v771
        %v782 = vmul.f32 %v780, 1.442695
        %v783 = vpow.pop %v782
        %v784 = vmul.f32 %v781, 1.442695
        %v785 = vpow.pop %v784
        %v786 = vsel %vm739, %v783, 0.0
        %v787 = vsel %vm740, %v785, 0.0
        %v788 = vsub.f32 %v766, %v770
        %v789 = vsub.f32 %v767, %v771
        %v790 = vmul.f32 %v788, 1.442695
        %v791 = vpow.pop %v790
        %v792 = vmul.f32 %v789, 1.442695
        %v793 = vpow.pop %v792
        %v794 = vsel %vm764, %v791, 0.0
        %v795 = vsel %vm765, %v793, 0.0
        %v796 = vadd.f32 %v778, %v786
        %v797 = vadd.f32 %v779, %v787
        %v798 = vadd.f32 %v796, %v794
        %v799 = vadd.f32 %v797, %v795
        %v800 = vadd.f32 %v798, 1e-30
        %v801 = vadd.f32 %v799, 1e-30
        %v802 = vrcp.pop %v800
        %v803 = vmul.f32 %v800, %v802
        %v804 = vsub.f32 1.0, %v803
        %v805 = vmul.f32 %v802, %v804
        %v806 = vadd.f32 %v802, %v805
        %vm807 = vweird.f32 %v800
        %vm808 = vweird.f32 %v802
        %vm809 = vmor %vm807, %vm808
        %v810 = vsel %vm809, %v802, %v806
        %v811 = vand.u32 2147483647, %v800
        %vm812 = vcmp.eq.f32.partialorder %v811, 8.507059e+37
        %v813 = vand.u32 %v800, 2147483648
        %v814 = vor.u32 1.1754944e-38, %v813
        %v815 = vsel %vm812, %v814, %v810
        %v816 = vrcp.pop %v801
        %v817 = vmul.f32 %v801, %v816
        %v818 = vsub.f32 1.0, %v817
        %v819 = vmul.f32 %v816, %v818
        %v820 = vadd.f32 %v816, %v819
        %vm821 = vweird.f32 %v801
        %vm822 = vweird.f32 %v816
        %vm823 = vmor %vm821, %vm822
        %v824 = vsel %vm823, %v816, %v820
        %v825 = vand.u32 2147483647, %v801
        %vm826 = vcmp.eq.f32.partialorder %v825, 8.507059e+37
        %v827 = vand.u32 %v801, 2147483648
        %v828 = vor.u32 1.1754944e-38, %v827
        %v829 = vsel %vm826, %v828, %v824
        %v830 = vmul.f32 %v778, %v815
        %v831 = vmul.f32 %v779, %v829
        %v835 = vrot.slane %v599, 7
        %v836 = vrot.slane %v602, 7
        %v837 = vsel %vm705, %v835, %v836
        %v838 = vrot.slane %v605, 7
        %v839 = vsel %vm705, %v836, %v838
        %v842 = vmul.f32 %v830, %v837
        %v843 = vmul.f32 %v831, %v839
        %v844 = vadd.f32 %v842, 0.0
        %v845 = vadd.f32 %v843, 0.0
        %v846 = vmul.f32 %v786, %v815
        %v847 = vmul.f32 %v787, %v829
        %v848 = vmul.f32 %v846, %v602
        %v849 = vmul.f32 %v847, %v605
        %v850 = vadd.f32 %v844, %v848
        %v851 = vadd.f32 %v845, %v849
        %v852 = vmul.f32 %v794, %v815
        %v853 = vmul.f32 %v795, %v829
        %v855 = vrot.slane %v602, 1
        %v856 = vrot.slane %v605, 1
        %v857 = vsel %vm744, %v855, %v856
        %v858 = vrot.slane %v608, 1
        %v859 = vsel %vm744, %v856, %v858
        %v862 = vmul.f32 %v852, %v857
        %v863 = vmul.f32 %v853, %v859
        %v864 = vadd.f32 %v850, %v862
        %v865 = vadd.f32 %v851, %v863
        %vm869 = vcmask 1041408
        %v870 = vrot.slane %v655, 6
        %v871 = vrot.slane %v658, 6
        %v872 = vsel %vm869, %v870, %v871
        %v873 = vrot.slane %v661, 6
        %v874 = vsel %vm869, %v871, %v873
        %v877 = vmul.f32 %v630, %v872
        %v878 = vmul.f32 %v633, %v874
        %879 = vadd.xlane.f32.xlu0 %v877
        %v880 = vpop.xlane.xlu0 %879
        %881 = vadd.xlane.f32.xlu0 %v878
        %v882 = vpop.xlane.xlu0 %881
        %v883 = vadd.s32 %v700, 4294967294
        %v884 = vadd.s32 %v701, 4294967294
        %vm885 = vcmp.ge.s32.totalorder %v883, 0
        %vm886 = vcmp.ge.s32.totalorder %v884, 0
        %vm887 = vcmp.lt.s32.totalorder %v883, 32
        %vm888 = vcmp.lt.s32.totalorder %v884, 32
        %vm889 = vmand %vm885, %vm887
        %vm890 = vmand %vm886, %vm888
        %v891 = vsel %vm889, %v880, -1e+30
        %v892 = vsel %vm890, %v882, -1e+30
        %v893 = vrot.slane %v655, 7
        %v894 = vrot.slane %v658, 7
        %v895 = vsel %vm705, %v893, %v894
        %v896 = vrot.slane %v661, 7
        %v897 = vsel %vm705, %v894, %v896
        %v900 = vmul.f32 %v630, %v895
        %v901 = vmul.f32 %v633, %v897
        %902 = vadd.xlane.f32.xlu0 %v900
        %v903 = vpop.xlane.xlu0 %902
        %904 = vadd.xlane.f32.xlu0 %v901
        %v905 = vpop.xlane.xlu0 %904
        %v906 = vsel %vm725, %v903, -1e+30
        %v907 = vsel %vm726, %v905, -1e+30
        %v908 = vmul.f32 %v630, %v658
        %v909 = vmul.f32 %v633, %v661
        %910 = vadd.xlane.f32.xlu0 %v908
        %v911 = vpop.xlane.xlu0 %910
        %912 = vadd.xlane.f32.xlu0 %v909
        %v913 = vpop.xlane.xlu0 %912
        %v914 = vsel %vm739, %v911, -1e+30
        %v915 = vsel %vm740, %v913, -1e+30
        %v917 = vrot.slane %v658, 1
        %v918 = vrot.slane %v661, 1
        %v919 = vsel %vm744, %v917, %v918
        %v920 = vrot.slane %v664, 1
        %v921 = vsel %vm744, %v918, %v920
        %v924 = vmul.f32 %v630, %v919
        %v925 = vmul.f32 %v633, %v921
        %926 = vadd.xlane.f32.xlu0 %v924
        %v927 = vpop.xlane.xlu0 %926
        %928 = vadd.xlane.f32.xlu0 %v925
        %v929 = vpop.xlane.xlu0 %928
        %v930 = vsel %vm764, %v927, -1e+30
        %v931 = vsel %vm765, %v929, -1e+30
        %vm932 = vcmask 1045504
        %v933 = vrot.slane %v658, 2
        %v934 = vrot.slane %v661, 2
        %v935 = vsel %vm932, %v933, %v934
        %v936 = vrot.slane %v664, 2
        %v937 = vsel %vm932, %v934, %v936
        %v940 = vmul.f32 %v630, %v935
        %v941 = vmul.f32 %v633, %v937
        %942 = vadd.xlane.f32.xlu0 %v940
        %v943 = vpop.xlane.xlu0 %942
        %944 = vadd.xlane.f32.xlu0 %v941
        %v945 = vpop.xlane.xlu0 %944
        %v946 = vadd.s32 %v700, 2
        %v947 = vadd.s32 %v701, 2
        %vm948 = vcmp.ge.s32.totalorder %v946, 0
        %vm949 = vcmp.ge.s32.totalorder %v947, 0
        %vm950 = vcmp.lt.s32.totalorder %v946, 32
        %vm951 = vcmp.lt.s32.totalorder %v947, 32
        %vm952 = vmand %vm948, %vm950
        %vm953 = vmand %vm949, %vm951
        %v954 = vsel %vm952, %v943, -1e+30
        %v955 = vsel %vm953, %v945, -1e+30
        %v956 = vmax.f32 %v891, %v906
        %v957 = vmax.f32 %v892, %v907
        %v958 = vmax.f32 %v956, %v914
        %v959 = vmax.f32 %v957, %v915
        %v960 = vmax.f32 %v958, %v930
        %v961 = vmax.f32 %v959, %v931
        %v962 = vmax.f32 %v960, %v954
        %v963 = vmax.f32 %v961, %v955
        %v964 = vsub.f32 %v891, %v962
        %v965 = vsub.f32 %v892, %v963
        %v966 = vmul.f32 %v964, 1.442695
        %v967 = vpow.pop %v966
        %v968 = vmul.f32 %v965, 1.442695
        %v969 = vpow.pop %v968
        %v970 = vsel %vm889, %v967, 0.0
        %v971 = vsel %vm890, %v969, 0.0
        %v972 = vsub.f32 %v906, %v962
        %v973 = vsub.f32 %v907, %v963
        %v974 = vmul.f32 %v972, 1.442695
        %v975 = vpow.pop %v974
        %v976 = vmul.f32 %v973, 1.442695
        %v977 = vpow.pop %v976
        %v978 = vsel %vm725, %v975, 0.0
        %v979 = vsel %vm726, %v977, 0.0
        %v980 = vsub.f32 %v914, %v962
        %v981 = vsub.f32 %v915, %v963
        %v982 = vmul.f32 %v980, 1.442695
        %v983 = vpow.pop %v982
        %v984 = vmul.f32 %v981, 1.442695
        %v985 = vpow.pop %v984
        %v986 = vsel %vm739, %v983, 0.0
        %v987 = vsel %vm740, %v985, 0.0
        %v988 = vsub.f32 %v930, %v962
        %v989 = vsub.f32 %v931, %v963
        %v990 = vmul.f32 %v988, 1.442695
        %v991 = vpow.pop %v990
        %v992 = vmul.f32 %v989, 1.442695
        %v993 = vpow.pop %v992
        %v994 = vsel %vm764, %v991, 0.0
        %v995 = vsel %vm765, %v993, 0.0
        %v996 = vsub.f32 %v954, %v962
        %v997 = vsub.f32 %v955, %v963
        %v998 = vmul.f32 %v996, 1.442695
        %v999 = vpow.pop %v998
        %v1000 = vmul.f32 %v997, 1.442695
        %v1001 = vpow.pop %v1000
        %v1002 = vsel %vm952, %v999, 0.0
        %v1003 = vsel %vm953, %v1001, 0.0
        %v1004 = vadd.f32 %v970, %v978
        %v1005 = vadd.f32 %v971, %v979
        %v1006 = vadd.f32 %v1004, %v986
        %v1007 = vadd.f32 %v1005, %v987
        %v1008 = vadd.f32 %v1006, %v994
        %v1009 = vadd.f32 %v1007, %v995
        %v1010 = vadd.f32 %v1008, %v1002
        %v1011 = vadd.f32 %v1009, %v1003
        %v1012 = vadd.f32 %v1010, 1e-30
        %v1013 = vadd.f32 %v1011, 1e-30
        %v1014 = vrcp.pop %v1012
        %v1015 = vmul.f32 %v1012, %v1014
        %v1016 = vsub.f32 1.0, %v1015
        %v1017 = vmul.f32 %v1014, %v1016
        %v1018 = vadd.f32 %v1014, %v1017
        %vm1019 = vweird.f32 %v1012
        %vm1020 = vweird.f32 %v1014
        %vm1021 = vmor %vm1019, %vm1020
        %v1022 = vsel %vm1021, %v1014, %v1018
        %v1023 = vand.u32 2147483647, %v1012
        %vm1024 = vcmp.eq.f32.partialorder %v1023, 8.507059e+37
        %v1025 = vand.u32 %v1012, 2147483648
        %v1026 = vor.u32 1.1754944e-38, %v1025
        %v1027 = vsel %vm1024, %v1026, %v1022
        %v1028 = vrcp.pop %v1013
        %v1029 = vmul.f32 %v1013, %v1028
        %v1030 = vsub.f32 1.0, %v1029
        %v1031 = vmul.f32 %v1028, %v1030
        %v1032 = vadd.f32 %v1028, %v1031
        %vm1033 = vweird.f32 %v1013
        %vm1034 = vweird.f32 %v1028
        %vm1035 = vmor %vm1033, %vm1034
        %v1036 = vsel %vm1035, %v1028, %v1032
        %v1037 = vand.u32 2147483647, %v1013
        %vm1038 = vcmp.eq.f32.partialorder %v1037, 8.507059e+37
        %v1039 = vand.u32 %v1013, 2147483648
        %v1040 = vor.u32 1.1754944e-38, %v1039
        %v1041 = vsel %vm1038, %v1040, %v1036
        %v1042 = vmul.f32 %v970, %v1027
        %v1043 = vmul.f32 %v971, %v1041
        %v1047 = vrot.slane %v684, 6
        %v1048 = vrot.slane %v687, 6
        %v1049 = vsel %vm869, %v1047, %v1048
        %v1050 = vrot.slane %v690, 6
        %v1051 = vsel %vm869, %v1048, %v1050
        %v1054 = vmul.f32 %v1042, %v1049
        %v1055 = vmul.f32 %v1043, %v1051
        %v1056 = vadd.f32 %v864, %v1054
        %v1057 = vadd.f32 %v865, %v1055
        %v1058 = vmul.f32 %v978, %v1027
        %v1059 = vmul.f32 %v979, %v1041
        %v1060 = vrot.slane %v684, 7
        %v1061 = vrot.slane %v687, 7
        %v1062 = vsel %vm705, %v1060, %v1061
        %v1063 = vrot.slane %v690, 7
        %v1064 = vsel %vm705, %v1061, %v1063
        %v1067 = vmul.f32 %v1058, %v1062
        %v1068 = vmul.f32 %v1059, %v1064
        %v1069 = vadd.f32 %v1056, %v1067
        %v1070 = vadd.f32 %v1057, %v1068
        %v1071 = vmul.f32 %v986, %v1027
        %v1072 = vmul.f32 %v987, %v1041
        %v1073 = vmul.f32 %v1071, %v687
        %v1074 = vmul.f32 %v1072, %v690
        %v1075 = vadd.f32 %v1069, %v1073
        %v1076 = vadd.f32 %v1070, %v1074
        %v1077 = vmul.f32 %v994, %v1027
        %v1078 = vmul.f32 %v995, %v1041
        %v1080 = vrot.slane %v687, 1
        %v1081 = vrot.slane %v690, 1
        %v1082 = vsel %vm744, %v1080, %v1081
        %v1083 = vrot.slane %v693, 1
        %v1084 = vsel %vm744, %v1081, %v1083
        %v1087 = vmul.f32 %v1077, %v1082
        %v1088 = vmul.f32 %v1078, %v1084
        %v1089 = vadd.f32 %v1075, %v1087
        %v1090 = vadd.f32 %v1076, %v1088
        %v1091 = vmul.f32 %v1002, %v1027
        %v1092 = vmul.f32 %v1003, %v1041
        %v1093 = vrot.slane %v687, 2
        %v1094 = vrot.slane %v690, 2
        %v1095 = vsel %vm932, %v1093, %v1094
        %v1096 = vrot.slane %v693, 2
        %v1097 = vsel %vm932, %v1094, %v1096
        %v1100 = vmul.f32 %v1091, %v1095
        %v1101 = vmul.f32 %v1092, %v1097
        %v1102 = vadd.f32 %v1089, %v1100
        %v1103 = vadd.f32 %v1090, %v1101
        %1104 = vst [vmem:[%s400] sm:$0xff] %v1102
        %1105 = vst [vmem:[%s400 + $0x8] sm:$0xff] %v1103
        %s1106 = sand.u32 %s190, 1
        %s1107 = scalar_lea.sflag [#allocation4], %s1106
        %s1108 = sand.u32 %s190, 1
        %s1109 = smul.addr %s1108, 16
        %s1110 = scalar_lea.vmem [#allocation11], %s1109
        // Predicated region
        $region61: #{tpu_custom_call.1} parent=39 // pred_check
          %p1111 = pneg %p200
        $region62: #{tpu_custom_call.1} parent=39 // pred_check_branch
          %1113 = sbr.rel (%p1111) target = $region64
        $region63: #{tpu_custom_call.1} parent=39 // pred_region
          %s1114 = smul.u32 2, %s31
          %1116 = vsyncadd %s1107, 0
          %s1117 = smul.addr %s30, 4
          %s1118 = sadd.s32 %s1114, %s1117
          %s1119 = smul.addr %s1118, 8
          %s1120 = scalar_lea.hbm %s5, %s1119
          %s1121 = sshll.u32 %s1110, 4
          %s1122 = int_to_ptr.vmem [resolvable:$true] %s1121
          %s1123 = sshll.u32 %s1120, 4
          %s1124 = int_to_ptr.hbm [resolvable:$true] %s1123
          %1129 = dma.vmem_to_hbm [thread:$0]  %s1122, 256, %s1124, %s1107, 128, 128, 8
        $region64: #{tpu_custom_call.1} parent=39 // pred_fallthru
          _
      $region40: #{tpu_custom_call.1} parent=5 // pred_fallthru
        _
      %p1130 = scmp.le.s32.totalorder 2, %s21
      // Predicated region
      $region65: #{tpu_custom_call.1} parent=5 // pred_check
        %p1131 = pneg %p1130
      $region66: #{tpu_custom_call.1} parent=5 // pred_check_branch
        %1133 = sbr.rel (%p1131) target = $region68
      $region67: #{tpu_custom_call.1} parent=5 // pred_region
        %s1134 = ssub.s32 %s21, 2
        // Predicated region
        $region69: #{tpu_custom_call.1} parent=67 // pred_check
          %p1135 = pneg %p206
        $region70: #{tpu_custom_call.1} parent=67 // pred_check_branch
          %1137 = sbr.rel (%p1135) target = $region72
        $region71: #{tpu_custom_call.1} parent=67 // pred_region
          %s1138 = sand.u32 %s191, 1
          %s1139 = scalar_lea.sflag [#allocation4], %s1138
          %s1140 = sand.u32 %s191, 1
          %s1141 = smul.addr %s1140, 16
          %s1142 = scalar_lea.vmem [#allocation11], %s1141
          %1144 = dma.done %s1139, 256
        $region72: #{tpu_custom_call.1} parent=67 // pred_fallthru
          _
      $region68: #{tpu_custom_call.1} parent=5 // pred_fallthru
        _
    $region6: #{tpu_custom_call.1} parent=1 // loop_footer
      %s25 = sadd.s32 1, %s21
    $region7: #{tpu_custom_call.1} parent=1 // loop_footer_branch
      %20 = sbr.rel target = $region3
    $region8: #{tpu_custom_call.1} parent=1 // loop_exit
      _
    %1145 = vsyncpa [#allocation3], 1
    %s1146 = scalar_lea.sflag [#allocation3], 1
    %1147 = vsyncpa %s1146, 1
    %1148 = vsyncpa [#allocation6], 1
    %s1149 = scalar_lea.sflag [#allocation6], 1
    %1150 = vsyncpa %s1149, 1
    %1151 = vsyncpa [#allocation9], 1
    %1152 = vsyncpa [#allocation4], 1
    %s1153 = scalar_lea.sflag [#allocation4], 1
    %1154 = vsyncpa %s1153, 1

// kernel: tpu_custom_call.1
$region0: #{tpu_custom_call.1}
  #allocation0 [shape = 'u32[]', space=smem, size = 0x4, offset = 0x4, fixed_abs, tag = 'smem constant byte address 0x4 - core index']
  #allocation1 [shape = 'u32[72,128]{1,0:T(1,128)}', space=vmem, size = 0x9000, scoped, tag = 'internal scratch']
  %s0 = inlined_call_operand.hbm [shape: f32[2,32,128], index: 0, kind: input, shape index: {}]
  %s1 = inlined_call_operand.hbm [shape: f32[2,32,128], index: 1, kind: input, shape index: {}]
  %s2 = inlined_call_operand.hbm [shape: f32[2,32,128], index: 2, kind: input, shape index: {}]
  %s3 = inlined_call_operand.hbm [shape: f32[128,768], index: 3, kind: input, shape index: {}]
  %s4 = inlined_call_operand.hbm [shape: f32[1,768], index: 4, kind: input, shape index: {}]
  %s5 = inlined_call_operand.hbm [shape: f32[2,32,128], index: 5, kind: output, shape index: {}]
  %s6 = sld [smem:[#allocation0]]
  $region73: #{tpu_custom_call.1} parent=0
    _
  %s8 = ssub.s32 1, %s6
  %s9 = scalar_select 0, %s8, %s6
  $region1: #{tpu_custom_call.1} parent=0
    #allocation2 [shape = 'u8[16384]{0}', space=vmem, size = 0x4000, scoped, tag = 'input window, operand 0']
    #allocation3 [shape = 's32[2]{0}', space=sflag, size = 0x8, scoped, tag = 'scoped memory for tpu_custom_call.1']
    #allocation4 [shape = 's32[2]{0}', space=sflag, size = 0x8, scoped, tag = 'scoped memory for tpu_custom_call.1']
    #allocation5 [shape = 'u8[8192]{0}', space=vmem, size = 0x2000, scoped, tag = 'input window, operand 1']
    #allocation6 [shape = 's32[2]{0}', space=sflag, size = 0x8, scoped, tag = 'scoped memory for tpu_custom_call.1']
    #allocation7 [shape = 'u8[8192]{0}', space=vmem, size = 0x2000, scoped, tag = 'input window, operand 2']
    #allocation8 [shape = 'u8[393216]{0}', space=vmem, size = 0x60000, scoped, tag = 'input window, operand 3, single buffered']
    #allocation9 [shape = 's32[1]{0}', space=sflag, size = 0x4, scoped, tag = 'scoped memory for tpu_custom_call.1']
    #allocation10 [shape = 'u8[3072]{0}', space=vmem, size = 0xc00, scoped, tag = 'input window, operand 4, single buffered']
    #allocation11 [shape = 'u8[16384]{0}', space=vmem, size = 0x4000, scoped, tag = 'output window, operand 0']
    %10 = vsyncpa [#allocation3], 0
    %s11 = scalar_lea.sflag [#allocation3], 1
    %12 = vsyncpa %s11, 0
    %13 = vsyncpa [#allocation6], 0
    %s14 = scalar_lea.sflag [#allocation6], 1
    %15 = vsyncpa %s14, 0
    %16 = vsyncpa [#allocation9], 0
    %17 = vsyncpa [#allocation4], 0
    %s18 = scalar_lea.sflag [#allocation4], 1
    %19 = vsyncpa %s18, 0
    loop: start=0, step=1, limit=6
    $region2: #{tpu_custom_call.1} parent=1 // loop_pre_header
      _
    $region3: #{tpu_custom_call.1} parent=1 // loop_header
      %s21 = sphi 0, %s25
      %p22 = scmp.ge.s32.totalorder %s21, 6
      %s28 = sphi 0, %s40
      %s29 = sphi 0, %s36
      %s30 = sphi 0, %s28
      %s31 = sphi 0, %s29
      %s32 = sphi 0, %s30
      %s33 = sphi 0, %s31
      %s45 = sphi 0, %s47
      %s48 = sphi 0, %s45
      %s49 = sphi 0, %s48
      %s65 = sphi 0, %s49
      %s81 = sphi 0, %s83
      %s84 = sphi 0, %s81
      %s85 = sphi 0, %s84
      %s101 = sphi 0, %s85
      %s117 = sphi 0, %s119
      %s120 = sphi 0, %s117
      %s121 = sphi 0, %s120
      %s137 = sphi 0, %s121
      %s141 = sphi 0, %s141
      %s143 = sphi 0, %s141
      %s144 = sphi 0, %s143
      %s158 = sphi 0, %s144
      %s162 = sphi 0, %s162
      %s164 = sphi 0, %s162
      %s165 = sphi 0, %s164
      %s179 = sphi 0, %s165
      %s187 = sphi 0, %s189
      %s190 = sphi 0, %s187
      %s191 = sphi 0, %s190
      %s207 = sphi 0, %s191
    $region4: #{tpu_custom_call.1} parent=1 // loop_header_branch
      %24 = sbr.rel (%p22) target = $region8
    $region5: #{tpu_custom_call.1} parent=1 // loop_body
      %s26 = ssub.s32 %s21, 1
      %s27 = ssub.s32 %s21, 2
      %s34 = sadd.s32 1, %s29
      %p35 = scmp.ge.s32.totalorder %s34, 2
      %s36 = scalar_select %p35, 0, %s34
      %s37 = sadd.s32 1, %s28
      %s38 = scalar_select %p35, %s37, %s28
      %p39 = scmp.ge.s32.totalorder %s38, 2
      %s40 = scalar_select %p39, 0, %s38
      %s41 = ssub.s32 %s28, %s40
      %s42 = ssub.s32 %s29, %s36
      %s43 = sor.u32 %s41, %s42
      %p44 = scmp.eq.s32.totalorder %s43, 0
      %s46 = sadd.s32 %s45, 1
      %s47 = scalar_select %p44, %s45, %s46
      %p50 = pneg %p44
      %p51 = scmp.eq.s32.totalorder %s21, 3
      %p52 = por %p50, %p51
      %p53 = scmp.ne.s32.totalorder %s45, %s48
      %p54 = scmp.eq.s32.totalorder %s21, 0
      %p55 = por %p53, %p54
      %p56 = scmp.ne.s32.totalorder %s45, %s48
      %p57 = scmp.eq.s32.totalorder %s26, 3
      %p58 = por %p56, %p57
      %p59 = scmp.ne.s32.totalorder %s48, %s49
      %p60 = scmp.eq.s32.totalorder %s26, 0
      %p61 = por %p59, %p60
      %p62 = scmp.ne.s32.totalorder %s48, %s49
      %p63 = scmp.eq.s32.totalorder %s27, 3
      %p64 = por %p62, %p63
      %p66 = scmp.ne.s32.totalorder %s49, %s65
      %p67 = scmp.eq.s32.totalorder %s27, 0
      %p68 = por %p66, %p67
      %s69 = smul.u32 %s29, 2
      %s70 = ssub.s32 %s69, 1
      %p71 = scmp.gt.s32.totalorder %s70, 0
      %s72 = scalar_select %p71, %s70, 0
      %s73 = smul.u32 %s36, 2
      %s74 = ssub.s32 %s73, 1
      %p75 = scmp.gt.s32.totalorder %s74, 0
      %s76 = scalar_select %p75, %s74, 0
      %s77 = ssub.s32 %s28, %s40
      %s78 = ssub.s32 %s72, %s76
      %s79 = sor.u32 %s77, %s78
      %p80 = scmp.eq.s32.totalorder %s79, 0
      %s82 = sadd.s32 %s81, 1
      %s83 = scalar_select %p80, %s81, %s82
      %p86 = pneg %p80
      %p87 = scmp.eq.s32.totalorder %s21, 3
      %p88 = por %p86, %p87
      %p89 = scmp.ne.s32.totalorder %s81, %s84
      %p90 = scmp.eq.s32.totalorder %s21, 0
      %p91 = por %p89, %p90
      %p92 = scmp.ne.s32.totalorder %s81, %s84
      %p93 = scmp.eq.s32.totalorder %s26, 3
      %p94 = por %p92, %p93
      %p95 = scmp.ne.s32.totalorder %s84, %s85
      %p96 = scmp.eq.s32.totalorder %s26, 0
      %p97 = por %p95, %p96
      %p98 = scmp.ne.s32.totalorder %s84, %s85
      %p99 = scmp.eq.s32.totalorder %s27, 3
      %p100 = por %p98, %p99
      %p102 = scmp.ne.s32.totalorder %s85, %s101
      %p103 = scmp.eq.s32.totalorder %s27, 0
      %p104 = por %p102, %p103
      %s105 = sadd.s32 %s29, 1
      %s106 = smul.u32 %s105, 2
      %p107 = scmp.lt.s32.totalorder %s106, 3
      %s108 = scalar_select %p107, %s106, 3
      %s109 = sadd.s32 %s36, 1
      %s110 = smul.u32 %s109, 2
      %p111 = scmp.lt.s32.totalorder %s110, 3
      %s112 = scalar_select %p111, %s110, 3
      %s113 = ssub.s32 %s28, %s40
      %s114 = ssub.s32 %s108, %s112
      %s115 = sor.u32 %s113, %s114
      %p116 = scmp.eq.s32.totalorder %s115, 0
      %s118 = sadd.s32 %s117, 1
      %s119 = scalar_select %p116, %s117, %s118
      %p122 = pneg %p116
      %p123 = scmp.eq.s32.totalorder %s21, 3
      %p124 = por %p122, %p123
      %p125 = scmp.ne.s32.totalorder %s117, %s120
      %p126 = scmp.eq.s32.totalorder %s21, 0
      %p127 = por %p125, %p126
      %p128 = scmp.ne.s32.totalorder %s117, %s120
      %p129 = scmp.eq.s32.totalorder %s26, 3
      %p130 = por %p128, %p129
      %p131 = scmp.ne.s32.totalorder %s120, %s121
      %p132 = scmp.eq.s32.totalorder %s26, 0
      %p133 = por %p131, %p132
      %p134 = scmp.ne.s32.totalorder %s120, %s121
      %p135 = scmp.eq.s32.totalorder %s27, 3
      %p136 = por %p134, %p135
      %p138 = scmp.ne.s32.totalorder %s121, %s137
      %p139 = scmp.eq.s32.totalorder %s27, 0
      %p140 = por %p138, %p139
      %s142 = sadd.s32 %s141, 1
      %p145 = scmp.eq.s32.totalorder %s21, 3
      %p146 = scmp.ne.s32.totalorder %s141, %s143
      %p147 = scmp.eq.s32.totalorder %s21, 0
      %p148 = por %p146, %p147
      %p149 = scmp.ne.s32.totalorder %s141, %s143
      %p150 = scmp.eq.s32.totalorder %s26, 3
      %p151 = por %p149, %p150
      %p152 = scmp.ne.s32.totalorder %s143, %s144
      %p153 = scmp.eq.s32.totalorder %s26, 0
      %p154 = por %p152, %p153
      %p155 = scmp.ne.s32.totalorder %s143, %s144
      %p156 = scmp.eq.s32.totalorder %s27, 3
      %p157 = por %p155, %p156
      %p159 = scmp.ne.s32.totalorder %s144, %s158
      %p160 = scmp.eq.s32.totalorder %s27, 0
      %p161 = por %p159, %p160
      %s163 = sadd.s32 %s162, 1
      %p166 = scmp.eq.s32.totalorder %s21, 3
      %p167 = scmp.ne.s32.totalorder %s162, %s164
      %p168 = scmp.eq.s32.totalorder %s21, 0
      %p169 = por %p167, %p168
      %p170 = scmp.ne.s32.totalorder %s162, %s164
      %p171 = scmp.eq.s32.totalorder %s26, 3
      %p172 = por %p170, %p171
      %p173 = scmp.ne.s32.totalorder %s164, %s165
      %p174 = scmp.eq.s32.totalorder %s26, 0
      %p175 = por %p173, %p174
      %p176 = scmp.ne.s32.totalorder %s164, %s165
      %p177 = scmp.eq.s32.totalorder %s27, 3
      %p178 = por %p176, %p177
      %p180 = scmp.ne.s32.totalorder %s165, %s179
      %p181 = scmp.eq.s32.totalorder %s27, 0
      %p182 = por %p180, %p181
      %s183 = ssub.s32 %s28, %s40
      %s184 = ssub.s32 %s29, %s36
      %s185 = sor.u32 %s183, %s184
      %p186 = scmp.eq.s32.totalorder %s185, 0
      %s188 = sadd.s32 %s187, 1
      %s189 = scalar_select %p186, %s187, %s188
      %p192 = pneg %p186
      %p193 = scmp.eq.s32.totalorder %s21, 3
      %p194 = por %p192, %p193
      %p195 = scmp.ne.s32.totalorder %s187, %s190
      %p196 = scmp.eq.s32.totalorder %s21, 0
      %p197 = por %p195, %p196
      %p198 = scmp.ne.s32.totalorder %s187, %s190
      %p199 = scmp.eq.s32.totalorder %s26, 3
      %p200 = por %p198, %p199
      %p201 = scmp.ne.s32.totalorder %s190, %s191
      %p202 = scmp.eq.s32.totalorder %s26, 0
      %p203 = por %p201, %p202
      %p204 = scmp.ne.s32.totalorder %s190, %s191
      %p205 = scmp.eq.s32.totalorder %s27, 3
      %p206 = por %p204, %p205
      %p208 = scmp.ne.s32.totalorder %s191, %s207
      %p209 = scmp.eq.s32.totalorder %s27, 0
      %p210 = por %p208, %p209
      %p211 = scmp.le.s32.totalorder 1, %s21
      %p212 = scmp.lt.s32.totalorder %s21, 5
      %p213 = pnand %p211, %p212
      %p214 = pneg %p213
      // Predicated region
      $region9: #{tpu_custom_call.1} parent=5 // pred_check
        _
      $region10: #{tpu_custom_call.1} parent=5 // pred_check_branch
        %216 = sbr.rel (%p213) target = $region12
      $region11: #{tpu_custom_call.1} parent=5 // pred_region
        %s217 = ssub.s32 %s21, 1
        // Predicated region
        $region13: #{tpu_custom_call.1} parent=11 // pred_check
          %p218 = pneg %p154
        $region14: #{tpu_custom_call.1} parent=11 // pred_check_branch
          %220 = sbr.rel (%p218) target = $region16
        $region15: #{tpu_custom_call.1} parent=11 // pred_region
          %222 = vsyncadd [#allocation9], 0
          %s223 = sshll.u32 %s3, 4
          %s224 = int_to_ptr.hbm [resolvable:$true] %s223
          %s225 = sshll.u32 [#allocation8], 4
          %s226 = int_to_ptr.vmem [resolvable:$true] %s225
          %231 = dma.hbm_to_vmem [thread:$0]  %s224, 12288, %s226, [#allocation9], 768, 768, 48
        $region16: #{tpu_custom_call.1} parent=11 // pred_fallthru
          _
        // Predicated region
        $region17: #{tpu_custom_call.1} parent=11 // pred_check
          %p232 = pneg %p175
        $region18: #{tpu_custom_call.1} parent=11 // pred_check_branch
          %234 = sbr.rel (%p232) target = $region20
        $region19: #{tpu_custom_call.1} parent=11 // pred_region
          %236 = vsyncadd [#allocation9], 0
          %s238 = sshll.u32 %s4, 4
          %s239 = int_to_ptr.hbm [resolvable:$true] %s238
          %s240 = sshll.u32 [#allocation10], 4
          %s241 = int_to_ptr.vmem [resolvable:$true] %s240
          %243 = dma.hbm_to_vmem [thread:$0]  %s239, 96, %s241, [#allocation9]
        $region20: #{tpu_custom_call.1} parent=11 // pred_fallthru
          _
      $region12: #{tpu_custom_call.1} parent=5 // pred_fallthru
        _
      %p244 = scmp.lt.s32.totalorder %s21, 4
      // Predicated region
      $region21: #{tpu_custom_call.1} parent=5 // pred_check
        %p245 = pneg %p244
      $region22: #{tpu_custom_call.1} parent=5 // pred_check_branch
        %247 = sbr.rel (%p245) target = $region24
      $region23: #{tpu_custom_call.1} parent=5 // pred_region
        // Predicated region
        $region25: #{tpu_custom_call.1} parent=23 // pred_check
          %p248 = pneg %p55
        $region26: #{tpu_custom_call.1} parent=23 // pred_check_branch
          %250 = sbr.rel (%p248) target = $region28
        $region27: #{tpu_custom_call.1} parent=23 // pred_region
          %s251 = sand.u32 %s45, 1
          %s252 = scalar_lea.sflag [#allocation3], %s251
          %s253 = sand.u32 %s45, 1
          %s254 = smul.addr %s253, 16
          %s255 = scalar_lea.vmem [#allocation2], %s254
          %s256 = smul.u32 2, %s29
          %258 = vsyncadd %s252, 0
          %s259 = smul.addr %s28, 4
          %s260 = sadd.s32 %s256, %s259
          %s261 = smul.addr %s260, 8
          %s262 = scalar_lea.hbm %s0, %s261
          %s263 = sshll.u32 %s262, 4
          %s264 = int_to_ptr.hbm [resolvable:$true] %s263
          %s265 = sshll.u32 %s255, 4
          %s266 = int_to_ptr.vmem [resolvable:$true] %s265
          %271 = dma.hbm_to_vmem [thread:$0]  %s264, 256, %s266, %s252, 128, 128, 8
        $region28: #{tpu_custom_call.1} parent=23 // pred_fallthru
          _
        // Predicated region
        $region29: #{tpu_custom_call.1} parent=23 // pred_check
          %p272 = pneg %p91
        $region30: #{tpu_custom_call.1} parent=23 // pred_check_branch
          %274 = sbr.rel (%p272) target = $region32
        $region31: #{tpu_custom_call.1} parent=23 // pred_region
          %s275 = sand.u32 %s21, 1
          %s276 = scalar_lea.sflag [#allocation6], %s275
          %s277 = sand.u32 %s81, 1
          %s278 = smul.addr %s277, 8
          %s279 = scalar_lea.vmem [#allocation5], %s278
          %s280 = smul.u32 %s29, 2
          %s281 = ssub.s32 %s280, 1
          %p282 = scmp.gt.s32.totalorder %s281, 0
          %s283 = scalar_select %p282, %s281, 0
          %285 = vsyncadd %s276, 0
          %s286 = smul.addr %s28, 4
          %s287 = sadd.s32 %s283, %s286
          %s288 = smul.addr %s287, 8
          %s289 = scalar_lea.hbm %s1, %s288
          %s291 = sshll.u32 %s289, 4
          %s292 = int_to_ptr.hbm [resolvable:$true] %s291
          %s293 = sshll.u32 %s279, 4
          %s294 = int_to_ptr.vmem [resolvable:$true] %s293
          %296 = dma.hbm_to_vmem [thread:$0]  %s292, 128, %s294, %s276
        $region32: #{tpu_custom_call.1} parent=23 // pred_fallthru
          _
        // Predicated region
        $region33: #{tpu_custom_call.1} parent=23 // pred_check
          %p297 = pneg %p127
        $region34: #{tpu_custom_call.1} parent=23 // pred_check_branch
          %299 = sbr.rel (%p297) target = $region36
        $region35: #{tpu_custom_call.1} parent=23 // pred_region
          %s300 = sand.u32 %s21, 1
          %s301 = scalar_lea.sflag [#allocation6], %s300
          %s302 = sand.u32 %s117, 1
          %s303 = smul.addr %s302, 8
          %s304 = scalar_lea.vmem [#allocation7], %s303
          %s305 = sadd.s32 %s29, 1
          %s306 = smul.u32 %s305, 2
          %p307 = scmp.lt.s32.totalorder %s306, 3
          %s308 = scalar_select %p307, %s306, 3
          %310 = vsyncadd %s301, 0
          %s311 = smul.addr %s28, 4
          %s312 = sadd.s32 %s308, %s311
          %s313 = smul.addr %s312, 8
          %s314 = scalar_lea.hbm %s2, %s313
          %s316 = sshll.u32 %s314, 4
          %s317 = int_to_ptr.hbm [resolvable:$true] %s316
          %s318 = sshll.u32 %s304, 4
          %s319 = int_to_ptr.vmem [resolvable:$true] %s318
          %321 = dma.hbm_to_vmem [thread:$0]  %s317, 128, %s319, %s301
        $region36: #{tpu_custom_call.1} parent=23 // pred_fallthru
          _
      $region24: #{tpu_custom_call.1} parent=5 // pred_fallthru
        _
      %p322 = scmp.le.s32.totalorder 1, %s21
      %p323 = scmp.lt.s32.totalorder %s21, 5
      %p324 = pnand %p322, %p323
      %p325 = pneg %p324
      // Predicated region
      $region37: #{tpu_custom_call.1} parent=5 // pred_check
        _
      $region38: #{tpu_custom_call.1} parent=5 // pred_check_branch
        %327 = sbr.rel (%p324) target = $region40
      $region39: #{tpu_custom_call.1} parent=5 // pred_region
        %s328 = ssub.s32 %s21, 1
        %s329 = sand.u32 %s48, 1
        %s330 = scalar_lea.sflag [#allocation3], %s329
        %s331 = sand.u32 %s48, 1
        %s332 = smul.addr %s331, 16
        %s333 = scalar_lea.vmem [#allocation2], %s332
        // Predicated region
        $region41: #{tpu_custom_call.1} parent=39 // pred_check
          %p334 = pneg %p61
        $region42: #{tpu_custom_call.1} parent=39 // pred_check_branch
          %336 = sbr.rel (%p334) target = $region44
        $region43: #{tpu_custom_call.1} parent=39 // pred_region
          %338 = dma.done %s330, 256
        $region44: #{tpu_custom_call.1} parent=39 // pred_fallthru
          _
        %s339 = sand.u32 %s26, 1
        %s340 = scalar_lea.sflag [#allocation6], %s339
        %s341 = sand.u32 %s84, 1
        %s342 = smul.addr %s341, 8
        %s343 = scalar_lea.vmem [#allocation5], %s342
        // Predicated region
        $region45: #{tpu_custom_call.1} parent=39 // pred_check
          %p344 = pneg %p97
        $region46: #{tpu_custom_call.1} parent=39 // pred_check_branch
          %346 = sbr.rel (%p344) target = $region48
        $region47: #{tpu_custom_call.1} parent=39 // pred_region
          %348 = dma.done %s340, 128
        $region48: #{tpu_custom_call.1} parent=39 // pred_fallthru
          _
        %s349 = sand.u32 %s26, 1
        %s350 = scalar_lea.sflag [#allocation6], %s349
        %s351 = sand.u32 %s120, 1
        %s352 = smul.addr %s351, 8
        %s353 = scalar_lea.vmem [#allocation7], %s352
        // Predicated region
        $region49: #{tpu_custom_call.1} parent=39 // pred_check
          %p354 = pneg %p133
        $region50: #{tpu_custom_call.1} parent=39 // pred_check_branch
          %356 = sbr.rel (%p354) target = $region52
        $region51: #{tpu_custom_call.1} parent=39 // pred_region
          %358 = dma.done %s350, 128
        $region52: #{tpu_custom_call.1} parent=39 // pred_fallthru
          _
        // Predicated region
        $region53: #{tpu_custom_call.1} parent=39 // pred_check
          %p359 = pneg %p154
        $region54: #{tpu_custom_call.1} parent=39 // pred_check_branch
          %361 = sbr.rel (%p359) target = $region56
        $region55: #{tpu_custom_call.1} parent=39 // pred_region
          %363 = dma.done [#allocation9], 12288
        $region56: #{tpu_custom_call.1} parent=39 // pred_fallthru
          _
        // Predicated region
        $region57: #{tpu_custom_call.1} parent=39 // pred_check
          %p364 = pneg %p175
        $region58: #{tpu_custom_call.1} parent=39 // pred_check_branch
          %366 = sbr.rel (%p364) target = $region60
        $region59: #{tpu_custom_call.1} parent=39 // pred_region
          %368 = dma.done [#allocation9], 96
        $region60: #{tpu_custom_call.1} parent=39 // pred_fallthru
          _
        %s369 = sand.u32 %s48, 1
        %s370 = scalar_lea.sflag [#allocation3], %s369
        %s371 = sand.u32 %s48, 1
        %s372 = smul.addr %s371, 16
        %s373 = scalar_lea.vmem [#allocation2], %s372
        %p374 = pneg %p61
        %p375 = pneg %p58
        %s376 = sand.u32 %s26, 1
        %s377 = scalar_lea.sflag [#allocation6], %s376
        %s378 = sand.u32 %s84, 1
        %s379 = smul.addr %s378, 8
        %s380 = scalar_lea.vmem [#allocation5], %s379
        %p381 = pneg %p97
        %p382 = pneg %p94
        %s383 = sand.u32 %s26, 1
        %s384 = scalar_lea.sflag [#allocation6], %s383
        %s385 = sand.u32 %s120, 1
        %s386 = smul.addr %s385, 8
        %s387 = scalar_lea.vmem [#allocation7], %s386
        %p388 = pneg %p133
        %p389 = pneg %p130
        %p390 = pneg %p154
        %p391 = pneg %p151
        %p392 = pneg %p175
        %p393 = pneg %p172
        %p394 = pneg %p203
        %p395 = pneg %p200
        %s396 = sand.u32 %s190, 1
        %s397 = scalar_lea.sflag [#allocation4], %s396
        %s398 = sand.u32 %s190, 1
        %s399 = smul.addr %s398, 16
        %s400 = scalar_lea.vmem [#allocation11], %s399
        %s401 = smul.u32 2, %s31
        %s402 = smul.u32 %s31, 2
        %s403 = ssub.s32 %s402, 1
        %p404 = scmp.gt.s32.totalorder %s403, 0
        %s405 = scalar_select %p404, %s403, 0
        %s406 = sadd.s32 %s31, 1
        %s407 = smul.u32 %s406, 2
        %p408 = scmp.lt.s32.totalorder %s407, 3
        %s409 = scalar_select %p408, %s407, 3
        %s410 = smul.u32 2, %s31
        %v411 = vld [vmem:[%s333] sm:$0xff]
        %v412 = vld [vmem:[%s333 + $0x8] sm:$0xff]
        %v413 = vld [vmem:[%s343] sm:$0xff]
        %v414 = vld [vmem:[%s353] sm:$0xff]
        %v415 = vld [vmem:[#allocation8] sm:$0xff]
        %v416 = vld [vmem:[#allocation8 + $0x8] sm:$0xff]
        %v417 = vld [vmem:[#allocation8 + $0x10] sm:$0xff]
        %v418 = vld [vmem:[#allocation8 + $0x18] sm:$0xff]
        %v419 = vld [vmem:[#allocation8 + $0x20] sm:$0xff]
        %v420 = vld [vmem:[#allocation8 + $0x28] sm:$0xff]
        %v421 = vld [vmem:[#allocation8 + $0x30] sm:$0xff]
        %v422 = vld [vmem:[#allocation8 + $0x38] sm:$0xff]
        %v423 = vld [vmem:[#allocation8 + $0x40] sm:$0xff]
        %v424 = vld [vmem:[#allocation8 + $0x48] sm:$0xff]
        %v425 = vld [vmem:[#allocation8 + $0x50] sm:$0xff]
        %v426 = vld [vmem:[#allocation8 + $0x58] sm:$0xff]
        %v427 = vld [vmem:[#allocation8 + $0x60] sm:$0xff]
        %v428 = vld [vmem:[#allocation8 + $0x68] sm:$0xff]
        %v429 = vld [vmem:[#allocation8 + $0x70] sm:$0xff]
        %v430 = vld [vmem:[#allocation8 + $0x78] sm:$0xff]
        %v431 = vld [vmem:[#allocation8 + $0x80] sm:$0xff]
        %v432 = vld [vmem:[#allocation8 + $0x88] sm:$0xff]
        %v433 = vld [vmem:[#allocation8 + $0x90] sm:$0xff]
        %v434 = vld [vmem:[#allocation8 + $0x98] sm:$0xff]
        %v435 = vld [vmem:[#allocation8 + $0xa0] sm:$0xff]
        %v436 = vld [vmem:[#allocation8 + $0xa8] sm:$0xff]
        %v437 = vld [vmem:[#allocation8 + $0xb0] sm:$0xff]
        %v438 = vld [vmem:[#allocation8 + $0xb8] sm:$0xff]
        %v439 = vld [vmem:[#allocation8 + $0xc0] sm:$0xff]
        %v440 = vld [vmem:[#allocation8 + $0xc8] sm:$0xff]
        %v441 = vld [vmem:[#allocation8 + $0xd0] sm:$0xff]
        %v442 = vld [vmem:[#allocation8 + $0xd8] sm:$0xff]
        %v443 = vld [vmem:[#allocation8 + $0xe0] sm:$0xff]
        %v444 = vld [vmem:[#allocation8 + $0xe8] sm:$0xff]
        %v445 = vld [vmem:[#allocation8 + $0xf0] sm:$0xff]
        %v446 = vld [vmem:[#allocation8 + $0xf8] sm:$0xff]
        %v447 = vld [vmem:[#allocation8 + $0x100] sm:$0xff]
        %v448 = vld [vmem:[#allocation8 + $0x108] sm:$0xff]
        %v449 = vld [vmem:[#allocation8 + $0x110] sm:$0xff]
        %v450 = vld [vmem:[#allocation8 + $0x118] sm:$0xff]
        %v451 = vld [vmem:[#allocation8 + $0x120] sm:$0xff]
        %v452 = vld [vmem:[#allocation8 + $0x128] sm:$0xff]
        %v453 = vld [vmem:[#allocation8 + $0x130] sm:$0xff]
        %v454 = vld [vmem:[#allocation8 + $0x138] sm:$0xff]
        %v455 = vld [vmem:[#allocation8 + $0x140] sm:$0xff]
        %v456 = vld [vmem:[#allocation8 + $0x148] sm:$0xff]
        %v457 = vld [vmem:[#allocation8 + $0x150] sm:$0xff]
        %v458 = vld [vmem:[#allocation8 + $0x158] sm:$0xff]
        %v459 = vld [vmem:[#allocation8 + $0x160] sm:$0xff]
        %v460 = vld [vmem:[#allocation8 + $0x168] sm:$0xff]
        %v461 = vld [vmem:[#allocation8 + $0x170] sm:$0xff]
        %v462 = vld [vmem:[#allocation8 + $0x178] sm:$0xff]
        %v463 = vld [vmem:[#allocation8 + $0x180] sm:$0xff]
        %v464 = vld [vmem:[#allocation8 + $0x188] sm:$0xff]
        %v465 = vld [vmem:[#allocation8 + $0x190] sm:$0xff]
        %v466 = vld [vmem:[#allocation8 + $0x198] sm:$0xff]
        %v467 = vld [vmem:[#allocation8 + $0x1a0] sm:$0xff]
        %v468 = vld [vmem:[#allocation8 + $0x1a8] sm:$0xff]
        %v469 = vld [vmem:[#allocation8 + $0x1b0] sm:$0xff]
        %v470 = vld [vmem:[#allocation8 + $0x1b8] sm:$0xff]
        %v471 = vld [vmem:[#allocation8 + $0x1c0] sm:$0xff]
        %v472 = vld [vmem:[#allocation8 + $0x1c8] sm:$0xff]
        %v473 = vld [vmem:[#allocation8 + $0x1d0] sm:$0xff]
        %v474 = vld [vmem:[#allocation8 + $0x1d8] sm:$0xff]
        %v475 = vld [vmem:[#allocation8 + $0x1e0] sm:$0xff]
        %v476 = vld [vmem:[#allocation8 + $0x1e8] sm:$0xff]
        %v477 = vld [vmem:[#allocation8 + $0x1f0] sm:$0xff]
        %v478 = vld [vmem:[#allocation8 + $0x1f8] sm:$0xff]
        %v479 = vld [vmem:[#allocation8 + $0x200] sm:$0xff]
        %v480 = vld [vmem:[#allocation8 + $0x208] sm:$0xff]
        %v481 = vld [vmem:[#allocation8 + $0x210] sm:$0xff]
        %v482 = vld [vmem:[#allocation8 + $0x218] sm:$0xff]
        %v483 = vld [vmem:[#allocation8 + $0x220] sm:$0xff]
        %v484 = vld [vmem:[#allocation8 + $0x228] sm:$0xff]
        %v485 = vld [vmem:[#allocation8 + $0x230] sm:$0xff]
        %v486 = vld [vmem:[#allocation8 + $0x238] sm:$0xff]
        %v487 = vld [vmem:[#allocation8 + $0x240] sm:$0xff]
        %v488 = vld [vmem:[#allocation8 + $0x248] sm:$0xff]
        %v489 = vld [vmem:[#allocation8 + $0x250] sm:$0xff]
        %v490 = vld [vmem:[#allocation8 + $0x258] sm:$0xff]
        %v491 = vld [vmem:[#allocation8 + $0x260] sm:$0xff]
        %v492 = vld [vmem:[#allocation8 + $0x268] sm:$0xff]
        %v493 = vld [vmem:[#allocation8 + $0x270] sm:$0xff]
        %v494 = vld [vmem:[#allocation8 + $0x278] sm:$0xff]
        %v495 = vld [vmem:[#allocation8 + $0x280] sm:$0xff]
        %v496 = vld [vmem:[#allocation8 + $0x288] sm:$0xff]
        %v497 = vld [vmem:[#allocation8 + $0x290] sm:$0xff]
        %v498 = vld [vmem:[#allocation8 + $0x298] sm:$0xff]
        %v499 = vld [vmem:[#allocation8 + $0x2a0] sm:$0xff]
        %v500 = vld [vmem:[#allocation8 + $0x2a8] sm:$0xff]
        %v501 = vld [vmem:[#allocation8 + $0x2b0] sm:$0xff]
        %v502 = vld [vmem:[#allocation8 + $0x2b8] sm:$0xff]
        %v503 = vld [vmem:[#allocation8 + $0x2c0] sm:$0xff]
        %v504 = vld [vmem:[#allocation8 + $0x2c8] sm:$0xff]
        %v505 = vld [vmem:[#allocation8 + $0x2d0] sm:$0xff]
        %v506 = vld [vmem:[#allocation8 + $0x2d8] sm:$0xff]
        %v507 = vld [vmem:[#allocation8 + $0x2e0] sm:$0xff]
        %v508 = vld [vmem:[#allocation8 + $0x2e8] sm:$0xff]
        %v509 = vld [vmem:[#allocation8 + $0x2f0] sm:$0xff]
        %v510 = vld [vmem:[#allocation8 + $0x2f8] sm:$0xff]
        %v511 = vld [vmem:[#allocation10] sm:$0x3f]
        %v513 = vperm.slane %v511, 0
        %v514 = vperm.slane %v511, 1
        %v515 = vperm.slane %v511, 2
        %v516 = vperm.slane %v511, 3
        %v517 = vperm.slane %v511, 4
        %v518 = vperm.slane %v511, 5
        %525 = vmatpush.msra.mxu0 %v505
        %526 = vmatpush.msra.mxu0 %v499
        %527 = vmatpush.msra.mxu0 %v493
        %528 = vmatpush.msra.mxu0 %v487
        %529 = vmatpush.msra.mxu0 %v481
        %530 = vmatpush.msra.mxu0 %v475
        %531 = vmatpush.msra.mxu0 %v469
        %532 = vmatpush.msra.mxu0 %v463
        %533 = vmatpush.msra.mxu0 %v457
        %534 = vmatpush.msra.mxu0 %v451
        %535 = vmatpush.msra.mxu0 %v445
        %536 = vmatpush.msra.mxu0 %v439
        %537 = vmatpush.msra.mxu0 %v433
        %538 = vmatpush.msra.mxu0 %v427
        %539 = vmatpush.msra.mxu0 %v421
        %540 = vmatpush.msra.mxu0 %v415
        %541 = vmatmul.f32.gmra.mxu0 %v413
        %v542 = vpop.f32.mrf.mxu0
        %543 = vmatmul.f32.gmra.mxu0 %v411
        %v544 = vpop.f32.mrf.mxu0
        %v545 = vadd.f32 %v513, %v544
        %546 = vmatmul.f32.gmra.mxu0 %v412
        %v547 = vpop.f32.mrf.mxu0
        %v548 = vadd.f32 %v513, %v547
        %549 = vmatmul.f32.gmra.mxu0 %v414
        %v550 = vpop.f32.mrf.mxu0
        %551 = vdwg.mxu0
        %552 = vmatpush.msra.mxu0 %v506
        %553 = vmatpush.msra.mxu0 %v500
        %554 = vmatpush.msra.mxu0 %v494
        %555 = vmatpush.msra.mxu0 %v488
        %556 = vmatpush.msra.mxu0 %v482
        %557 = vmatpush.msra.mxu0 %v476
        %558 = vmatpush.msra.mxu0 %v470
        %559 = vmatpush.msra.mxu0 %v464
        %560 = vmatpush.msra.mxu0 %v458
        %561 = vmatpush.msra.mxu0 %v452
        %562 = vmatpush.msra.mxu0 %v446
        %563 = vmatpush.msra.mxu0 %v440
        %564 = vmatpush.msra.mxu0 %v434
        %565 = vmatpush.msra.mxu0 %v428
        %566 = vmatpush.msra.mxu0 %v422
        %567 = vmatpush.msra.mxu0 %v416
        %568 = vmatmul.f32.gmra.mxu0 %v413
        %v569 = vpop.f32.mrf.mxu0
        %v570 = vadd.f32 %v514, %v569
        %571 = vmatmul.f32.gmra.mxu0 %v411
        %v572 = vpop.f32.mrf.mxu0
        %v573 = vadd.f32 %v514, %v572
        %574 = vmatmul.f32.gmra.mxu0 %v412
        %v575 = vpop.f32.mrf.mxu0
        %v576 = vadd.f32 %v514, %v575
        %577 = vmatmul.f32.gmra.mxu0 %v414
        %v578 = vpop.f32.mrf.mxu0
        %v579 = vadd.f32 %v514, %v578
        %580 = vdwg.mxu0
        %581 = vmatpush.msra.mxu0 %v507
        %582 = vmatpush.msra.mxu0 %v501
        %583 = vmatpush.msra.mxu0 %v495
        %584 = vmatpush.msra.mxu0 %v489
        %585 = vmatpush.msra.mxu0 %v483
        %586 = vmatpush.msra.mxu0 %v477
        %587 = vmatpush.msra.mxu0 %v471
        %588 = vmatpush.msra.mxu0 %v465
        %589 = vmatpush.msra.mxu0 %v459
        %590 = vmatpush.msra.mxu0 %v453
        %591 = vmatpush.msra.mxu0 %v447
        %592 = vmatpush.msra.mxu0 %v441
        %593 = vmatpush.msra.mxu0 %v435
        %594 = vmatpush.msra.mxu0 %v429
        %595 = vmatpush.msra.mxu0 %v423
        %596 = vmatpush.msra.mxu0 %v417
        %597 = vmatmul.f32.gmra.mxu0 %v413
        %v598 = vpop.f32.mrf.mxu0
        %v599 = vadd.f32 %v515, %v598
        %600 = vmatmul.f32.gmra.mxu0 %v411
        %v601 = vpop.f32.mrf.mxu0
        %v602 = vadd.f32 %v515, %v601
        %603 = vmatmul.f32.gmra.mxu0 %v412
        %v604 = vpop.f32.mrf.mxu0
        %v605 = vadd.f32 %v515, %v604
        %606 = vmatmul.f32.gmra.mxu0 %v414
        %v607 = vpop.f32.mrf.mxu0
        %v608 = vadd.f32 %v515, %v607
        %609 = vdwg.mxu0
        %610 = vmatpush.msra.mxu0 %v508
        %611 = vmatpush.msra.mxu0 %v502
        %612 = vmatpush.msra.mxu0 %v496
        %613 = vmatpush.msra.mxu0 %v490
        %614 = vmatpush.msra.mxu0 %v484
        %615 = vmatpush.msra.mxu0 %v478
        %616 = vmatpush.msra.mxu0 %v472
        %617 = vmatpush.msra.mxu0 %v466
        %618 = vmatpush.msra.mxu0 %v460
        %619 = vmatpush.msra.mxu0 %v454
        %620 = vmatpush.msra.mxu0 %v448
        %621 = vmatpush.msra.mxu0 %v442
        %622 = vmatpush.msra.mxu0 %v436
        %623 = vmatpush.msra.mxu0 %v430
        %624 = vmatpush.msra.mxu0 %v424
        %625 = vmatpush.msra.mxu0 %v418
        %626 = vmatmul.f32.gmra.mxu0 %v413
        %v627 = vpop.f32.mrf.mxu0
        %628 = vmatmul.f32.gmra.mxu0 %v411
        %v629 = vpop.f32.mrf.mxu0
        %v630 = vadd.f32 %v516, %v629
        %631 = vmatmul.f32.gmra.mxu0 %v412
        %v632 = vpop.f32.mrf.mxu0
        %v633 = vadd.f32 %v516, %v632
        %634 = vmatmul.f32.gmra.mxu0 %v414
        %v635 = vpop.f32.mrf.mxu0
        %636 = vdwg.mxu0
        %637 = vmatpush.msra.mxu0 %v509
        %638 = vmatpush.msra.mxu0 %v503
        %639 = vmatpush.msra.mxu0 %v497
        %640 = vmatpush.msra.mxu0 %v491
        %641 = vmatpush.msra.mxu0 %v485
        %642 = vmatpush.msra.mxu0 %v479
        %643 = vmatpush.msra.mxu0 %v473
        %644 = vmatpush.msra.mxu0 %v467
        %645 = vmatpush.msra.mxu0 %v461
        %646 = vmatpush.msra.mxu0 %v455
        %647 = vmatpush.msra.mxu0 %v449
        %648 = vmatpush.msra.mxu0 %v443
        %649 = vmatpush.msra.mxu0 %v437
        %650 = vmatpush.msra.mxu0 %v431
        %651 = vmatpush.msra.mxu0 %v425
        %652 = vmatpush.msra.mxu0 %v419
        %653 = vmatmul.f32.gmra.mxu0 %v413
        %v654 = vpop.f32.mrf.mxu0
        %v655 = vadd.f32 %v517, %v654
        %656 = vmatmul.f32.gmra.mxu0 %v411
        %v657 = vpop.f32.mrf.mxu0
        %v658 = vadd.f32 %v517, %v657
        %659 = vmatmul.f32.gmra.mxu0 %v412
        %v660 = vpop.f32.mrf.mxu0
        %v661 = vadd.f32 %v517, %v660
        %662 = vmatmul.f32.gmra.mxu0 %v414
        %v663 = vpop.f32.mrf.mxu0
        %v664 = vadd.f32 %v517, %v663
        %665 = vdwg.mxu0
        %666 = vmatpush.msra.mxu0 %v510
        %667 = vmatpush.msra.mxu0 %v504
        %668 = vmatpush.msra.mxu0 %v498
        %669 = vmatpush.msra.mxu0 %v492
        %670 = vmatpush.msra.mxu0 %v486
        %671 = vmatpush.msra.mxu0 %v480
        %672 = vmatpush.msra.mxu0 %v474
        %673 = vmatpush.msra.mxu0 %v468
        %674 = vmatpush.msra.mxu0 %v462
        %675 = vmatpush.msra.mxu0 %v456
        %676 = vmatpush.msra.mxu0 %v450
        %677 = vmatpush.msra.mxu0 %v444
        %678 = vmatpush.msra.mxu0 %v438
        %679 = vmatpush.msra.mxu0 %v432
        %680 = vmatpush.msra.mxu0 %v426
        %681 = vmatpush.msra.mxu0 %v420
        %682 = vmatmul.f32.gmra.mxu0 %v413
        %v683 = vpop.f32.mrf.mxu0
        %v684 = vadd.f32 %v518, %v683
        %685 = vmatmul.f32.gmra.mxu0 %v411
        %v686 = vpop.f32.mrf.mxu0
        %v687 = vadd.f32 %v518, %v686
        %688 = vmatmul.f32.gmra.mxu0 %v412
        %v689 = vpop.f32.mrf.mxu0
        %v690 = vadd.f32 %v518, %v689
        %691 = vmatmul.f32.gmra.mxu0 %v414
        %v692 = vpop.f32.mrf.mxu0
        %v693 = vadd.f32 %v518, %v692
        %694 = vdwg.mxu0
        %v695 = vlaneseq
        %v696 = vshrl.u32 %v695, 7
        %v697 = vadd.s32 %v696, 8
        %s698 = smul.u32 %s31, 16
        %v699 = vstv %s698
        %v700 = vadd.s32 %v696, %v699
        %v701 = vadd.s32 %v697, %v699
        %vm705 = vcmask 1040384
        %v706 = vrot.slane %v570, 7
        %v707 = vrot.slane %v573, 7
        %v708 = vsel %vm705, %v706, %v707
        %v709 = vrot.slane %v576, 7
        %v710 = vsel %vm705, %v707, %v709
        %v713 = vmul.f32 %v545, %v708
        %v714 = vmul.f32 %v548, %v710
        %715 = vadd.xlane.f32.xlu0 %v713
        %v716 = vpop.xlane.xlu0 %715
        %717 = vadd.xlane.f32.xlu0 %v714
        %v718 = vpop.xlane.xlu0 %717
        %v719 = vadd.s32 %v700, 4294967295
        %v720 = vadd.s32 %v701, 4294967295
        %vm721 = vcmp.ge.s32.totalorder %v719, 0
        %vm722 = vcmp.ge.s32.totalorder %v720, 0
        %vm723 = vcmp.lt.s32.totalorder %v719, 32
        %vm724 = vcmp.lt.s32.totalorder %v720, 32
        %vm725 = vmand %vm721, %vm723
        %vm726 = vmand %vm722, %vm724
        %v727 = vsel %vm725, %v716, -1e+30
        %v728 = vsel %vm726, %v718, -1e+30
        %v729 = vmul.f32 %v545, %v573
        %v730 = vmul.f32 %v548, %v576
        %731 = vadd.xlane.f32.xlu0 %v729
        %v732 = vpop.xlane.xlu0 %731
        %733 = vadd.xlane.f32.xlu0 %v730
        %v734 = vpop.xlane.xlu0 %733
        %vm735 = vcmp.ge.s32.totalorder %v700, 0
        %vm736 = vcmp.ge.s32.totalorder %v701, 0
        %vm737 = vcmp.lt.s32.totalorder %v700, 32
        %vm738 = vcmp.lt.s32.totalorder %v701, 32
        %vm739 = vmand %vm735, %vm737
        %vm740 = vmand %vm736, %vm738
        %v741 = vsel %vm739, %v732, -1e+30
        %v742 = vsel %vm740, %v734, -1e+30
        %vm744 = vcmask 1046528
        %v745 = vrot.slane %v573, 1
        %v746 = vrot.slane %v576, 1
        %v747 = vsel %vm744, %v745, %v746
        %v748 = vrot.slane %v579, 1
        %v749 = vsel %vm744, %v746, %v748
        %v752 = vmul.f32 %v545, %v747
        %v753 = vmul.f32 %v548, %v749
        %754 = vadd.xlane.f32.xlu0 %v752
        %v755 = vpop.xlane.xlu0 %754
        %756 = vadd.xlane.f32.xlu0 %v753
        %v757 = vpop.xlane.xlu0 %756
        %v758 = vadd.s32 %v700, 1
        %v759 = vadd.s32 %v701, 1
        %vm760 = vcmp.ge.s32.totalorder %v758, 0
        %vm761 = vcmp.ge.s32.totalorder %v759, 0
        %vm762 = vcmp.lt.s32.totalorder %v758, 32
        %vm763 = vcmp.lt.s32.totalorder %v759, 32
        %vm764 = vmand %vm760, %vm762
        %vm765 = vmand %vm761, %vm763
        %v766 = vsel %vm764, %v755, -1e+30
        %v767 = vsel %vm765, %v757, -1e+30
        %v768 = vmax.f32 %v727, %v741
        %v769 = vmax.f32 %v728, %v742
        %v770 = vmax.f32 %v768, %v766
        %v771 = vmax.f32 %v769, %v767
        %v772 = vsub.f32 %v727, %v770
        %v773 = vsub.f32 %v728, %v771
        %v774 = vmul.f32 %v772, 1.442695
        %v775 = vpow.pop %v774
        %v776 = vmul.f32 %v773, 1.442695
        %v777 = vpow.pop %v776
        %v778 = vsel %vm725, %v775, 0.0
        %v779 = vsel %vm726, %v777, 0.0
        %v780 = vsub.f32 %v741, %v770
        %v781 = vsub.f32 %v742, %v771
        %v782 = vmul.f32 %v780, 1.442695
        %v783 = vpow.pop %v782
        %v784 = vmul.f32 %v781, 1.442695
        %v785 = vpow.pop %v784
        %v786 = vsel %vm739, %v783, 0.0
        %v787 = vsel %vm740, %v785, 0.0
        %v788 = vsub.f32 %v766, %v770
        %v789 = vsub.f32 %v767, %v771
        %v790 = vmul.f32 %v788, 1.442695
        %v791 = vpow.pop %v790
        %v792 = vmul.f32 %v789, 1.442695
        %v793 = vpow.pop %v792
        %v794 = vsel %vm764, %v791, 0.0
        %v795 = vsel %vm765, %v793, 0.0
        %v796 = vadd.f32 %v778, %v786
        %v797 = vadd.f32 %v779, %v787
        %v798 = vadd.f32 %v796, %v794
        %v799 = vadd.f32 %v797, %v795
        %v800 = vadd.f32 %v798, 1e-30
        %v801 = vadd.f32 %v799, 1e-30
        %v802 = vrcp.pop %v800
        %v803 = vmul.f32 %v800, %v802
        %v804 = vsub.f32 1.0, %v803
        %v805 = vmul.f32 %v802, %v804
        %v806 = vadd.f32 %v802, %v805
        %vm807 = vweird.f32 %v800
        %vm808 = vweird.f32 %v802
        %vm809 = vmor %vm807, %vm808
        %v810 = vsel %vm809, %v802, %v806
        %v811 = vand.u32 2147483647, %v800
        %vm812 = vcmp.eq.f32.partialorder %v811, 8.507059e+37
        %v813 = vand.u32 %v800, 2147483648
        %v814 = vor.u32 1.1754944e-38, %v813
        %v815 = vsel %vm812, %v814, %v810
        %v816 = vrcp.pop %v801
        %v817 = vmul.f32 %v801, %v816
        %v818 = vsub.f32 1.0, %v817
        %v819 = vmul.f32 %v816, %v818
        %v820 = vadd.f32 %v816, %v819
        %vm821 = vweird.f32 %v801
        %vm822 = vweird.f32 %v816
        %vm823 = vmor %vm821, %vm822
        %v824 = vsel %vm823, %v816, %v820
        %v825 = vand.u32 2147483647, %v801
        %vm826 = vcmp.eq.f32.partialorder %v825, 8.507059e+37
        %v827 = vand.u32 %v801, 2147483648
        %v828 = vor.u32 1.1754944e-38, %v827
        %v829 = vsel %vm826, %v828, %v824
        %v830 = vmul.f32 %v778, %v815
        %v831 = vmul.f32 %v779, %v829
        %v835 = vrot.slane %v599, 7
        %v836 = vrot.slane %v602, 7
        %v837 = vsel %vm705, %v835, %v836
        %v838 = vrot.slane %v605, 7
        %v839 = vsel %vm705, %v836, %v838
        %v842 = vmul.f32 %v830, %v837
        %v843 = vmul.f32 %v831, %v839
        %v844 = vadd.f32 %v842, 0.0
        %v845 = vadd.f32 %v843, 0.0
        %v846 = vmul.f32 %v786, %v815
        %v847 = vmul.f32 %v787, %v829
        %v848 = vmul.f32 %v846, %v602
        %v849 = vmul.f32 %v847, %v605
        %v850 = vadd.f32 %v844, %v848
        %v851 = vadd.f32 %v845, %v849
        %v852 = vmul.f32 %v794, %v815
        %v853 = vmul.f32 %v795, %v829
        %v855 = vrot.slane %v602, 1
        %v856 = vrot.slane %v605, 1
        %v857 = vsel %vm744, %v855, %v856
        %v858 = vrot.slane %v608, 1
        %v859 = vsel %vm744, %v856, %v858
        %v862 = vmul.f32 %v852, %v857
        %v863 = vmul.f32 %v853, %v859
        %v864 = vadd.f32 %v850, %v862
        %v865 = vadd.f32 %v851, %v863
        %vm869 = vcmask 1041408
        %v870 = vrot.slane %v655, 6
        %v871 = vrot.slane %v658, 6
        %v872 = vsel %vm869, %v870, %v871
        %v873 = vrot.slane %v661, 6
        %v874 = vsel %vm869, %v871, %v873
        %v877 = vmul.f32 %v630, %v872
        %v878 = vmul.f32 %v633, %v874
        %879 = vadd.xlane.f32.xlu0 %v877
        %v880 = vpop.xlane.xlu0 %879
        %881 = vadd.xlane.f32.xlu0 %v878
        %v882 = vpop.xlane.xlu0 %881
        %v883 = vadd.s32 %v700, 4294967294
        %v884 = vadd.s32 %v701, 4294967294
        %vm885 = vcmp.ge.s32.totalorder %v883, 0
        %vm886 = vcmp.ge.s32.totalorder %v884, 0
        %vm887 = vcmp.lt.s32.totalorder %v883, 32
        %vm888 = vcmp.lt.s32.totalorder %v884, 32
        %vm889 = vmand %vm885, %vm887
        %vm890 = vmand %vm886, %vm888
        %v891 = vsel %vm889, %v880, -1e+30
        %v892 = vsel %vm890, %v882, -1e+30
        %v893 = vrot.slane %v655, 7
        %v894 = vrot.slane %v658, 7
        %v895 = vsel %vm705, %v893, %v894
        %v896 = vrot.slane %v661, 7
        %v897 = vsel %vm705, %v894, %v896
        %v900 = vmul.f32 %v630, %v895
        %v901 = vmul.f32 %v633, %v897
        %902 = vadd.xlane.f32.xlu0 %v900
        %v903 = vpop.xlane.xlu0 %902
        %904 = vadd.xlane.f32.xlu0 %v901
        %v905 = vpop.xlane.xlu0 %904
        %v906 = vsel %vm725, %v903, -1e+30
        %v907 = vsel %vm726, %v905, -1e+30
        %v908 = vmul.f32 %v630, %v658
        %v909 = vmul.f32 %v633, %v661
        %910 = vadd.xlane.f32.xlu0 %v908
        %v911 = vpop.xlane.xlu0 %910
        %912 = vadd.xlane.f32.xlu0 %v909
        %v913 = vpop.xlane.xlu0 %912
        %v914 = vsel %vm739, %v911, -1e+30
        %v915 = vsel %vm740, %v913, -1e+30
        %v917 = vrot.slane %v658, 1
        %v918 = vrot.slane %v661, 1
        %v919 = vsel %vm744, %v917, %v918
        %v920 = vrot.slane %v664, 1
        %v921 = vsel %vm744, %v918, %v920
        %v924 = vmul.f32 %v630, %v919
        %v925 = vmul.f32 %v633, %v921
        %926 = vadd.xlane.f32.xlu0 %v924
        %v927 = vpop.xlane.xlu0 %926
        %928 = vadd.xlane.f32.xlu0 %v925
        %v929 = vpop.xlane.xlu0 %928
        %v930 = vsel %vm764, %v927, -1e+30
        %v931 = vsel %vm765, %v929, -1e+30
        %vm932 = vcmask 1045504
        %v933 = vrot.slane %v658, 2
        %v934 = vrot.slane %v661, 2
        %v935 = vsel %vm932, %v933, %v934
        %v936 = vrot.slane %v664, 2
        %v937 = vsel %vm932, %v934, %v936
        %v940 = vmul.f32 %v630, %v935
        %v941 = vmul.f32 %v633, %v937
        %942 = vadd.xlane.f32.xlu0 %v940
        %v943 = vpop.xlane.xlu0 %942
        %944 = vadd.xlane.f32.xlu0 %v941
        %v945 = vpop.xlane.xlu0 %944
        %v946 = vadd.s32 %v700, 2
        %v947 = vadd.s32 %v701, 2
        %vm948 = vcmp.ge.s32.totalorder %v946, 0
        %vm949 = vcmp.ge.s32.totalorder %v947, 0
        %vm950 = vcmp.lt.s32.totalorder %v946, 32
        %vm951 = vcmp.lt.s32.totalorder %v947, 32
        %vm952 = vmand %vm948, %vm950
        %vm953 = vmand %vm949, %vm951
        %v954 = vsel %vm952, %v943, -1e+30
        %v955 = vsel %vm953, %v945, -1e+30
        %v956 = vmax.f32 %v891, %v906
        %v957 = vmax.f32 %v892, %v907
        %v958 = vmax.f32 %v956, %v914
        %v959 = vmax.f32 %v957, %v915
        %v960 = vmax.f32 %v958, %v930
        %v961 = vmax.f32 %v959, %v931
        %v962 = vmax.f32 %v960, %v954
        %v963 = vmax.f32 %v961, %v955
        %v964 = vsub.f32 %v891, %v962
        %v965 = vsub.f32 %v892, %v963
        %v966 = vmul.f32 %v964, 1.442695
        %v967 = vpow.pop %v966
        %v968 = vmul.f32 %v965, 1.442695
        %v969 = vpow.pop %v968
        %v970 = vsel %vm889, %v967, 0.0
        %v971 = vsel %vm890, %v969, 0.0
        %v972 = vsub.f32 %v906, %v962
        %v973 = vsub.f32 %v907, %v963
        %v974 = vmul.f32 %v972, 1.442695
        %v975 = vpow.pop %v974
        %v976 = vmul.f32 %v973, 1.442695
        %v977 = vpow.pop %v976
        %v978 = vsel %vm725, %v975, 0.0
        %v979 = vsel %vm726, %v977, 0.0
        %v980 = vsub.f32 %v914, %v962
        %v981 = vsub.f32 %v915, %v963
        %v982 = vmul.f32 %v980, 1.442695
        %v983 = vpow.pop %v982
        %v984 = vmul.f32 %v981, 1.442695
        %v985 = vpow.pop %v984
        %v986 = vsel %vm739, %v983, 0.0
        %v987 = vsel %vm740, %v985, 0.0
        %v988 = vsub.f32 %v930, %v962
        %v989 = vsub.f32 %v931, %v963
        %v990 = vmul.f32 %v988, 1.442695
        %v991 = vpow.pop %v990
        %v992 = vmul.f32 %v989, 1.442695
        %v993 = vpow.pop %v992
        %v994 = vsel %vm764, %v991, 0.0
        %v995 = vsel %vm765, %v993, 0.0
        %v996 = vsub.f32 %v954, %v962
        %v997 = vsub.f32 %v955, %v963
        %v998 = vmul.f32 %v996, 1.442695
        %v999 = vpow.pop %v998
        %v1000 = vmul.f32 %v997, 1.442695
        %v1001 = vpow.pop %v1000
        %v1002 = vsel %vm952, %v999, 0.0
        %v1003 = vsel %vm953, %v1001, 0.0
        %v1004 = vadd.f32 %v970, %v978
        %v1005 = vadd.f32 %v971, %v979
        %v1006 = vadd.f32 %v1004, %v986
        %v1007 = vadd.f32 %v1005, %v987
        %v1008 = vadd.f32 %v1006, %v994
        %v1009 = vadd.f32 %v1007, %v995
        %v1010 = vadd.f32 %v1008, %v1002
        %v1011 = vadd.f32 %v1009, %v1003
        %v1012 = vadd.f32 %v1010, 1e-30
        %v1013 = vadd.f32 %v1011, 1e-30
        %v1014 = vrcp.pop %v1012
        %v1015 = vmul.f32 %v1012, %v1014
        %v1016 = vsub.f32 1.0, %v1015
        %v1017 = vmul.f32 %v1014, %v1016
        %v1018 = vadd.f32 %v1014, %v1017
        %vm1019 = vweird.f32 %v1012
        %vm1020 = vweird.f32 %v1014
        %vm1021 = vmor %vm1019, %vm1020
        %v1022 = vsel %vm1021, %v1014, %v1018
        %v1023 = vand.u32 2147483647, %v1012
        %vm1024 = vcmp.eq.f32.partialorder %v1023, 8.507059e+37
        %v1025 = vand.u32 %v1012, 2147483648
        %v1026 = vor.u32 1.1754944e-38, %v1025
        %v1027 = vsel %vm1024, %v1026, %v1022
        %v1028 = vrcp.pop %v1013
        %v1029 = vmul.f32 %v1013, %v1028
        %v1030 = vsub.f32 1.0, %v1029
        %v1031 = vmul.f32 %v1028, %v1030
        %v1032 = vadd.f32 %v1028, %v1031
        %vm1033 = vweird.f32 %v1013
        %vm1034 = vweird.f32 %v1028
        %vm1035 = vmor %vm1033, %vm1034
        %v1036 = vsel %vm1035, %v1028, %v1032
        %v1037 = vand.u32 2147483647, %v1013
        %vm1038 = vcmp.eq.f32.partialorder %v1037, 8.507059e+37
        %v1039 = vand.u32 %v1013, 2147483648
        %v1040 = vor.u32 1.1754944e-38, %v1039
        %v1041 = vsel %vm1038, %v1040, %v1036
        %v1042 = vmul.f32 %v970, %v1027
        %v1043 = vmul.f32 %v971, %v1041
        %v1047 = vrot.slane %v684, 6
        %v1048 = vrot.slane %v687, 6
        %v1049 = vsel %vm869, %v1047, %v1048
        %v1050 = vrot.slane %v690, 6
        %v1051 = vsel %vm869, %v1048, %v1050
        %v1054 = vmul.f32 %v1042, %v1049
        %v1055 = vmul.f32 %v1043, %v1051
        %v1056 = vadd.f32 %v864, %v1054
        %v1057 = vadd.f32 %v865, %v1055
        %v1058 = vmul.f32 %v978, %v1027
        %v1059 = vmul.f32 %v979, %v1041
        %v1060 = vrot.slane %v684, 7
        %v1061 = vrot.slane %v687, 7
        %v1062 = vsel %vm705, %v1060, %v1061
        %v1063 = vrot.slane %v690, 7
        %v1064 = vsel %vm705, %v1061, %v1063
        %v1067 = vmul.f32 %v1058, %v1062
        %v1068 = vmul.f32 %v1059, %v1064
        %v1069 = vadd.f32 %v1056, %v1067
        %v1070 = vadd.f32 %v1057, %v1068
        %v1071 = vmul.f32 %v986, %v1027
        %v1072 = vmul.f32 %v987, %v1041
        %v1073 = vmul.f32 %v1071, %v687
        %v1074 = vmul.f32 %v1072, %v690
        %v1075 = vadd.f32 %v1069, %v1073
        %v1076 = vadd.f32 %v1070, %v1074
        %v1077 = vmul.f32 %v994, %v1027
        %v1078 = vmul.f32 %v995, %v1041
        %v1080 = vrot.slane %v687, 1
        %v1081 = vrot.slane %v690, 1
        %v1082 = vsel %vm744, %v1080, %v1081
        %v1083 = vrot.slane %v693, 1
        %v1084 = vsel %vm744, %v1081, %v1083
        %v1087 = vmul.f32 %v1077, %v1082
        %v1088 = vmul.f32 %v1078, %v1084
        %v1089 = vadd.f32 %v1075, %v1087
        %v1090 = vadd.f32 %v1076, %v1088
        %v1091 = vmul.f32 %v1002, %v1027
        %v1092 = vmul.f32 %v1003, %v1041
        %v1093 = vrot.slane %v687, 2
        %v1094 = vrot.slane %v690, 2
        %v1095 = vsel %vm932, %v1093, %v1094
        %v1096 = vrot.slane %v693, 2
        %v1097 = vsel %vm932, %v1094, %v1096
        %v1100 = vmul.f32 %v1091, %v1095
        %v1101 = vmul.f32 %v1092, %v1097
        %v1102 = vadd.f32 %v1089, %v1100
        %v1103 = vadd.f32 %v1090, %v1101
        %1104 = vst [vmem:[%s400] sm:$0xff] %v1102
        %1105 = vst [vmem:[%s400 + $0x8] sm:$0xff] %v1103
        %s1106 = sand.u32 %s190, 1
        %s1107 = scalar_lea.sflag [#allocation4], %s1106
        %s1108 = sand.u32 %s190, 1
        %s1109 = smul.addr %s1108, 16
        %s1110 = scalar_lea.vmem [#allocation11], %s1109
        // Predicated region
        $region61: #{tpu_custom_call.1} parent=39 // pred_check
          %p1111 = pneg %p200
        $region62: #{tpu_custom_call.1} parent=39 // pred_check_branch
          %1113 = sbr.rel (%p1111) target = $region64
        $region63: #{tpu_custom_call.1} parent=39 // pred_region
          %s1114 = smul.u32 2, %s31
          %1116 = vsyncadd %s1107, 0
          %s1117 = smul.addr %s30, 4
          %s1118 = sadd.s32 %s1114, %s1117
          %s1119 = smul.addr %s1118, 8
          %s1120 = scalar_lea.hbm %s5, %s1119
          %s1121 = sshll.u32 %s1110, 4
          %s1122 = int_to_ptr.vmem [resolvable:$true] %s1121
          %s1123 = sshll.u32 %s1120, 4
          %s1124 = int_to_ptr.hbm [resolvable:$true] %s1123
          %1129 = dma.vmem_to_hbm [thread:$0]  %s1122, 256, %s1124, %s1107, 128, 128, 8
        $region64: #{tpu_custom_call.1} parent=39 // pred_fallthru
          _
      $region40: #{tpu_custom_call.1} parent=5 // pred_fallthru
        _
      %p1130 = scmp.le.s32.totalorder 2, %s21
      // Predicated region
      $region65: #{tpu_custom_call.1} parent=5 // pred_check
        %p1131 = pneg %p1130
      $region66: #{tpu_custom_call.1} parent=5 // pred_check_branch
        %1133 = sbr.rel (%p1131) target = $region68
      $region67: #{tpu_custom_call.1} parent=5 // pred_region
        %s1134 = ssub.s32 %s21, 2
        // Predicated region
        $region69: #{tpu_custom_call.1} parent=67 // pred_check
          %p1135 = pneg %p206
        $region70: #{tpu_custom_call.1} parent=67 // pred_check_branch
          %1137 = sbr.rel (%p1135) target = $region72
        $region71: #{tpu_custom_call.1} parent=67 // pred_region
          %s1138 = sand.u32 %s191, 1
          %s1139 = scalar_lea.sflag [#allocation4], %s1138
          %s1140 = sand.u32 %s191, 1
          %s1141 = smul.addr %s1140, 16
          %s1142 = scalar_lea.vmem [#allocation11], %s1141
          %1144 = dma.done %s1139, 256
        $region72: #{tpu_custom_call.1} parent=67 // pred_fallthru
          _
      $region68: #{tpu_custom_call.1} parent=5 // pred_fallthru
        _
    $region6: #{tpu_custom_call.1} parent=1 // loop_footer
      %s25 = sadd.s32 1, %s21
    $region7: #{tpu_custom_call.1} parent=1 // loop_footer_branch
      %20 = sbr.rel target = $region3
    $region8: #{tpu_custom_call.1} parent=1 // loop_exit
      _
    %1145 = vsyncpa [#allocation3], 1
    %s1146 = scalar_lea.sflag [#allocation3], 1
    %1147 = vsyncpa %s1146, 1
    %1148 = vsyncpa [#allocation6], 1
    %s1149 = scalar_lea.sflag [#allocation6], 1
    %1150 = vsyncpa %s1149, 1
    %1151 = vsyncpa [#allocation9], 1
    %1152 = vsyncpa [#allocation4], 1
    %s1153 = scalar_lea.sflag [#allocation4], 1
    %1154 = vsyncpa %s1153, 1

</llo_original>
